<compile_context>
chip_gen: v6e
topology: v6e:2x2x1
jax: 0.10.0
libtpu: 0.0.40
codegen_flags: <defaults>
</compile_context>

<pallas_src>
import functools

import jax
import jax.numpy as jnp
from jax import lax
from jax.experimental import pallas as pl
from jax.experimental.pallas import tpu as pltpu


CONFIG = dict(vocab=100, hidden=32, heads=2, layers=2, intermediate=64,
              max_pos=16, type_vocab=2, classes=2)


# ----------------------------- fused Pallas kernel ---------------------------

def _bert_fused_kernel(ids_ref,                                   # SMEM (B, S) int32
                       word_emb_ref, pos_ref, type_ref, amask_ref,
                       wqkv_ref, bqkv_ref, w_out_ref, wi_ref, bi_ref,
                       lnv_ref, embv_ref, pool_w_ref, cls_w_ref, cls_b_ref,
                       out_ref, x_scratch,
                       *, num_layers, num_heads, head_dim, seq_len, batch_block,
                       scale):
    H = num_heads * head_dim
    S = seq_len
    bb = batch_block
    f32 = jnp.float32
    g = pl.program_id(0)

    def ln(x, gamma, beta, eps=1e-12):
        # var = E[x^2] - mu^2: two independent lane reductions (shorter dep chain than
        # E[(x-mu)^2]); clamp guards f32 rounding.
        mu = jnp.mean(x, axis=-1, keepdims=True)
        ex2 = jnp.mean(x * x, axis=-1, keepdims=True)
        var = jnp.maximum(ex2 - mu * mu, 0.0)
        return (x - mu) * lax.rsqrt(var + eps) * gamma + beta

    def gelu(y):
        c = 0.7978845608028654  # sqrt(2/pi); tanh-approx GELU (see TODO above)
        return 0.5 * y * (1.0 + jnp.tanh(c * (y + 0.044715 * y * y * y)))

    def softmax_rows(scores):
        scores = scores - jnp.max(scores, axis=-1, keepdims=True)
        p = jnp.exp(scores)
        return p * pl.reciprocal(jnp.sum(p, axis=-1, keepdims=True), approx=True)

    # ---- embeddings: in-kernel word gather + position + token-type (== 0) adds ----
    pos_blk = pos_ref[...]                                   # (max_pos, H)
    type_row = type_ref[0:1, :]                              # token_type_ids == 0
    pt_rows = [pos_blk[s:s + 1, :] + type_row for s in range(S)]
    for lb in range(bb):
        for s in range(S):
            tok = ids_ref[g * bb + lb, s]
            x_scratch[lb * S + s:lb * S + s + 1, :] = (
                word_emb_ref[pl.ds(tok, 1), :] + pt_rows[s])

    embv = embv_ref[...]                                     # (3, H)
    h = ln(x_scratch[...], embv[0:1, :], embv[1:2, :])       # (bb*S, H)
    pool_b = embv[2:3, :]

    # HF-style additive attention mask, per local batch element: (bb, 1, S)
    am = (1.0 - amask_ref[...].astype(f32)) * -10000.0

    h_cls = None
    for l in range(num_layers):
        lnv = lnv_ref[l]                     # (6, H): bo, ln1_g, ln1_b, bo2, ln2_g, ln2_b
        bo, ln1_g, ln1_b = lnv[0:1, :], lnv[1:2, :], lnv[2:3, :]
        bo2, ln2_g, ln2_b = lnv[3:4, :], lnv[4:5, :], lnv[5:6, :]
        w_out_l = w_out_ref[l]               # (H+I, H) = [wo ; wo2], sublane-aligned
        wo_l, wo2_l = w_out_l[0:H, :], w_out_l[H:, :]

        # fused QKV projection for the whole slab: (bb*S, H) @ (H, 3H)
        qkv = jnp.dot(h, wqkv_ref[l], preferred_element_type=f32) + bqkv_ref[l]

        if l != num_layers - 1:
            attn_blocks = []
            for lb in range(bb):
                m = am[lb]                                               # (1, S)
                acc = None
                for hd in range(num_heads):
                    q = qkv[lb * S:(lb + 1) * S, hd * head_dim:(hd + 1) * head_dim]
                    k = qkv[lb * S:(lb + 1) * S,
                            H + hd * head_dim:H + (hd + 1) * head_dim]
                    v = qkv[lb * S:(lb + 1) * S,
                            2 * H + hd * head_dim:2 * H + (hd + 1) * head_dim]
                    scores = lax.dot_general(q, k, (((1,), (1,)), ((), ())),
                                             preferred_element_type=f32) * scale + m
                    p = softmax_rows(scores)                             # (S, S)
                    ctx = jnp.dot(p, v, preferred_element_type=f32)      # (S, Dh)
                    # per-head partial output projection (no lane-axis concat)
                    part = jnp.dot(ctx, wo_l[hd * head_dim:(hd + 1) * head_dim, :],
                                   preferred_element_type=f32)           # (S, H)
                    acc = part if acc is None else acc + part
                attn_blocks.append(acc)
            attn = jnp.concatenate(attn_blocks, axis=0) + bo             # (bb*S, H)
            h = ln(attn + h, ln1_g, ln1_b)        # fused residual + LN; dropout = id
            ff = gelu(jnp.dot(h, wi_ref[l], preferred_element_type=f32) + bi_ref[l])
            ff = jnp.dot(ff, wo2_l, preferred_element_type=f32) + bo2
            h = ln(ff + h, ln2_g, ln2_b)
        else:
            # Last layer: only h[:, 0] feeds the pooler.  Full K/V are needed, but the
            # attention output, residual+LN, FFN and LN2 are computed only for the CLS
            # row of each batch element.
            cls_blocks, res_blocks = [], []
            for lb in range(bb):
                m = am[lb]
                acc = None
                for hd in range(num_heads):
                    q = qkv[lb * S:lb * S + 1, hd * head_dim:(hd + 1) * head_dim]
                    k = qkv[lb * S:(lb + 1) * S,
                            H + hd * head_dim:H + (hd + 1) * head_dim]
                    v = qkv[lb * S:(lb + 1) * S,
                            2 * H + hd * head_dim:2 * H + (hd + 1) * head_dim]
                    scores = lax.dot_general(q, k, (((1,), (1,)), ((), ())),
                                             preferred_element_type=f32) * scale + m
                    p = softmax_rows(scores)                             # (1, S)
                    ctx = jnp.dot(p, v, preferred_element_type=f32)      # (1, Dh)
                    part = jnp.dot(ctx, wo_l[hd * head_dim:(hd + 1) * head_dim, :],
                                   preferred_element_type=f32)           # (1, H)
                    acc = part if acc is None else acc + part
                cls_blocks.append(acc)
                res_blocks.append(h[lb * S:lb * S + 1, :])
            attn_cls = jnp.concatenate(cls_blocks, axis=0) + bo          # (bb, H)
            h_res = jnp.concatenate(res_blocks, axis=0)                  # (bb, H)
            hc = ln(attn_cls + h_res, ln1_g, ln1_b)
            ff = gelu(jnp.dot(hc, wi_ref[l], preferred_element_type=f32) + bi_ref[l])
            ff = jnp.dot(ff, wo2_l, preferred_element_type=f32) + bo2
            h_cls = ln(ff + hc, ln2_g, ln2_b)                            # (bb, H)

    # pooler: tanh(W * h[:,0] + b)  ->  Dropout(p=0.1) identity  ->  Linear(H, C)
    pooled = jnp.tanh(jnp.dot(h_cls, pool_w_ref[...], preferred_element_type=f32)
                      + pool_b)
    logits = jnp.dot(pooled, cls_w_ref[...], preferred_element_type=f32) + cls_b_ref[...]
    out_ref[0] = logits.astype(out_ref.dtype)


# ------------------------------ wrapper / forward -----------------------------

def _default_batch_block(batch):
    """Batch elements per grid step.

    v5e/v6e: single TensorCore -> fold the whole batch into one grid step.
    v7x: two TensorCores -> one batch element per step; the "parallel" grid axis
    shards the steps across both cores.
    """
    try:
        kind = jax.devices()[0].device_kind.lower()
    except Exception:
        kind = ""
    if "v7" in kind and batch > 1:
        return 1
    return batch


def bert_gender_classifier_forward(params, input_ids, attention_mask, cfg=CONFIG,
                                   batch_block=None):
    B, S = input_ids.shape
    H, nH, L = cfg["hidden"], cfg["heads"], cfg["layers"]
    C = cfg["classes"]
    Dh = H // nH
    scale = 1.0 / float(Dh) ** 0.5

    bb = batch_block if batch_block is not None else _default_batch_block(B)
    assert B % bb == 0
    steps = B // bb

    kernel = functools.partial(_bert_fused_kernel, num_layers=L, num_heads=nH,
                               head_dim=Dh, seq_len=S, batch_block=bb, scale=scale)

    amask3 = attention_mask.astype(jnp.int32).reshape(B, 1, S)

    def rep2(arr):
        return pl.BlockSpec(arr.shape, lambda g, ids: (0, 0))

    def rep3(arr):
        return pl.BlockSpec(arr.shape, lambda g, ids: (0, 0, 0))

    in_specs = [
        rep2(params["word_emb"]),                             # (V, H) table, in VMEM
        rep2(params["pos_emb"]),
        rep2(params["type_emb"]),
        pl.BlockSpec((bb, 1, S), lambda g, ids: (g, 0, 0)),   # attention mask (int32)
        rep3(params["wqkv"]), rep3(params["bqkv"]),
        rep3(params["w_out"]),
        rep3(params["wi"]), rep3(params["bi"]),
        rep3(params["ln_vecs"]),
        rep2(params["emb_vecs"]),
        rep2(params["pool_w"]), rep2(params["cls_w"]), rep2(params["cls_b"]),
    ]

    out3 = pl.pallas_call(
        kernel,
        out_shape=jax.ShapeDtypeStruct((steps, bb, C), jnp.float32),
        grid_spec=pltpu.PrefetchScalarGridSpec(
            num_scalar_prefetch=1,                            # input_ids -> SMEM
            grid=(steps,),
            in_specs=in_specs,
            out_specs=pl.BlockSpec((1, bb, C), lambda g, ids: (g, 0, 0)),
            scratch_shapes=[pltpu.VMEM((bb * S, H), jnp.float32)],
        ),
        compiler_params=pltpu.CompilerParams(
            dimension_semantics=("parallel",)),
    )(input_ids.astype(jnp.int32), params["word_emb"], params["pos_emb"],
      params["type_emb"], amask3,
      params["wqkv"], params["bqkv"], params["w_out"],
      params["wi"], params["bi"], params["ln_vecs"], params["emb_vecs"],
      params["pool_w"], params["cls_w"], params["cls_b"])
    return out3.reshape(B, C)


# ------------------------- parameters (deterministic) -------------------------

def init_params(key, cfg=CONFIG):
    H, I, C, L = cfg["hidden"], cfg["intermediate"], cfg["classes"], cfg["layers"]
    V, P, T = cfg["vocab"], cfg["max_pos"], cfg["type_vocab"]
    keys = iter(jax.random.split(key, 16))

    def nrm(shape):
        return (0.02 * jax.random.normal(next(keys), shape)).astype(jnp.float32)

    # per-layer H-wide vectors packed (L, 6, H): [bo, ln1_g, ln1_b, bo2, ln2_g, ln2_b]
    gamma_rows = jnp.array([0., 1., 0., 0., 1., 0.], jnp.float32)[None, :, None]
    ln_vecs = nrm((L, 6, H)) + gamma_rows
    # embedding-LN gamma/beta + pooler bias packed (3, H)
    emb_vecs = nrm((3, H)) + jnp.array([1., 0., 0.], jnp.float32)[:, None]

    return {
        "word_emb": nrm((V, H)),
        "pos_emb": nrm((P, H)),
        "type_emb": nrm((T, H)),
        "wqkv": nrm((L, H, 3 * H)), "bqkv": nrm((L, 1, 3 * H)),
        "w_out": nrm((L, H + I, H)),          # [wo (H,H) ; wo2 (I,H)] on sublane axis
        "wi": nrm((L, H, I)), "bi": nrm((L, 1, I)),
        "ln_vecs": ln_vecs,
        "emb_vecs": emb_vecs,
        "pool_w": nrm((H, H)),
        "cls_w": nrm((H, C)), "cls_b": nrm((1, C)),
    }


# ----------------------------- pure-JAX reference -----------------------------

def _reference_forward(params, input_ids, attention_mask, cfg=CONFIG):
    B, S = input_ids.shape
    H, nH, L, I = cfg["hidden"], cfg["heads"], cfg["layers"], cfg["intermediate"]
    Dh = H // nH
    scale = 1.0 / float(Dh) ** 0.5

    def ln(x, g, b, eps=1e-12):
        mu = x.mean(-1, keepdims=True)
        var = jnp.square(x - mu).mean(-1, keepdims=True)
        return (x - mu) * lax.rsqrt(var + eps) * g + b

    def gelu(y):
        c = 0.7978845608028654
        return 0.5 * y * (1.0 + jnp.tanh(c * (y + 0.044715 * y ** 3)))

    emb_ln_g, emb_ln_b, pool_b = (params["emb_vecs"][i] for i in range(3))
    word = jnp.take(params["word_emb"], input_ids, axis=0)
    x = word + params["pos_emb"][:S][None] + params["type_emb"][0][None, None]
    h = ln(x, emb_ln_g, emb_ln_b)
    mask = ((1.0 - attention_mask.astype(jnp.float32)) * -10000.0)[:, None, None, :]
    for l in range(L):
        bo, ln1_g, ln1_b, bo2, ln2_g, ln2_b = (params["ln_vecs"][l, i] for i in range(6))
        wo, wo2 = params["w_out"][l, :H], params["w_out"][l, H:]
        qkv = h @ params["wqkv"][l] + params["bqkv"][l]
        q, k, v = jnp.split(qkv, 3, axis=-1)

        def heads(t):
            return t.reshape(B, S, nH, Dh).transpose(0, 2, 1, 3)

        q, k, v = heads(q), heads(k), heads(v)
        s = jnp.einsum("bhqd,bhkd->bhqk", q, k) * scale + mask
        p = jax.nn.softmax(s, axis=-1)
        ctx = jnp.einsum("bhqk,bhkd->bhqd", p, v).transpose(0, 2, 1, 3).reshape(B, S, H)
        attn = ctx @ wo + bo
        h = ln(attn + h, ln1_g, ln1_b)
        ff = gelu(h @ params["wi"][l] + params["bi"][l])
        ff = ff @ wo2 + bo2
        h = ln(ff + h, ln2_g, ln2_b)
    pooled = jnp.tanh(h[:, 0] @ params["pool_w"] + pool_b)
    return pooled @ params["cls_w"] + params["cls_b"]


# ----------------------------------- main -------------------------------------

if __name__ == "__main__":
    key = jax.random.PRNGKey(0)
    pkey, ikey = jax.random.split(key)

    params = init_params(pkey)

    B, S = 2, 8
    input_ids = jax.random.randint(ikey, (B, S), 0, CONFIG["vocab"], dtype=jnp.int32)
    attention_mask = jnp.array(
        [[1, 1, 1, 1, 1, 1, 1, 1],
         [1, 1, 1, 1, 1, 0, 0, 0]], dtype=jnp.int32)

    logits = bert_gender_classifier_forward(params, input_ids, attention_mask)
    logits = jax.block_until_ready(logits)
    assert logits.shape == (B, CONFIG["classes"])
    assert bool(jnp.all(jnp.isfinite(logits)))

    ref = jax.block_until_ready(_reference_forward(params, input_ids, attention_mask))
    assert bool(jnp.allclose(logits, ref, atol=5e-3, rtol=5e-3)), (logits, ref)

    print("KERNEL_OK")
</pallas_src>

<mosaic_0001>
module attributes {stable_mosaic.version = 11 : i64} {
  func.func @_bert_fused_kernel(%arg0: i32, %arg1: memref<2x8xi32, #tpu.memory_space<smem>>, %arg2: memref<100x32xf32, #tpu.memory_space<vmem>>, %arg3: memref<16x32xf32, #tpu.memory_space<vmem>>, %arg4: memref<2x32xf32, #tpu.memory_space<vmem>>, %arg5: memref<2x1x8xi32, #tpu.memory_space<vmem>>, %arg6: memref<2x32x96xf32, #tpu.memory_space<vmem>>, %arg7: memref<2x1x96xf32, #tpu.memory_space<vmem>>, %arg8: memref<2x96x32xf32, #tpu.memory_space<vmem>>, %arg9: memref<2x32x64xf32, #tpu.memory_space<vmem>>, %arg10: memref<2x1x64xf32, #tpu.memory_space<vmem>>, %arg11: memref<2x6x32xf32, #tpu.memory_space<vmem>>, %arg12: memref<3x32xf32, #tpu.memory_space<vmem>>, %arg13: memref<32x32xf32, #tpu.memory_space<vmem>>, %arg14: memref<32x2xf32, #tpu.memory_space<vmem>>, %arg15: memref<1x2xf32, #tpu.memory_space<vmem>>, %arg16: memref<1x2x2xf32, #tpu.memory_space<vmem>>, %arg17: memref<16x32xf32, #tpu.memory_space<vmem>>) attributes {dimension_semantics = [#tpu.dimension_semantics<parallel>], iteration_bounds = array<i64: 1>, scalar_prefetch = 1 : i64, scratch_operands = 1 : i64, tpu.core_type = #tpu.core_type<tc>, window_params = [{pipeline_mode = #tpu.pipeline_mode<synchronous>, transform_indices = @transform_0, window_bounds = array<i64: 100, 32>}, {pipeline_mode = #tpu.pipeline_mode<synchronous>, transform_indices = @transform_1, window_bounds = array<i64: 16, 32>}, {pipeline_mode = #tpu.pipeline_mode<synchronous>, transform_indices = @transform_2, window_bounds = array<i64: 2, 32>}, {transform_indices = @transform_3, window_bounds = array<i64: 2, 1, 8>}, {pipeline_mode = #tpu.pipeline_mode<synchronous>, transform_indices = @transform_4, window_bounds = array<i64: 2, 32, 96>}, {pipeline_mode = #tpu.pipeline_mode<synchronous>, transform_indices = @transform_5, window_bounds = array<i64: 2, 1, 96>}, {pipeline_mode = #tpu.pipeline_mode<synchronous>, transform_indices = @transform_6, window_bounds = array<i64: 2, 96, 32>}, {pipeline_mode = #tpu.pipeline_mode<synchronous>, transform_indices = @transform_7, window_bounds = array<i64: 2, 32, 64>}, {pipeline_mode = #tpu.pipeline_mode<synchronous>, transform_indices = @transform_8, window_bounds = array<i64: 2, 1, 64>}, {pipeline_mode = #tpu.pipeline_mode<synchronous>, transform_indices = @transform_9, window_bounds = array<i64: 2, 6, 32>}, {pipeline_mode = #tpu.pipeline_mode<synchronous>, transform_indices = @transform_10, window_bounds = array<i64: 3, 32>}, {pipeline_mode = #tpu.pipeline_mode<synchronous>, transform_indices = @transform_11, window_bounds = array<i64: 32, 32>}, {pipeline_mode = #tpu.pipeline_mode<synchronous>, transform_indices = @transform_12, window_bounds = array<i64: 32, 2>}, {pipeline_mode = #tpu.pipeline_mode<synchronous>, transform_indices = @transform_13, window_bounds = array<i64: 1, 2>}, {transform_indices = @transform_14, window_bounds = array<i64: 1, 2, 2>}]} {
    %c0 = arith.constant 0 : index
    %c0_0 = arith.constant 0 : index
    %0 = vector.load %arg3[%c0, %c0_0] : memref<16x32xf32, #tpu.memory_space<vmem>>, vector<16x32xf32>
    %c0_1 = arith.constant 0 : index
    %c0_2 = arith.constant 0 : index
    %1 = vector.load %arg4[%c0_1, %c0_2] : memref<2x32xf32, #tpu.memory_space<vmem>>, vector<1x32xf32>
    %2 = vector.extract_strided_slice %0 {offsets = [0, 0], sizes = [1, 32], strides = [1, 1]} : vector<16x32xf32> to vector<1x32xf32>
    %3 = arith.addf %2, %1 : vector<1x32xf32>
    %4 = vector.extract_strided_slice %0 {offsets = [1, 0], sizes = [1, 32], strides = [1, 1]} : vector<16x32xf32> to vector<1x32xf32>
    %5 = arith.addf %4, %1 : vector<1x32xf32>
    %6 = vector.extract_strided_slice %0 {offsets = [2, 0], sizes = [1, 32], strides = [1, 1]} : vector<16x32xf32> to vector<1x32xf32>
    %7 = arith.addf %6, %1 : vector<1x32xf32>
    %8 = vector.extract_strided_slice %0 {offsets = [3, 0], sizes = [1, 32], strides = [1, 1]} : vector<16x32xf32> to vector<1x32xf32>
    %9 = arith.addf %8, %1 : vector<1x32xf32>
    %10 = vector.extract_strided_slice %0 {offsets = [4, 0], sizes = [1, 32], strides = [1, 1]} : vector<16x32xf32> to vector<1x32xf32>
    %11 = arith.addf %10, %1 : vector<1x32xf32>
    %12 = vector.extract_strided_slice %0 {offsets = [5, 0], sizes = [1, 32], strides = [1, 1]} : vector<16x32xf32> to vector<1x32xf32>
    %13 = arith.addf %12, %1 : vector<1x32xf32>
    %14 = vector.extract_strided_slice %0 {offsets = [6, 0], sizes = [1, 32], strides = [1, 1]} : vector<16x32xf32> to vector<1x32xf32>
    %15 = arith.addf %14, %1 : vector<1x32xf32>
    %16 = vector.extract_strided_slice %0 {offsets = [7, 0], sizes = [1, 32], strides = [1, 1]} : vector<16x32xf32> to vector<1x32xf32>
    %17 = arith.addf %16, %1 : vector<1x32xf32>
    %c2_i32 = arith.constant 2 : i32
    %18 = arith.muli %arg0, %c2_i32 : i32
    %c0_i32 = arith.constant 0 : i32
    %19 = arith.addi %18, %c0_i32 : i32
    %20 = arith.index_cast %19 : i32 to index
    %c0_3 = arith.constant 0 : index
    %21 = memref.load %arg1[%20, %c0_3] : memref<2x8xi32, #tpu.memory_space<smem>>
    %22 = arith.index_cast %21 : i32 to index
    %c0_4 = arith.constant 0 : index
    %23 = vector.load %arg2[%22, %c0_4] : memref<100x32xf32, #tpu.memory_space<vmem>>, vector<1x32xf32>
    %24 = arith.addf %23, %3 : vector<1x32xf32>
    %c0_5 = arith.constant 0 : index
    %c0_6 = arith.constant 0 : index
    %25 = vector.load %arg17[%c0_5, %c0_6] : memref<16x32xf32, #tpu.memory_space<vmem>>, vector<1x32xf32>
    tpu.vector_store %arg17[%c0_5, %c0_6], %24 {strides = array<i32>} : memref<16x32xf32, #tpu.memory_space<vmem>>, vector<1x32xf32>,
    %c2_i32_7 = arith.constant 2 : i32
    %26 = arith.muli %arg0, %c2_i32_7 : i32
    %c0_i32_8 = arith.constant 0 : i32
    %27 = arith.addi %26, %c0_i32_8 : i32
    %28 = arith.index_cast %27 : i32 to index
    %c1 = arith.constant 1 : index
    %29 = memref.load %arg1[%28, %c1] : memref<2x8xi32, #tpu.memory_space<smem>>
    %30 = arith.index_cast %29 : i32 to index
    %c0_9 = arith.constant 0 : index
    %31 = vector.load %arg2[%30, %c0_9] : memref<100x32xf32, #tpu.memory_space<vmem>>, vector<1x32xf32>
    %32 = arith.addf %31, %5 : vector<1x32xf32>
    %c1_10 = arith.constant 1 : index
    %c0_11 = arith.constant 0 : index
    %33 = vector.load %arg17[%c1_10, %c0_11] : memref<16x32xf32, #tpu.memory_space<vmem>>, vector<1x32xf32>
    tpu.vector_store %arg17[%c1_10, %c0_11], %32 {strides = array<i32>} : memref<16x32xf32, #tpu.memory_space<vmem>>, vector<1x32xf32>,
    %c2_i32_12 = arith.constant 2 : i32
    %34 = arith.muli %arg0, %c2_i32_12 : i32
    %c0_i32_13 = arith.constant 0 : i32
    %35 = arith.addi %34, %c0_i32_13 : i32
    %36 = arith.index_cast %35 : i32 to index
    %c2 = arith.constant 2 : index
    %37 = memref.load %arg1[%36, %c2] : memref<2x8xi32, #tpu.memory_space<smem>>
    %38 = arith.index_cast %37 : i32 to index
    %c0_14 = arith.constant 0 : index
    %39 = vector.load %arg2[%38, %c0_14] : memref<100x32xf32, #tpu.memory_space<vmem>>, vector<1x32xf32>
    %40 = arith.addf %39, %7 : vector<1x32xf32>
    %c2_15 = arith.constant 2 : index
    %c0_16 = arith.constant 0 : index
    %41 = vector.load %arg17[%c2_15, %c0_16] : memref<16x32xf32, #tpu.memory_space<vmem>>, vector<1x32xf32>
    tpu.vector_store %arg17[%c2_15, %c0_16], %40 {strides = array<i32>} : memref<16x32xf32, #tpu.memory_space<vmem>>, vector<1x32xf32>,
    %c2_i32_17 = arith.constant 2 : i32
    %42 = arith.muli %arg0, %c2_i32_17 : i32
    %c0_i32_18 = arith.constant 0 : i32
    %43 = arith.addi %42, %c0_i32_18 : i32
    %44 = arith.index_cast %43 : i32 to index
    %c3 = arith.constant 3 : index
    %45 = memref.load %arg1[%44, %c3] : memref<2x8xi32, #tpu.memory_space<smem>>
    %46 = arith.index_cast %45 : i32 to index
    %c0_19 = arith.constant 0 : index
    %47 = vector.load %arg2[%46, %c0_19] : memref<100x32xf32, #tpu.memory_space<vmem>>, vector<1x32xf32>
    %48 = arith.addf %47, %9 : vector<1x32xf32>
    %c3_20 = arith.constant 3 : index
    %c0_21 = arith.constant 0 : index
    %49 = vector.load %arg17[%c3_20, %c0_21] : memref<16x32xf32, #tpu.memory_space<vmem>>, vector<1x32xf32>
    tpu.vector_store %arg17[%c3_20, %c0_21], %48 {strides = array<i32>} : memref<16x32xf32, #tpu.memory_space<vmem>>, vector<1x32xf32>,
    %c2_i32_22 = arith.constant 2 : i32
    %50 = arith.muli %arg0, %c2_i32_22 : i32
    %c0_i32_23 = arith.constant 0 : i32
    %51 = arith.addi %50, %c0_i32_23 : i32
    %52 = arith.index_cast %51 : i32 to index
    %c4 = arith.constant 4 : index
    %53 = memref.load %arg1[%52, %c4] : memref<2x8xi32, #tpu.memory_space<smem>>
    %54 = arith.index_cast %53 : i32 to index
    %c0_24 = arith.constant 0 : index
    %55 = vector.load %arg2[%54, %c0_24] : memref<100x32xf32, #tpu.memory_space<vmem>>, vector<1x32xf32>
    %56 = arith.addf %55, %11 : vector<1x32xf32>
    %c4_25 = arith.constant 4 : index
    %c0_26 = arith.constant 0 : index
    %57 = vector.load %arg17[%c4_25, %c0_26] : memref<16x32xf32, #tpu.memory_space<vmem>>, vector<1x32xf32>
    tpu.vector_store %arg17[%c4_25, %c0_26], %56 {strides = array<i32>} : memref<16x32xf32, #tpu.memory_space<vmem>>, vector<1x32xf32>,
    %c2_i32_27 = arith.constant 2 : i32
    %58 = arith.muli %arg0, %c2_i32_27 : i32
    %c0_i32_28 = arith.constant 0 : i32
    %59 = arith.addi %58, %c0_i32_28 : i32
    %60 = arith.index_cast %59 : i32 to index
    %c5 = arith.constant 5 : index
    %61 = memref.load %arg1[%60, %c5] : memref<2x8xi32, #tpu.memory_space<smem>>
    %62 = arith.index_cast %61 : i32 to index
    %c0_29 = arith.constant 0 : index
    %63 = vector.load %arg2[%62, %c0_29] : memref<100x32xf32, #tpu.memory_space<vmem>>, vector<1x32xf32>
    %64 = arith.addf %63, %13 : vector<1x32xf32>
    %c5_30 = arith.constant 5 : index
    %c0_31 = arith.constant 0 : index
    %65 = vector.load %arg17[%c5_30, %c0_31] : memref<16x32xf32, #tpu.memory_space<vmem>>, vector<1x32xf32>
    tpu.vector_store %arg17[%c5_30, %c0_31], %64 {strides = array<i32>} : memref<16x32xf32, #tpu.memory_space<vmem>>, vector<1x32xf32>,
    %c2_i32_32 = arith.constant 2 : i32
    %66 = arith.muli %arg0, %c2_i32_32 : i32
    %c0_i32_33 = arith.constant 0 : i32
    %67 = arith.addi %66, %c0_i32_33 : i32
    %68 = arith.index_cast %67 : i32 to index
    %c6 = arith.constant 6 : index
    %69 = memref.load %arg1[%68, %c6] : memref<2x8xi32, #tpu.memory_space<smem>>
    %70 = arith.index_cast %69 : i32 to index
    %c0_34 = arith.constant 0 : index
    %71 = vector.load %arg2[%70, %c0_34] : memref<100x32xf32, #tpu.memory_space<vmem>>, vector<1x32xf32>
    %72 = arith.addf %71, %15 : vector<1x32xf32>
    %c6_35 = arith.constant 6 : index
    %c0_36 = arith.constant 0 : index
    %73 = vector.load %arg17[%c6_35, %c0_36] : memref<16x32xf32, #tpu.memory_space<vmem>>, vector<1x32xf32>
    tpu.vector_store %arg17[%c6_35, %c0_36], %72 {strides = array<i32>} : memref<16x32xf32, #tpu.memory_space<vmem>>, vector<1x32xf32>,
    %c2_i32_37 = arith.constant 2 : i32
    %74 = arith.muli %arg0, %c2_i32_37 : i32
    %c0_i32_38 = arith.constant 0 : i32
    %75 = arith.addi %74, %c0_i32_38 : i32
    %76 = arith.index_cast %75 : i32 to index
    %c7 = arith.constant 7 : index
    %77 = memref.load %arg1[%76, %c7] : memref<2x8xi32, #tpu.memory_space<smem>>
    %78 = arith.index_cast %77 : i32 to index
    %c0_39 = arith.constant 0 : index
    %79 = vector.load %arg2[%78, %c0_39] : memref<100x32xf32, #tpu.memory_space<vmem>>, vector<1x32xf32>
    %80 = arith.addf %79, %17 : vector<1x32xf32>
    %c7_40 = arith.constant 7 : index
    %c0_41 = arith.constant 0 : index
    %81 = vector.load %arg17[%c7_40, %c0_41] : memref<16x32xf32, #tpu.memory_space<vmem>>, vector<1x32xf32>
    tpu.vector_store %arg17[%c7_40, %c0_41], %80 {strides = array<i32>} : memref<16x32xf32, #tpu.memory_space<vmem>>, vector<1x32xf32>,
    %c2_i32_42 = arith.constant 2 : i32
    %82 = arith.muli %arg0, %c2_i32_42 : i32
    %c1_i32 = arith.constant 1 : i32
    %83 = arith.addi %82, %c1_i32 : i32
    %84 = arith.index_cast %83 : i32 to index
    %c0_43 = arith.constant 0 : index
    %85 = memref.load %arg1[%84, %c0_43] : memref<2x8xi32, #tpu.memory_space<smem>>
    %86 = arith.index_cast %85 : i32 to index
    %c0_44 = arith.constant 0 : index
    %87 = vector.load %arg2[%86, %c0_44] : memref<100x32xf32, #tpu.memory_space<vmem>>, vector<1x32xf32>
    %88 = arith.addf %87, %3 : vector<1x32xf32>
    %c8 = arith.constant 8 : index
    %c0_45 = arith.constant 0 : index
    %89 = vector.load %arg17[%c8, %c0_45] : memref<16x32xf32, #tpu.memory_space<vmem>>, vector<1x32xf32>
    tpu.vector_store %arg17[%c8, %c0_45], %88 {strides = array<i32>} : memref<16x32xf32, #tpu.memory_space<vmem>>, vector<1x32xf32>,
    %c2_i32_46 = arith.constant 2 : i32
    %90 = arith.muli %arg0, %c2_i32_46 : i32
    %c1_i32_47 = arith.constant 1 : i32
    %91 = arith.addi %90, %c1_i32_47 : i32
    %92 = arith.index_cast %91 : i32 to index
    %c1_48 = arith.constant 1 : index
    %93 = memref.load %arg1[%92, %c1_48] : memref<2x8xi32, #tpu.memory_space<smem>>
    %94 = arith.index_cast %93 : i32 to index
    %c0_49 = arith.constant 0 : index
    %95 = vector.load %arg2[%94, %c0_49] : memref<100x32xf32, #tpu.memory_space<vmem>>, vector<1x32xf32>
    %96 = arith.addf %95, %5 : vector<1x32xf32>
    %c9 = arith.constant 9 : index
    %c0_50 = arith.constant 0 : index
    %97 = vector.load %arg17[%c9, %c0_50] : memref<16x32xf32, #tpu.memory_space<vmem>>, vector<1x32xf32>
    tpu.vector_store %arg17[%c9, %c0_50], %96 {strides = array<i32>} : memref<16x32xf32, #tpu.memory_space<vmem>>, vector<1x32xf32>,
    %c2_i32_51 = arith.constant 2 : i32
    %98 = arith.muli %arg0, %c2_i32_51 : i32
    %c1_i32_52 = arith.constant 1 : i32
    %99 = arith.addi %98, %c1_i32_52 : i32
    %100 = arith.index_cast %99 : i32 to index
    %c2_53 = arith.constant 2 : index
    %101 = memref.load %arg1[%100, %c2_53] : memref<2x8xi32, #tpu.memory_space<smem>>
    %102 = arith.index_cast %101 : i32 to index
    %c0_54 = arith.constant 0 : index
    %103 = vector.load %arg2[%102, %c0_54] : memref<100x32xf32, #tpu.memory_space<vmem>>, vector<1x32xf32>
    %104 = arith.addf %103, %7 : vector<1x32xf32>
    %c10 = arith.constant 10 : index
    %c0_55 = arith.constant 0 : index
    %105 = vector.load %arg17[%c10, %c0_55] : memref<16x32xf32, #tpu.memory_space<vmem>>, vector<1x32xf32>
    tpu.vector_store %arg17[%c10, %c0_55], %104 {strides = array<i32>} : memref<16x32xf32, #tpu.memory_space<vmem>>, vector<1x32xf32>,
    %c2_i32_56 = arith.constant 2 : i32
    %106 = arith.muli %arg0, %c2_i32_56 : i32
    %c1_i32_57 = arith.constant 1 : i32
    %107 = arith.addi %106, %c1_i32_57 : i32
    %108 = arith.index_cast %107 : i32 to index
    %c3_58 = arith.constant 3 : index
    %109 = memref.load %arg1[%108, %c3_58] : memref<2x8xi32, #tpu.memory_space<smem>>
    %110 = arith.index_cast %109 : i32 to index
    %c0_59 = arith.constant 0 : index
    %111 = vector.load %arg2[%110, %c0_59] : memref<100x32xf32, #tpu.memory_space<vmem>>, vector<1x32xf32>
    %112 = arith.addf %111, %9 : vector<1x32xf32>
    %c11 = arith.constant 11 : index
    %c0_60 = arith.constant 0 : index
    %113 = vector.load %arg17[%c11, %c0_60] : memref<16x32xf32, #tpu.memory_space<vmem>>, vector<1x32xf32>
    tpu.vector_store %arg17[%c11, %c0_60], %112 {strides = array<i32>} : memref<16x32xf32, #tpu.memory_space<vmem>>, vector<1x32xf32>,
    %c2_i32_61 = arith.constant 2 : i32
    %114 = arith.muli %arg0, %c2_i32_61 : i32
    %c1_i32_62 = arith.constant 1 : i32
    %115 = arith.addi %114, %c1_i32_62 : i32
    %116 = arith.index_cast %115 : i32 to index
    %c4_63 = arith.constant 4 : index
    %117 = memref.load %arg1[%116, %c4_63] : memref<2x8xi32, #tpu.memory_space<smem>>
    %118 = arith.index_cast %117 : i32 to index
    %c0_64 = arith.constant 0 : index
    %119 = vector.load %arg2[%118, %c0_64] : memref<100x32xf32, #tpu.memory_space<vmem>>, vector<1x32xf32>
    %120 = arith.addf %119, %11 : vector<1x32xf32>
    %c12 = arith.constant 12 : index
    %c0_65 = arith.constant 0 : index
    %121 = vector.load %arg17[%c12, %c0_65] : memref<16x32xf32, #tpu.memory_space<vmem>>, vector<1x32xf32>
    tpu.vector_store %arg17[%c12, %c0_65], %120 {strides = array<i32>} : memref<16x32xf32, #tpu.memory_space<vmem>>, vector<1x32xf32>,
    %c2_i32_66 = arith.constant 2 : i32
    %122 = arith.muli %arg0, %c2_i32_66 : i32
    %c1_i32_67 = arith.constant 1 : i32
    %123 = arith.addi %122, %c1_i32_67 : i32
    %124 = arith.index_cast %123 : i32 to index
    %c5_68 = arith.constant 5 : index
    %125 = memref.load %arg1[%124, %c5_68] : memref<2x8xi32, #tpu.memory_space<smem>>
    %126 = arith.index_cast %125 : i32 to index
    %c0_69 = arith.constant 0 : index
    %127 = vector.load %arg2[%126, %c0_69] : memref<100x32xf32, #tpu.memory_space<vmem>>, vector<1x32xf32>
    %128 = arith.addf %127, %13 : vector<1x32xf32>
    %c13 = arith.constant 13 : index
    %c0_70 = arith.constant 0 : index
    %129 = vector.load %arg17[%c13, %c0_70] : memref<16x32xf32, #tpu.memory_space<vmem>>, vector<1x32xf32>
    tpu.vector_store %arg17[%c13, %c0_70], %128 {strides = array<i32>} : memref<16x32xf32, #tpu.memory_space<vmem>>, vector<1x32xf32>,
    %c2_i32_71 = arith.constant 2 : i32
    %130 = arith.muli %arg0, %c2_i32_71 : i32
    %c1_i32_72 = arith.constant 1 : i32
    %131 = arith.addi %130, %c1_i32_72 : i32
    %132 = arith.index_cast %131 : i32 to index
    %c6_73 = arith.constant 6 : index
    %133 = memref.load %arg1[%132, %c6_73] : memref<2x8xi32, #tpu.memory_space<smem>>
    %134 = arith.index_cast %133 : i32 to index
    %c0_74 = arith.constant 0 : index
    %135 = vector.load %arg2[%134, %c0_74] : memref<100x32xf32, #tpu.memory_space<vmem>>, vector<1x32xf32>
    %136 = arith.addf %135, %15 : vector<1x32xf32>
    %c14 = arith.constant 14 : index
    %c0_75 = arith.constant 0 : index
    %137 = vector.load %arg17[%c14, %c0_75] : memref<16x32xf32, #tpu.memory_space<vmem>>, vector<1x32xf32>
    tpu.vector_store %arg17[%c14, %c0_75], %136 {strides = array<i32>} : memref<16x32xf32, #tpu.memory_space<vmem>>, vector<1x32xf32>,
    %c2_i32_76 = arith.constant 2 : i32
    %138 = arith.muli %arg0, %c2_i32_76 : i32
    %c1_i32_77 = arith.constant 1 : i32
    %139 = arith.addi %138, %c1_i32_77 : i32
    %140 = arith.index_cast %139 : i32 to index
    %c7_78 = arith.constant 7 : index
    %141 = memref.load %arg1[%140, %c7_78] : memref<2x8xi32, #tpu.memory_space<smem>>
    %142 = arith.index_cast %141 : i32 to index
    %c0_79 = arith.constant 0 : index
    %143 = vector.load %arg2[%142, %c0_79] : memref<100x32xf32, #tpu.memory_space<vmem>>, vector<1x32xf32>
    %144 = arith.addf %143, %17 : vector<1x32xf32>
    %c15 = arith.constant 15 : index
    %c0_80 = arith.constant 0 : index
    %145 = vector.load %arg17[%c15, %c0_80] : memref<16x32xf32, #tpu.memory_space<vmem>>, vector<1x32xf32>
    tpu.vector_store %arg17[%c15, %c0_80], %144 {strides = array<i32>} : memref<16x32xf32, #tpu.memory_space<vmem>>, vector<1x32xf32>,
    %c0_81 = arith.constant 0 : index
    %c0_82 = arith.constant 0 : index
    %146 = vector.load %arg12[%c0_81, %c0_82] : memref<3x32xf32, #tpu.memory_space<vmem>>, vector<3x32xf32>
    %c0_83 = arith.constant 0 : index
    %c0_84 = arith.constant 0 : index
    %147 = vector.load %arg17[%c0_83, %c0_84] : memref<16x32xf32, #tpu.memory_space<vmem>>, vector<16x32xf32>
    %148 = vector.extract_strided_slice %146 {offsets = [0, 0], sizes = [1, 32], strides = [1, 1]} : vector<3x32xf32> to vector<1x32xf32>
    %149 = vector.extract_strided_slice %146 {offsets = [1, 0], sizes = [1, 32], strides = [1, 1]} : vector<3x32xf32> to vector<1x32xf32>
    %cst = arith.constant dense<0.000000e+00> : vector<16xf32>
    %150 = vector.multi_reduction <add>, %147, %cst [1] : vector<16x32xf32> to vector<16xf32>
    %151 = vector.shape_cast %150 : vector<16xf32> to vector<16x1xf32>
    %cst_85 = arith.constant 3.200000e+01 : f32
    %152 = vector.broadcast %cst_85 : f32 to vector<16x1xf32>
    %153 = arith.divf %151, %152 : vector<16x1xf32>
    %154 = arith.mulf %147, %147 : vector<16x32xf32>
    %cst_86 = arith.constant dense<0.000000e+00> : vector<16xf32>
    %155 = vector.multi_reduction <add>, %154, %cst_86 [1] : vector<16x32xf32> to vector<16xf32>
    %156 = vector.shape_cast %155 : vector<16xf32> to vector<16x1xf32>
    %cst_87 = arith.constant 3.200000e+01 : f32
    %157 = vector.broadcast %cst_87 : f32 to vector<16x1xf32>
    %158 = arith.divf %156, %157 : vector<16x1xf32>
    %159 = arith.mulf %153, %153 : vector<16x1xf32>
    %160 = arith.subf %158, %159 : vector<16x1xf32>
    %cst_88 = arith.constant 0.000000e+00 : f32
    %161 = vector.broadcast %cst_88 : f32 to vector<16x1xf32>
    %162 = arith.maximumf %160, %161 : vector<16x1xf32>
    %163 = vector.broadcast %153 : vector<16x1xf32> to vector<16x32xf32>
    %164 = arith.subf %147, %163 : vector<16x32xf32>
    %cst_89 = arith.constant 9.99999996E-13 : f32
    %165 = vector.broadcast %cst_89 : f32 to vector<16x1xf32>
    %166 = arith.addf %162, %165 : vector<16x1xf32>
    %167 = math.rsqrt %166 : vector<16x1xf32>
    %168 = vector.broadcast %167 : vector<16x1xf32> to vector<16x32xf32>
    %169 = arith.mulf %164, %168 : vector<16x32xf32>
    %170 = vector.broadcast %148 : vector<1x32xf32> to vector<16x32xf32>
    %171 = arith.mulf %169, %170 : vector<16x32xf32>
    %172 = vector.broadcast %149 : vector<1x32xf32> to vector<16x32xf32>
    %173 = arith.addf %171, %172 : vector<16x32xf32>
    %174 = vector.extract_strided_slice %146 {offsets = [2, 0], sizes = [1, 32], strides = [1, 1]} : vector<3x32xf32> to vector<1x32xf32>
    %c0_90 = arith.constant 0 : index
    %c0_91 = arith.constant 0 : index
    %c0_92 = arith.constant 0 : index
    %175 = vector.load %arg5[%c0_90, %c0_91, %c0_92] : memref<2x1x8xi32, #tpu.memory_space<vmem>>, vector<2x1x8xi32>
    %176 = arith.sitofp %175 : vector<2x1x8xi32> to vector<2x1x8xf32>
    %cst_93 = arith.constant 1.000000e+00 : f32
    %177 = vector.broadcast %cst_93 : f32 to vector<2x1x8xf32>
    %178 = arith.subf %177, %176 : vector<2x1x8xf32>
    %cst_94 = arith.constant -1.000000e+04 : f32
    %179 = vector.broadcast %cst_94 : f32 to vector<2x1x8xf32>
    %180 = arith.mulf %178, %179 : vector<2x1x8xf32>
    %c0_95 = arith.constant 0 : index
    %c0_96 = arith.constant 0 : index
    %c0_97 = arith.constant 0 : index
    %181 = vector.load %arg11[%c0_95, %c0_96, %c0_97] : memref<2x6x32xf32, #tpu.memory_space<vmem>>, vector<1x6x32xf32>
    %182 = vector.shape_cast %181 : vector<1x6x32xf32> to vector<6x32xf32>
    %183 = vector.extract_strided_slice %182 {offsets = [0, 0], sizes = [1, 32], strides = [1, 1]} : vector<6x32xf32> to vector<1x32xf32>
    %184 = vector.extract_strided_slice %182 {offsets = [1, 0], sizes = [1, 32], strides = [1, 1]} : vector<6x32xf32> to vector<1x32xf32>
    %185 = vector.extract_strided_slice %182 {offsets = [2, 0], sizes = [1, 32], strides = [1, 1]} : vector<6x32xf32> to vector<1x32xf32>
    %186 = vector.extract_strided_slice %182 {offsets = [3, 0], sizes = [1, 32], strides = [1, 1]} : vector<6x32xf32> to vector<1x32xf32>
    %187 = vector.extract_strided_slice %182 {offsets = [4, 0], sizes = [1, 32], strides = [1, 1]} : vector<6x32xf32> to vector<1x32xf32>
    %188 = vector.extract_strided_slice %182 {offsets = [5, 0], sizes = [1, 32], strides = [1, 1]} : vector<6x32xf32> to vector<1x32xf32>
    %c0_98 = arith.constant 0 : index
    %c0_99 = arith.constant 0 : index
    %c0_100 = arith.constant 0 : index
    %189 = vector.load %arg8[%c0_98, %c0_99, %c0_100] : memref<2x96x32xf32, #tpu.memory_space<vmem>>, vector<1x96x32xf32>
    %190 = vector.shape_cast %189 : vector<1x96x32xf32> to vector<96x32xf32>
    %191 = vector.extract_strided_slice %190 {offsets = [0, 0], sizes = [32, 32], strides = [1, 1]} : vector<96x32xf32> to vector<32x32xf32>
    %192 = vector.extract_strided_slice %190 {offsets = [32, 0], sizes = [64, 32], strides = [1, 1]} : vector<96x32xf32> to vector<64x32xf32>
    %c0_101 = arith.constant 0 : index
    %c0_102 = arith.constant 0 : index
    %c0_103 = arith.constant 0 : index
    %193 = vector.load %arg6[%c0_101, %c0_102, %c0_103] : memref<2x32x96xf32, #tpu.memory_space<vmem>>, vector<1x32x96xf32>
    %194 = vector.shape_cast %193 : vector<1x32x96xf32> to vector<32x96xf32>
    %cst_104 = arith.constant dense<0.000000e+00> : vector<16x96xf32>
    %195 = tpu.matmul %173, %194, %cst_104 {dimension_numbers = #tpu.dot_dimension_numbers<[1], [0], [0], [1], [0, 0, 1, 1], [], []>} : vector<16x32xf32>, vector<32x96xf32>, vector<16x96xf32> -> vector<16x96xf32>
    %c0_105 = arith.constant 0 : index
    %c0_106 = arith.constant 0 : index
    %c0_107 = arith.constant 0 : index
    %196 = vector.load %arg7[%c0_105, %c0_106, %c0_107] : memref<2x1x96xf32, #tpu.memory_space<vmem>>, vector<1x1x96xf32>
    %197 = vector.shape_cast %196 : vector<1x1x96xf32> to vector<1x96xf32>
    %198 = vector.broadcast %197 : vector<1x96xf32> to vector<16x96xf32>
    %199 = arith.addf %195, %198 : vector<16x96xf32>
    %200 = vector.extract_strided_slice %180 {offsets = [0, 0, 0], sizes = [1, 1, 8], strides = [1, 1, 1]} : vector<2x1x8xf32> to vector<1x1x8xf32>
    %201 = vector.shape_cast %200 : vector<1x1x8xf32> to vector<1x8xf32>
    %202 = vector.extract_strided_slice %199 {offsets = [0, 0], sizes = [8, 16], strides = [1, 1]} : vector<16x96xf32> to vector<8x16xf32>
    %203 = vector.extract_strided_slice %199 {offsets = [0, 32], sizes = [8, 16], strides = [1, 1]} : vector<16x96xf32> to vector<8x16xf32>
    %204 = vector.extract_strided_slice %199 {offsets = [0, 64], sizes = [8, 16], strides = [1, 1]} : vector<16x96xf32> to vector<8x16xf32>
    %cst_108 = arith.constant dense<0.000000e+00> : vector<8x8xf32>
    %205 = tpu.matmul %202, %203, %cst_108 {dimension_numbers = #tpu.dot_dimension_numbers<[1], [1], [0], [0], [0, 0, 1, 0], [], []>} : vector<8x16xf32>, vector<8x16xf32>, vector<8x8xf32> -> vector<8x8xf32>
    %cst_109 = arith.constant 2.500000e-01 : f32
    %206 = vector.broadcast %cst_109 : f32 to vector<8x8xf32>
    %207 = arith.mulf %205, %206 : vector<8x8xf32>
    %208 = vector.broadcast %201 : vector<1x8xf32> to vector<8x8xf32>
    %209 = arith.addf %207, %208 : vector<8x8xf32>
    %cst_110 = arith.constant dense<0xFF800000> : vector<8xf32>
    %210 = vector.multi_reduction <maximumf>, %209, %cst_110 [1] : vector<8x8xf32> to vector<8xf32>
    %211 = vector.shape_cast %210 : vector<8xf32> to vector<8x1xf32>
    %212 = vector.broadcast %211 : vector<8x1xf32> to vector<8x8xf32>
    %213 = arith.subf %209, %212 : vector<8x8xf32>
    %214 = math.exp %213 : vector<8x8xf32>
    %cst_111 = arith.constant dense<0.000000e+00> : vector<8xf32>
    %215 = vector.multi_reduction <add>, %214, %cst_111 [1] : vector<8x8xf32> to vector<8xf32>
    %216 = vector.shape_cast %215 : vector<8xf32> to vector<8x1xf32>
    %217 = tpu.reciprocal %216 {approx = true} : vector<8x1xf32> -> vector<8x1xf32>
    %218 = vector.broadcast %217 : vector<8x1xf32> to vector<8x8xf32>
    %219 = arith.mulf %214, %218 : vector<8x8xf32>
    %cst_112 = arith.constant dense<0.000000e+00> : vector<8x16xf32>
    %220 = tpu.matmul %219, %204, %cst_112 {dimension_numbers = #tpu.dot_dimension_numbers<[1], [0], [0], [1], [0, 0, 1, 1], [], []>} : vector<8x8xf32>, vector<8x16xf32>, vector<8x16xf32> -> vector<8x16xf32>
    %221 = vector.extract_strided_slice %191 {offsets = [0, 0], sizes = [16, 32], strides = [1, 1]} : vector<32x32xf32> to vector<16x32xf32>
    %cst_113 = arith.constant dense<0.000000e+00> : vector<8x32xf32>
    %222 = tpu.matmul %220, %221, %cst_113 {dimension_numbers = #tpu.dot_dimension_numbers<[1], [0], [0], [1], [0, 0, 1, 1], [], []>} : vector<8x16xf32>, vector<16x32xf32>, vector<8x32xf32> -> vector<8x32xf32>
    %223 = vector.extract_strided_slice %199 {offsets = [0, 16], sizes = [8, 16], strides = [1, 1]} : vector<16x96xf32> to vector<8x16xf32>
    %224 = vector.extract_strided_slice %199 {offsets = [0, 48], sizes = [8, 16], strides = [1, 1]} : vector<16x96xf32> to vector<8x16xf32>
    %225 = vector.extract_strided_slice %199 {offsets = [0, 80], sizes = [8, 16], strides = [1, 1]} : vector<16x96xf32> to vector<8x16xf32>
    %cst_114 = arith.constant dense<0.000000e+00> : vector<8x8xf32>
    %226 = tpu.matmul %223, %224, %cst_114 {dimension_numbers = #tpu.dot_dimension_numbers<[1], [1], [0], [0], [0, 0, 1, 0], [], []>} : vector<8x16xf32>, vector<8x16xf32>, vector<8x8xf32> -> vector<8x8xf32>
    %cst_115 = arith.constant 2.500000e-01 : f32
    %227 = vector.broadcast %cst_115 : f32 to vector<8x8xf32>
    %228 = arith.mulf %226, %227 : vector<8x8xf32>
    %229 = vector.broadcast %201 : vector<1x8xf32> to vector<8x8xf32>
    %230 = arith.addf %228, %229 : vector<8x8xf32>
    %cst_116 = arith.constant dense<0xFF800000> : vector<8xf32>
    %231 = vector.multi_reduction <maximumf>, %230, %cst_116 [1] : vector<8x8xf32> to vector<8xf32>
    %232 = vector.shape_cast %231 : vector<8xf32> to vector<8x1xf32>
    %233 = vector.broadcast %232 : vector<8x1xf32> to vector<8x8xf32>
    %234 = arith.subf %230, %233 : vector<8x8xf32>
    %235 = math.exp %234 : vector<8x8xf32>
    %cst_117 = arith.constant dense<0.000000e+00> : vector<8xf32>
    %236 = vector.multi_reduction <add>, %235, %cst_117 [1] : vector<8x8xf32> to vector<8xf32>
    %237 = vector.shape_cast %236 : vector<8xf32> to vector<8x1xf32>
    %238 = tpu.reciprocal %237 {approx = true} : vector<8x1xf32> -> vector<8x1xf32>
    %239 = vector.broadcast %238 : vector<8x1xf32> to vector<8x8xf32>
    %240 = arith.mulf %235, %239 : vector<8x8xf32>
    %cst_118 = arith.constant dense<0.000000e+00> : vector<8x16xf32>
    %241 = tpu.matmul %240, %225, %cst_118 {dimension_numbers = #tpu.dot_dimension_numbers<[1], [0], [0], [1], [0, 0, 1, 1], [], []>} : vector<8x8xf32>, vector<8x16xf32>, vector<8x16xf32> -> vector<8x16xf32>
    %242 = vector.extract_strided_slice %191 {offsets = [16, 0], sizes = [16, 32], strides = [1, 1]} : vector<32x32xf32> to vector<16x32xf32>
    %cst_119 = arith.constant dense<0.000000e+00> : vector<8x32xf32>
    %243 = tpu.matmul %241, %242, %cst_119 {dimension_numbers = #tpu.dot_dimension_numbers<[1], [0], [0], [1], [0, 0, 1, 1], [], []>} : vector<8x16xf32>, vector<16x32xf32>, vector<8x32xf32> -> vector<8x32xf32>
    %244 = arith.addf %222, %243 : vector<8x32xf32>
    %245 = vector.extract_strided_slice %180 {offsets = [1, 0, 0], sizes = [1, 1, 8], strides = [1, 1, 1]} : vector<2x1x8xf32> to vector<1x1x8xf32>
    %246 = vector.shape_cast %245 : vector<1x1x8xf32> to vector<1x8xf32>
    %247 = vector.extract_strided_slice %199 {offsets = [8, 0], sizes = [8, 16], strides = [1, 1]} : vector<16x96xf32> to vector<8x16xf32>
    %248 = vector.extract_strided_slice %199 {offsets = [8, 32], sizes = [8, 16], strides = [1, 1]} : vector<16x96xf32> to vector<8x16xf32>
    %249 = vector.extract_strided_slice %199 {offsets = [8, 64], sizes = [8, 16], strides = [1, 1]} : vector<16x96xf32> to vector<8x16xf32>
    %cst_120 = arith.constant dense<0.000000e+00> : vector<8x8xf32>
    %250 = tpu.matmul %247, %248, %cst_120 {dimension_numbers = #tpu.dot_dimension_numbers<[1], [1], [0], [0], [0, 0, 1, 0], [], []>} : vector<8x16xf32>, vector<8x16xf32>, vector<8x8xf32> -> vector<8x8xf32>
    %cst_121 = arith.constant 2.500000e-01 : f32
    %251 = vector.broadcast %cst_121 : f32 to vector<8x8xf32>
    %252 = arith.mulf %250, %251 : vector<8x8xf32>
    %253 = vector.broadcast %246 : vector<1x8xf32> to vector<8x8xf32>
    %254 = arith.addf %252, %253 : vector<8x8xf32>
    %cst_122 = arith.constant dense<0xFF800000> : vector<8xf32>
    %255 = vector.multi_reduction <maximumf>, %254, %cst_122 [1] : vector<8x8xf32> to vector<8xf32>
    %256 = vector.shape_cast %255 : vector<8xf32> to vector<8x1xf32>
    %257 = vector.broadcast %256 : vector<8x1xf32> to vector<8x8xf32>
    %258 = arith.subf %254, %257 : vector<8x8xf32>
    %259 = math.exp %258 : vector<8x8xf32>
    %cst_123 = arith.constant dense<0.000000e+00> : vector<8xf32>
    %260 = vector.multi_reduction <add>, %259, %cst_123 [1] : vector<8x8xf32> to vector<8xf32>
    %261 = vector.shape_cast %260 : vector<8xf32> to vector<8x1xf32>
    %262 = tpu.reciprocal %261 {approx = true} : vector<8x1xf32> -> vector<8x1xf32>
    %263 = vector.broadcast %262 : vector<8x1xf32> to vector<8x8xf32>
    %264 = arith.mulf %259, %263 : vector<8x8xf32>
    %cst_124 = arith.constant dense<0.000000e+00> : vector<8x16xf32>
    %265 = tpu.matmul %264, %249, %cst_124 {dimension_numbers = #tpu.dot_dimension_numbers<[1], [0], [0], [1], [0, 0, 1, 1], [], []>} : vector<8x8xf32>, vector<8x16xf32>, vector<8x16xf32> -> vector<8x16xf32>
    %266 = vector.extract_strided_slice %191 {offsets = [0, 0], sizes = [16, 32], strides = [1, 1]} : vector<32x32xf32> to vector<16x32xf32>
    %cst_125 = arith.constant dense<0.000000e+00> : vector<8x32xf32>
    %267 = tpu.matmul %265, %266, %cst_125 {dimension_numbers = #tpu.dot_dimension_numbers<[1], [0], [0], [1], [0, 0, 1, 1], [], []>} : vector<8x16xf32>, vector<16x32xf32>, vector<8x32xf32> -> vector<8x32xf32>
    %268 = vector.extract_strided_slice %199 {offsets = [8, 16], sizes = [8, 16], strides = [1, 1]} : vector<16x96xf32> to vector<8x16xf32>
    %269 = vector.extract_strided_slice %199 {offsets = [8, 48], sizes = [8, 16], strides = [1, 1]} : vector<16x96xf32> to vector<8x16xf32>
    %270 = vector.extract_strided_slice %199 {offsets = [8, 80], sizes = [8, 16], strides = [1, 1]} : vector<16x96xf32> to vector<8x16xf32>
    %cst_126 = arith.constant dense<0.000000e+00> : vector<8x8xf32>
    %271 = tpu.matmul %268, %269, %cst_126 {dimension_numbers = #tpu.dot_dimension_numbers<[1], [1], [0], [0], [0, 0, 1, 0], [], []>} : vector<8x16xf32>, vector<8x16xf32>, vector<8x8xf32> -> vector<8x8xf32>
    %cst_127 = arith.constant 2.500000e-01 : f32
    %272 = vector.broadcast %cst_127 : f32 to vector<8x8xf32>
    %273 = arith.mulf %271, %272 : vector<8x8xf32>
    %274 = vector.broadcast %246 : vector<1x8xf32> to vector<8x8xf32>
    %275 = arith.addf %273, %274 : vector<8x8xf32>
    %cst_128 = arith.constant dense<0xFF800000> : vector<8xf32>
    %276 = vector.multi_reduction <maximumf>, %275, %cst_128 [1] : vector<8x8xf32> to vector<8xf32>
    %277 = vector.shape_cast %276 : vector<8xf32> to vector<8x1xf32>
    %278 = vector.broadcast %277 : vector<8x1xf32> to vector<8x8xf32>
    %279 = arith.subf %275, %278 : vector<8x8xf32>
    %280 = math.exp %279 : vector<8x8xf32>
    %cst_129 = arith.constant dense<0.000000e+00> : vector<8xf32>
    %281 = vector.multi_reduction <add>, %280, %cst_129 [1] : vector<8x8xf32> to vector<8xf32>
    %282 = vector.shape_cast %281 : vector<8xf32> to vector<8x1xf32>
    %283 = tpu.reciprocal %282 {approx = true} : vector<8x1xf32> -> vector<8x1xf32>
    %284 = vector.broadcast %283 : vector<8x1xf32> to vector<8x8xf32>
    %285 = arith.mulf %280, %284 : vector<8x8xf32>
    %cst_130 = arith.constant dense<0.000000e+00> : vector<8x16xf32>
    %286 = tpu.matmul %285, %270, %cst_130 {dimension_numbers = #tpu.dot_dimension_numbers<[1], [0], [0], [1], [0, 0, 1, 1], [], []>} : vector<8x8xf32>, vector<8x16xf32>, vector<8x16xf32> -> vector<8x16xf32>
    %287 = vector.extract_strided_slice %191 {offsets = [16, 0], sizes = [16, 32], strides = [1, 1]} : vector<32x32xf32> to vector<16x32xf32>
    %cst_131 = arith.constant dense<0.000000e+00> : vector<8x32xf32>
    %288 = tpu.matmul %286, %287, %cst_131 {dimension_numbers = #tpu.dot_dimension_numbers<[1], [0], [0], [1], [0, 0, 1, 1], [], []>} : vector<8x16xf32>, vector<16x32xf32>, vector<8x32xf32> -> vector<8x32xf32>
    %289 = arith.addf %267, %288 : vector<8x32xf32>
    %290 = tpu.concatenate %244, %289 in 0 : vector<8x32xf32>, vector<8x32xf32> -> vector<16x32xf32>
    %291 = vector.broadcast %183 : vector<1x32xf32> to vector<16x32xf32>
    %292 = arith.addf %290, %291 : vector<16x32xf32>
    %293 = arith.addf %292, %173 : vector<16x32xf32>
    %cst_132 = arith.constant dense<0.000000e+00> : vector<16xf32>
    %294 = vector.multi_reduction <add>, %293, %cst_132 [1] : vector<16x32xf32> to vector<16xf32>
    %295 = vector.shape_cast %294 : vector<16xf32> to vector<16x1xf32>
    %cst_133 = arith.constant 3.200000e+01 : f32
    %296 = vector.broadcast %cst_133 : f32 to vector<16x1xf32>
    %297 = arith.divf %295, %296 : vector<16x1xf32>
    %298 = arith.mulf %293, %293 : vector<16x32xf32>
    %cst_134 = arith.constant dense<0.000000e+00> : vector<16xf32>
    %299 = vector.multi_reduction <add>, %298, %cst_134 [1] : vector<16x32xf32> to vector<16xf32>
    %300 = vector.shape_cast %299 : vector<16xf32> to vector<16x1xf32>
    %cst_135 = arith.constant 3.200000e+01 : f32
    %301 = vector.broadcast %cst_135 : f32 to vector<16x1xf32>
    %302 = arith.divf %300, %301 : vector<16x1xf32>
    %303 = arith.mulf %297, %297 : vector<16x1xf32>
    %304 = arith.subf %302, %303 : vector<16x1xf32>
    %cst_136 = arith.constant 0.000000e+00 : f32
    %305 = vector.broadcast %cst_136 : f32 to vector<16x1xf32>
    %306 = arith.maximumf %304, %305 : vector<16x1xf32>
    %307 = vector.broadcast %297 : vector<16x1xf32> to vector<16x32xf32>
    %308 = arith.subf %293, %307 : vector<16x32xf32>
    %cst_137 = arith.constant 9.99999996E-13 : f32
    %309 = vector.broadcast %cst_137 : f32 to vector<16x1xf32>
    %310 = arith.addf %306, %309 : vector<16x1xf32>
    %311 = math.rsqrt %310 : vector<16x1xf32>
    %312 = vector.broadcast %311 : vector<16x1xf32> to vector<16x32xf32>
    %313 = arith.mulf %308, %312 : vector<16x32xf32>
    %314 = vector.broadcast %184 : vector<1x32xf32> to vector<16x32xf32>
    %315 = arith.mulf %313, %314 : vector<16x32xf32>
    %316 = vector.broadcast %185 : vector<1x32xf32> to vector<16x32xf32>
    %317 = arith.addf %315, %316 : vector<16x32xf32>
    %c0_138 = arith.constant 0 : index
    %c0_139 = arith.constant 0 : index
    %c0_140 = arith.constant 0 : index
    %318 = vector.load %arg9[%c0_138, %c0_139, %c0_140] : memref<2x32x64xf32, #tpu.memory_space<vmem>>, vector<1x32x64xf32>
    %319 = vector.shape_cast %318 : vector<1x32x64xf32> to vector<32x64xf32>
    %cst_141 = arith.constant dense<0.000000e+00> : vector<16x64xf32>
    %320 = tpu.matmul %317, %319, %cst_141 {dimension_numbers = #tpu.dot_dimension_numbers<[1], [0], [0], [1], [0, 0, 1, 1], [], []>} : vector<16x32xf32>, vector<32x64xf32>, vector<16x64xf32> -> vector<16x64xf32>
    %c0_142 = arith.constant 0 : index
    %c0_143 = arith.constant 0 : index
    %c0_144 = arith.constant 0 : index
    %321 = vector.load %arg10[%c0_142, %c0_143, %c0_144] : memref<2x1x64xf32, #tpu.memory_space<vmem>>, vector<1x1x64xf32>
    %322 = vector.shape_cast %321 : vector<1x1x64xf32> to vector<1x64xf32>
    %323 = vector.broadcast %322 : vector<1x64xf32> to vector<16x64xf32>
    %324 = arith.addf %320, %323 : vector<16x64xf32>
    %cst_145 = arith.constant 5.000000e-01 : f32
    %325 = vector.broadcast %cst_145 : f32 to vector<16x64xf32>
    %326 = arith.mulf %325, %324 : vector<16x64xf32>
    %cst_146 = arith.constant 4.471500e-02 : f32
    %327 = vector.broadcast %cst_146 : f32 to vector<16x64xf32>
    %328 = arith.mulf %327, %324 : vector<16x64xf32>
    %329 = arith.mulf %328, %324 : vector<16x64xf32>
    %330 = arith.mulf %329, %324 : vector<16x64xf32>
    %331 = arith.addf %324, %330 : vector<16x64xf32>
    %cst_147 = arith.constant 0.797884583 : f32
    %332 = vector.broadcast %cst_147 : f32 to vector<16x64xf32>
    %333 = arith.mulf %332, %331 : vector<16x64xf32>
    %334 = math.tanh %333 : vector<16x64xf32>
    %cst_148 = arith.constant 1.000000e+00 : f32
    %335 = vector.broadcast %cst_148 : f32 to vector<16x64xf32>
    %336 = arith.addf %335, %334 : vector<16x64xf32>
    %337 = arith.mulf %326, %336 : vector<16x64xf32>
    %cst_149 = arith.constant dense<0.000000e+00> : vector<16x32xf32>
    %338 = tpu.matmul %337, %192, %cst_149 {dimension_numbers = #tpu.dot_dimension_numbers<[1], [0], [0], [1], [0, 0, 1, 1], [], []>} : vector<16x64xf32>, vector<64x32xf32>, vector<16x32xf32> -> vector<16x32xf32>
    %339 = vector.broadcast %186 : vector<1x32xf32> to vector<16x32xf32>
    %340 = arith.addf %338, %339 : vector<16x32xf32>
    %341 = arith.addf %340, %317 : vector<16x32xf32>
    %cst_150 = arith.constant dense<0.000000e+00> : vector<16xf32>
    %342 = vector.multi_reduction <add>, %341, %cst_150 [1] : vector<16x32xf32> to vector<16xf32>
    %343 = vector.shape_cast %342 : vector<16xf32> to vector<16x1xf32>
    %cst_151 = arith.constant 3.200000e+01 : f32
    %344 = vector.broadcast %cst_151 : f32 to vector<16x1xf32>
    %345 = arith.divf %343, %344 : vector<16x1xf32>
    %346 = arith.mulf %341, %341 : vector<16x32xf32>
    %cst_152 = arith.constant dense<0.000000e+00> : vector<16xf32>
    %347 = vector.multi_reduction <add>, %346, %cst_152 [1] : vector<16x32xf32> to vector<16xf32>
    %348 = vector.shape_cast %347 : vector<16xf32> to vector<16x1xf32>
    %cst_153 = arith.constant 3.200000e+01 : f32
    %349 = vector.broadcast %cst_153 : f32 to vector<16x1xf32>
    %350 = arith.divf %348, %349 : vector<16x1xf32>
    %351 = arith.mulf %345, %345 : vector<16x1xf32>
    %352 = arith.subf %350, %351 : vector<16x1xf32>
    %cst_154 = arith.constant 0.000000e+00 : f32
    %353 = vector.broadcast %cst_154 : f32 to vector<16x1xf32>
    %354 = arith.maximumf %352, %353 : vector<16x1xf32>
    %355 = vector.broadcast %345 : vector<16x1xf32> to vector<16x32xf32>
    %356 = arith.subf %341, %355 : vector<16x32xf32>
    %cst_155 = arith.constant 9.99999996E-13 : f32
    %357 = vector.broadcast %cst_155 : f32 to vector<16x1xf32>
    %358 = arith.addf %354, %357 : vector<16x1xf32>
    %359 = math.rsqrt %358 : vector<16x1xf32>
    %360 = vector.broadcast %359 : vector<16x1xf32> to vector<16x32xf32>
    %361 = arith.mulf %356, %360 : vector<16x32xf32>
    %362 = vector.broadcast %187 : vector<1x32xf32> to vector<16x32xf32>
    %363 = arith.mulf %361, %362 : vector<16x32xf32>
    %364 = vector.broadcast %188 : vector<1x32xf32> to vector<16x32xf32>
    %365 = arith.addf %363, %364 : vector<16x32xf32>
    %c1_156 = arith.constant 1 : index
    %c0_157 = arith.constant 0 : index
    %c0_158 = arith.constant 0 : index
    %366 = vector.load %arg11[%c1_156, %c0_157, %c0_158] : memref<2x6x32xf32, #tpu.memory_space<vmem>>, vector<1x6x32xf32>
    %367 = vector.shape_cast %366 : vector<1x6x32xf32> to vector<6x32xf32>
    %368 = vector.extract_strided_slice %367 {offsets = [0, 0], sizes = [1, 32], strides = [1, 1]} : vector<6x32xf32> to vector<1x32xf32>
    %369 = vector.extract_strided_slice %367 {offsets = [1, 0], sizes = [1, 32], strides = [1, 1]} : vector<6x32xf32> to vector<1x32xf32>
    %370 = vector.extract_strided_slice %367 {offsets = [2, 0], sizes = [1, 32], strides = [1, 1]} : vector<6x32xf32> to vector<1x32xf32>
    %371 = vector.extract_strided_slice %367 {offsets = [3, 0], sizes = [1, 32], strides = [1, 1]} : vector<6x32xf32> to vector<1x32xf32>
    %372 = vector.extract_strided_slice %367 {offsets = [4, 0], sizes = [1, 32], strides = [1, 1]} : vector<6x32xf32> to vector<1x32xf32>
    %373 = vector.extract_strided_slice %367 {offsets = [5, 0], sizes = [1, 32], strides = [1, 1]} : vector<6x32xf32> to vector<1x32xf32>
    %c1_159 = arith.constant 1 : index
    %c0_160 = arith.constant 0 : index
    %c0_161 = arith.constant 0 : index
    %374 = vector.load %arg8[%c1_159, %c0_160, %c0_161] : memref<2x96x32xf32, #tpu.memory_space<vmem>>, vector<1x96x32xf32>
    %375 = vector.shape_cast %374 : vector<1x96x32xf32> to vector<96x32xf32>
    %376 = vector.extract_strided_slice %375 {offsets = [0, 0], sizes = [32, 32], strides = [1, 1]} : vector<96x32xf32> to vector<32x32xf32>
    %377 = vector.extract_strided_slice %375 {offsets = [32, 0], sizes = [64, 32], strides = [1, 1]} : vector<96x32xf32> to vector<64x32xf32>
    %c1_162 = arith.constant 1 : index
    %c0_163 = arith.constant 0 : index
    %c0_164 = arith.constant 0 : index
    %378 = vector.load %arg6[%c1_162, %c0_163, %c0_164] : memref<2x32x96xf32, #tpu.memory_space<vmem>>, vector<1x32x96xf32>
    %379 = vector.shape_cast %378 : vector<1x32x96xf32> to vector<32x96xf32>
    %cst_165 = arith.constant dense<0.000000e+00> : vector<16x96xf32>
    %380 = tpu.matmul %365, %379, %cst_165 {dimension_numbers = #tpu.dot_dimension_numbers<[1], [0], [0], [1], [0, 0, 1, 1], [], []>} : vector<16x32xf32>, vector<32x96xf32>, vector<16x96xf32> -> vector<16x96xf32>
    %c1_166 = arith.constant 1 : index
    %c0_167 = arith.constant 0 : index
    %c0_168 = arith.constant 0 : index
    %381 = vector.load %arg7[%c1_166, %c0_167, %c0_168] : memref<2x1x96xf32, #tpu.memory_space<vmem>>, vector<1x1x96xf32>
    %382 = vector.shape_cast %381 : vector<1x1x96xf32> to vector<1x96xf32>
    %383 = vector.broadcast %382 : vector<1x96xf32> to vector<16x96xf32>
    %384 = arith.addf %380, %383 : vector<16x96xf32>
    %385 = vector.extract_strided_slice %180 {offsets = [0, 0, 0], sizes = [1, 1, 8], strides = [1, 1, 1]} : vector<2x1x8xf32> to vector<1x1x8xf32>
    %386 = vector.shape_cast %385 : vector<1x1x8xf32> to vector<1x8xf32>
    %387 = vector.extract_strided_slice %384 {offsets = [0, 0], sizes = [1, 16], strides = [1, 1]} : vector<16x96xf32> to vector<1x16xf32>
    %388 = vector.extract_strided_slice %384 {offsets = [0, 32], sizes = [8, 16], strides = [1, 1]} : vector<16x96xf32> to vector<8x16xf32>
    %389 = vector.extract_strided_slice %384 {offsets = [0, 64], sizes = [8, 16], strides = [1, 1]} : vector<16x96xf32> to vector<8x16xf32>
    %cst_169 = arith.constant dense<0.000000e+00> : vector<1x8xf32>
    %390 = tpu.matmul %387, %388, %cst_169 {dimension_numbers = #tpu.dot_dimension_numbers<[1], [1], [0], [0], [0, 0, 1, 0], [], []>} : vector<1x16xf32>, vector<8x16xf32>, vector<1x8xf32> -> vector<1x8xf32>
    %cst_170 = arith.constant 2.500000e-01 : f32
    %391 = vector.broadcast %cst_170 : f32 to vector<1x8xf32>
    %392 = arith.mulf %390, %391 : vector<1x8xf32>
    %393 = arith.addf %392, %386 : vector<1x8xf32>
    %cst_171 = arith.constant dense<0xFF800000> : vector<1xf32>
    %394 = vector.multi_reduction <maximumf>, %393, %cst_171 [1] : vector<1x8xf32> to vector<1xf32>
    %395 = vector.shape_cast %394 : vector<1xf32> to vector<1x1xf32>
    %396 = vector.broadcast %395 : vector<1x1xf32> to vector<1x8xf32>
    %397 = arith.subf %393, %396 : vector<1x8xf32>
    %398 = math.exp %397 : vector<1x8xf32>
    %cst_172 = arith.constant dense<0.000000e+00> : vector<1xf32>
    %399 = vector.multi_reduction <add>, %398, %cst_172 [1] : vector<1x8xf32> to vector<1xf32>
    %400 = vector.shape_cast %399 : vector<1xf32> to vector<1x1xf32>
    %401 = tpu.reciprocal %400 {approx = true} : vector<1x1xf32> -> vector<1x1xf32>
    %402 = vector.broadcast %401 : vector<1x1xf32> to vector<1x8xf32>
    %403 = arith.mulf %398, %402 : vector<1x8xf32>
    %cst_173 = arith.constant dense<0.000000e+00> : vector<1x16xf32>
    %404 = tpu.matmul %403, %389, %cst_173 {dimension_numbers = #tpu.dot_dimension_numbers<[1], [0], [0], [1], [0, 0, 1, 1], [], []>} : vector<1x8xf32>, vector<8x16xf32>, vector<1x16xf32> -> vector<1x16xf32>
    %405 = vector.extract_strided_slice %376 {offsets = [0, 0], sizes = [16, 32], strides = [1, 1]} : vector<32x32xf32> to vector<16x32xf32>
    %cst_174 = arith.constant dense<0.000000e+00> : vector<1x32xf32>
    %406 = tpu.matmul %404, %405, %cst_174 {dimension_numbers = #tpu.dot_dimension_numbers<[1], [0], [0], [1], [0, 0, 1, 1], [], []>} : vector<1x16xf32>, vector<16x32xf32>, vector<1x32xf32> -> vector<1x32xf32>
    %407 = vector.extract_strided_slice %384 {offsets = [0, 16], sizes = [1, 16], strides = [1, 1]} : vector<16x96xf32> to vector<1x16xf32>
    %408 = vector.extract_strided_slice %384 {offsets = [0, 48], sizes = [8, 16], strides = [1, 1]} : vector<16x96xf32> to vector<8x16xf32>
    %409 = vector.extract_strided_slice %384 {offsets = [0, 80], sizes = [8, 16], strides = [1, 1]} : vector<16x96xf32> to vector<8x16xf32>
    %cst_175 = arith.constant dense<0.000000e+00> : vector<1x8xf32>
    %410 = tpu.matmul %407, %408, %cst_175 {dimension_numbers = #tpu.dot_dimension_numbers<[1], [1], [0], [0], [0, 0, 1, 0], [], []>} : vector<1x16xf32>, vector<8x16xf32>, vector<1x8xf32> -> vector<1x8xf32>
    %cst_176 = arith.constant 2.500000e-01 : f32
    %411 = vector.broadcast %cst_176 : f32 to vector<1x8xf32>
    %412 = arith.mulf %410, %411 : vector<1x8xf32>
    %413 = arith.addf %412, %386 : vector<1x8xf32>
    %cst_177 = arith.constant dense<0xFF800000> : vector<1xf32>
    %414 = vector.multi_reduction <maximumf>, %413, %cst_177 [1] : vector<1x8xf32> to vector<1xf32>
    %415 = vector.shape_cast %414 : vector<1xf32> to vector<1x1xf32>
    %416 = vector.broadcast %415 : vector<1x1xf32> to vector<1x8xf32>
    %417 = arith.subf %413, %416 : vector<1x8xf32>
    %418 = math.exp %417 : vector<1x8xf32>
    %cst_178 = arith.constant dense<0.000000e+00> : vector<1xf32>
    %419 = vector.multi_reduction <add>, %418, %cst_178 [1] : vector<1x8xf32> to vector<1xf32>
    %420 = vector.shape_cast %419 : vector<1xf32> to vector<1x1xf32>
    %421 = tpu.reciprocal %420 {approx = true} : vector<1x1xf32> -> vector<1x1xf32>
    %422 = vector.broadcast %421 : vector<1x1xf32> to vector<1x8xf32>
    %423 = arith.mulf %418, %422 : vector<1x8xf32>
    %cst_179 = arith.constant dense<0.000000e+00> : vector<1x16xf32>
    %424 = tpu.matmul %423, %409, %cst_179 {dimension_numbers = #tpu.dot_dimension_numbers<[1], [0], [0], [1], [0, 0, 1, 1], [], []>} : vector<1x8xf32>, vector<8x16xf32>, vector<1x16xf32> -> vector<1x16xf32>
    %425 = vector.extract_strided_slice %376 {offsets = [16, 0], sizes = [16, 32], strides = [1, 1]} : vector<32x32xf32> to vector<16x32xf32>
    %cst_180 = arith.constant dense<0.000000e+00> : vector<1x32xf32>
    %426 = tpu.matmul %424, %425, %cst_180 {dimension_numbers = #tpu.dot_dimension_numbers<[1], [0], [0], [1], [0, 0, 1, 1], [], []>} : vector<1x16xf32>, vector<16x32xf32>, vector<1x32xf32> -> vector<1x32xf32>
    %427 = arith.addf %406, %426 : vector<1x32xf32>
    %428 = vector.extract_strided_slice %365 {offsets = [0, 0], sizes = [1, 32], strides = [1, 1]} : vector<16x32xf32> to vector<1x32xf32>
    %429 = vector.extract_strided_slice %180 {offsets = [1, 0, 0], sizes = [1, 1, 8], strides = [1, 1, 1]} : vector<2x1x8xf32> to vector<1x1x8xf32>
    %430 = vector.shape_cast %429 : vector<1x1x8xf32> to vector<1x8xf32>
    %431 = vector.extract_strided_slice %384 {offsets = [8, 0], sizes = [1, 16], strides = [1, 1]} : vector<16x96xf32> to vector<1x16xf32>
    %432 = vector.extract_strided_slice %384 {offsets = [8, 32], sizes = [8, 16], strides = [1, 1]} : vector<16x96xf32> to vector<8x16xf32>
    %433 = vector.extract_strided_slice %384 {offsets = [8, 64], sizes = [8, 16], strides = [1, 1]} : vector<16x96xf32> to vector<8x16xf32>
    %cst_181 = arith.constant dense<0.000000e+00> : vector<1x8xf32>
    %434 = tpu.matmul %431, %432, %cst_181 {dimension_numbers = #tpu.dot_dimension_numbers<[1], [1], [0], [0], [0, 0, 1, 0], [], []>} : vector<1x16xf32>, vector<8x16xf32>, vector<1x8xf32> -> vector<1x8xf32>
    %cst_182 = arith.constant 2.500000e-01 : f32
    %435 = vector.broadcast %cst_182 : f32 to vector<1x8xf32>
    %436 = arith.mulf %434, %435 : vector<1x8xf32>
    %437 = arith.addf %436, %430 : vector<1x8xf32>
    %cst_183 = arith.constant dense<0xFF800000> : vector<1xf32>
    %438 = vector.multi_reduction <maximumf>, %437, %cst_183 [1] : vector<1x8xf32> to vector<1xf32>
    %439 = vector.shape_cast %438 : vector<1xf32> to vector<1x1xf32>
    %440 = vector.broadcast %439 : vector<1x1xf32> to vector<1x8xf32>
    %441 = arith.subf %437, %440 : vector<1x8xf32>
    %442 = math.exp %441 : vector<1x8xf32>
    %cst_184 = arith.constant dense<0.000000e+00> : vector<1xf32>
    %443 = vector.multi_reduction <add>, %442, %cst_184 [1] : vector<1x8xf32> to vector<1xf32>
    %444 = vector.shape_cast %443 : vector<1xf32> to vector<1x1xf32>
    %445 = tpu.reciprocal %444 {approx = true} : vector<1x1xf32> -> vector<1x1xf32>
    %446 = vector.broadcast %445 : vector<1x1xf32> to vector<1x8xf32>
    %447 = arith.mulf %442, %446 : vector<1x8xf32>
    %cst_185 = arith.constant dense<0.000000e+00> : vector<1x16xf32>
    %448 = tpu.matmul %447, %433, %cst_185 {dimension_numbers = #tpu.dot_dimension_numbers<[1], [0], [0], [1], [0, 0, 1, 1], [], []>} : vector<1x8xf32>, vector<8x16xf32>, vector<1x16xf32> -> vector<1x16xf32>
    %449 = vector.extract_strided_slice %376 {offsets = [0, 0], sizes = [16, 32], strides = [1, 1]} : vector<32x32xf32> to vector<16x32xf32>
    %cst_186 = arith.constant dense<0.000000e+00> : vector<1x32xf32>
    %450 = tpu.matmul %448, %449, %cst_186 {dimension_numbers = #tpu.dot_dimension_numbers<[1], [0], [0], [1], [0, 0, 1, 1], [], []>} : vector<1x16xf32>, vector<16x32xf32>, vector<1x32xf32> -> vector<1x32xf32>
    %451 = vector.extract_strided_slice %384 {offsets = [8, 16], sizes = [1, 16], strides = [1, 1]} : vector<16x96xf32> to vector<1x16xf32>
    %452 = vector.extract_strided_slice %384 {offsets = [8, 48], sizes = [8, 16], strides = [1, 1]} : vector<16x96xf32> to vector<8x16xf32>
    %453 = vector.extract_strided_slice %384 {offsets = [8, 80], sizes = [8, 16], strides = [1, 1]} : vector<16x96xf32> to vector<8x16xf32>
    %cst_187 = arith.constant dense<0.000000e+00> : vector<1x8xf32>
    %454 = tpu.matmul %451, %452, %cst_187 {dimension_numbers = #tpu.dot_dimension_numbers<[1], [1], [0], [0], [0, 0, 1, 0], [], []>} : vector<1x16xf32>, vector<8x16xf32>, vector<1x8xf32> -> vector<1x8xf32>
    %cst_188 = arith.constant 2.500000e-01 : f32
    %455 = vector.broadcast %cst_188 : f32 to vector<1x8xf32>
    %456 = arith.mulf %454, %455 : vector<1x8xf32>
    %457 = arith.addf %456, %430 : vector<1x8xf32>
    %cst_189 = arith.constant dense<0xFF800000> : vector<1xf32>
    %458 = vector.multi_reduction <maximumf>, %457, %cst_189 [1] : vector<1x8xf32> to vector<1xf32>
    %459 = vector.shape_cast %458 : vector<1xf32> to vector<1x1xf32>
    %460 = vector.broadcast %459 : vector<1x1xf32> to vector<1x8xf32>
    %461 = arith.subf %457, %460 : vector<1x8xf32>
    %462 = math.exp %461 : vector<1x8xf32>
    %cst_190 = arith.constant dense<0.000000e+00> : vector<1xf32>
    %463 = vector.multi_reduction <add>, %462, %cst_190 [1] : vector<1x8xf32> to vector<1xf32>
    %464 = vector.shape_cast %463 : vector<1xf32> to vector<1x1xf32>
    %465 = tpu.reciprocal %464 {approx = true} : vector<1x1xf32> -> vector<1x1xf32>
    %466 = vector.broadcast %465 : vector<1x1xf32> to vector<1x8xf32>
    %467 = arith.mulf %462, %466 : vector<1x8xf32>
    %cst_191 = arith.constant dense<0.000000e+00> : vector<1x16xf32>
    %468 = tpu.matmul %467, %453, %cst_191 {dimension_numbers = #tpu.dot_dimension_numbers<[1], [0], [0], [1], [0, 0, 1, 1], [], []>} : vector<1x8xf32>, vector<8x16xf32>, vector<1x16xf32> -> vector<1x16xf32>
    %469 = vector.extract_strided_slice %376 {offsets = [16, 0], sizes = [16, 32], strides = [1, 1]} : vector<32x32xf32> to vector<16x32xf32>
    %cst_192 = arith.constant dense<0.000000e+00> : vector<1x32xf32>
    %470 = tpu.matmul %468, %469, %cst_192 {dimension_numbers = #tpu.dot_dimension_numbers<[1], [0], [0], [1], [0, 0, 1, 1], [], []>} : vector<1x16xf32>, vector<16x32xf32>, vector<1x32xf32> -> vector<1x32xf32>
    %471 = arith.addf %450, %470 : vector<1x32xf32>
    %472 = vector.extract_strided_slice %365 {offsets = [8, 0], sizes = [1, 32], strides = [1, 1]} : vector<16x32xf32> to vector<1x32xf32>
    %473 = tpu.concatenate %427, %471 in 0 : vector<1x32xf32>, vector<1x32xf32> -> vector<2x32xf32>
    %474 = vector.broadcast %368 : vector<1x32xf32> to vector<2x32xf32>
    %475 = arith.addf %473, %474 : vector<2x32xf32>
    %476 = tpu.concatenate %428, %472 in 0 : vector<1x32xf32>, vector<1x32xf32> -> vector<2x32xf32>
    %477 = arith.addf %475, %476 : vector<2x32xf32>
    %cst_193 = arith.constant dense<0.000000e+00> : vector<2xf32>
    %478 = vector.multi_reduction <add>, %477, %cst_193 [1] : vector<2x32xf32> to vector<2xf32>
    %479 = vector.shape_cast %478 : vector<2xf32> to vector<2x1xf32>
    %cst_194 = arith.constant 3.200000e+01 : f32
    %480 = vector.broadcast %cst_194 : f32 to vector<2x1xf32>
    %481 = arith.divf %479, %480 : vector<2x1xf32>
    %482 = arith.mulf %477, %477 : vector<2x32xf32>
    %cst_195 = arith.constant dense<0.000000e+00> : vector<2xf32>
    %483 = vector.multi_reduction <add>, %482, %cst_195 [1] : vector<2x32xf32> to vector<2xf32>
    %484 = vector.shape_cast %483 : vector<2xf32> to vector<2x1xf32>
    %cst_196 = arith.constant 3.200000e+01 : f32
    %485 = vector.broadcast %cst_196 : f32 to vector<2x1xf32>
    %486 = arith.divf %484, %485 : vector<2x1xf32>
    %487 = arith.mulf %481, %481 : vector<2x1xf32>
    %488 = arith.subf %486, %487 : vector<2x1xf32>
    %cst_197 = arith.constant 0.000000e+00 : f32
    %489 = vector.broadcast %cst_197 : f32 to vector<2x1xf32>
    %490 = arith.maximumf %488, %489 : vector<2x1xf32>
    %491 = vector.broadcast %481 : vector<2x1xf32> to vector<2x32xf32>
    %492 = arith.subf %477, %491 : vector<2x32xf32>
    %cst_198 = arith.constant 9.99999996E-13 : f32
    %493 = vector.broadcast %cst_198 : f32 to vector<2x1xf32>
    %494 = arith.addf %490, %493 : vector<2x1xf32>
    %495 = math.rsqrt %494 : vector<2x1xf32>
    %496 = vector.broadcast %495 : vector<2x1xf32> to vector<2x32xf32>
    %497 = arith.mulf %492, %496 : vector<2x32xf32>
    %498 = vector.broadcast %369 : vector<1x32xf32> to vector<2x32xf32>
    %499 = arith.mulf %497, %498 : vector<2x32xf32>
    %500 = vector.broadcast %370 : vector<1x32xf32> to vector<2x32xf32>
    %501 = arith.addf %499, %500 : vector<2x32xf32>
    %c1_199 = arith.constant 1 : index
    %c0_200 = arith.constant 0 : index
    %c0_201 = arith.constant 0 : index
    %502 = vector.load %arg9[%c1_199, %c0_200, %c0_201] : memref<2x32x64xf32, #tpu.memory_space<vmem>>, vector<1x32x64xf32>
    %503 = vector.shape_cast %502 : vector<1x32x64xf32> to vector<32x64xf32>
    %cst_202 = arith.constant dense<0.000000e+00> : vector<2x64xf32>
    %504 = tpu.matmul %501, %503, %cst_202 {dimension_numbers = #tpu.dot_dimension_numbers<[1], [0], [0], [1], [0, 0, 1, 1], [], []>} : vector<2x32xf32>, vector<32x64xf32>, vector<2x64xf32> -> vector<2x64xf32>
    %c1_203 = arith.constant 1 : index
    %c0_204 = arith.constant 0 : index
    %c0_205 = arith.constant 0 : index
    %505 = vector.load %arg10[%c1_203, %c0_204, %c0_205] : memref<2x1x64xf32, #tpu.memory_space<vmem>>, vector<1x1x64xf32>
    %506 = vector.shape_cast %505 : vector<1x1x64xf32> to vector<1x64xf32>
    %507 = vector.broadcast %506 : vector<1x64xf32> to vector<2x64xf32>
    %508 = arith.addf %504, %507 : vector<2x64xf32>
    %cst_206 = arith.constant 5.000000e-01 : f32
    %509 = vector.broadcast %cst_206 : f32 to vector<2x64xf32>
    %510 = arith.mulf %509, %508 : vector<2x64xf32>
    %cst_207 = arith.constant 4.471500e-02 : f32
    %511 = vector.broadcast %cst_207 : f32 to vector<2x64xf32>
    %512 = arith.mulf %511, %508 : vector<2x64xf32>
    %513 = arith.mulf %512, %508 : vector<2x64xf32>
    %514 = arith.mulf %513, %508 : vector<2x64xf32>
    %515 = arith.addf %508, %514 : vector<2x64xf32>
    %cst_208 = arith.constant 0.797884583 : f32
    %516 = vector.broadcast %cst_208 : f32 to vector<2x64xf32>
    %517 = arith.mulf %516, %515 : vector<2x64xf32>
    %518 = math.tanh %517 : vector<2x64xf32>
    %cst_209 = arith.constant 1.000000e+00 : f32
    %519 = vector.broadcast %cst_209 : f32 to vector<2x64xf32>
    %520 = arith.addf %519, %518 : vector<2x64xf32>
    %521 = arith.mulf %510, %520 : vector<2x64xf32>
    %cst_210 = arith.constant dense<0.000000e+00> : vector<2x32xf32>
    %522 = tpu.matmul %521, %377, %cst_210 {dimension_numbers = #tpu.dot_dimension_numbers<[1], [0], [0], [1], [0, 0, 1, 1], [], []>} : vector<2x64xf32>, vector<64x32xf32>, vector<2x32xf32> -> vector<2x32xf32>
    %523 = vector.broadcast %371 : vector<1x32xf32> to vector<2x32xf32>
    %524 = arith.addf %522, %523 : vector<2x32xf32>
    %525 = arith.addf %524, %501 : vector<2x32xf32>
    %cst_211 = arith.constant dense<0.000000e+00> : vector<2xf32>
    %526 = vector.multi_reduction <add>, %525, %cst_211 [1] : vector<2x32xf32> to vector<2xf32>
    %527 = vector.shape_cast %526 : vector<2xf32> to vector<2x1xf32>
    %cst_212 = arith.constant 3.200000e+01 : f32
    %528 = vector.broadcast %cst_212 : f32 to vector<2x1xf32>
    %529 = arith.divf %527, %528 : vector<2x1xf32>
    %530 = arith.mulf %525, %525 : vector<2x32xf32>
    %cst_213 = arith.constant dense<0.000000e+00> : vector<2xf32>
    %531 = vector.multi_reduction <add>, %530, %cst_213 [1] : vector<2x32xf32> to vector<2xf32>
    %532 = vector.shape_cast %531 : vector<2xf32> to vector<2x1xf32>
    %cst_214 = arith.constant 3.200000e+01 : f32
    %533 = vector.broadcast %cst_214 : f32 to vector<2x1xf32>
    %534 = arith.divf %532, %533 : vector<2x1xf32>
    %535 = arith.mulf %529, %529 : vector<2x1xf32>
    %536 = arith.subf %534, %535 : vector<2x1xf32>
    %cst_215 = arith.constant 0.000000e+00 : f32
    %537 = vector.broadcast %cst_215 : f32 to vector<2x1xf32>
    %538 = arith.maximumf %536, %537 : vector<2x1xf32>
    %539 = vector.broadcast %529 : vector<2x1xf32> to vector<2x32xf32>
    %540 = arith.subf %525, %539 : vector<2x32xf32>
    %cst_216 = arith.constant 9.99999996E-13 : f32
    %541 = vector.broadcast %cst_216 : f32 to vector<2x1xf32>
    %542 = arith.addf %538, %541 : vector<2x1xf32>
    %543 = math.rsqrt %542 : vector<2x1xf32>
    %544 = vector.broadcast %543 : vector<2x1xf32> to vector<2x32xf32>
    %545 = arith.mulf %540, %544 : vector<2x32xf32>
    %546 = vector.broadcast %372 : vector<1x32xf32> to vector<2x32xf32>
    %547 = arith.mulf %545, %546 : vector<2x32xf32>
    %548 = vector.broadcast %373 : vector<1x32xf32> to vector<2x32xf32>
    %549 = arith.addf %547, %548 : vector<2x32xf32>
    %c0_217 = arith.constant 0 : index
    %c0_218 = arith.constant 0 : index
    %550 = vector.load %arg13[%c0_217, %c0_218] : memref<32x32xf32, #tpu.memory_space<vmem>>, vector<32x32xf32>
    %cst_219 = arith.constant dense<0.000000e+00> : vector<2x32xf32>
    %551 = tpu.matmul %549, %550, %cst_219 {dimension_numbers = #tpu.dot_dimension_numbers<[1], [0], [0], [1], [0, 0, 1, 1], [], []>} : vector<2x32xf32>, vector<32x32xf32>, vector<2x32xf32> -> vector<2x32xf32>
    %552 = vector.broadcast %174 : vector<1x32xf32> to vector<2x32xf32>
    %553 = arith.addf %551, %552 : vector<2x32xf32>
    %554 = math.tanh %553 : vector<2x32xf32>
    %c0_220 = arith.constant 0 : index
    %c0_221 = arith.constant 0 : index
    %555 = vector.load %arg14[%c0_220, %c0_221] : memref<32x2xf32, #tpu.memory_space<vmem>>, vector<32x2xf32>
    %cst_222 = arith.constant dense<0.000000e+00> : vector<2x2xf32>
    %556 = tpu.matmul %554, %555, %cst_222 {dimension_numbers = #tpu.dot_dimension_numbers<[1], [0], [0], [1], [0, 0, 1, 1], [], []>} : vector<2x32xf32>, vector<32x2xf32>, vector<2x2xf32> -> vector<2x2xf32>
    %c0_223 = arith.constant 0 : index
    %c0_224 = arith.constant 0 : index
    %557 = vector.load %arg15[%c0_223, %c0_224] : memref<1x2xf32, #tpu.memory_space<vmem>>, vector<1x2xf32>
    %558 = vector.broadcast %557 : vector<1x2xf32> to vector<2x2xf32>
    %559 = arith.addf %556, %558 : vector<2x2xf32>
    %c0_225 = arith.constant 0 : index
    %c0_226 = arith.constant 0 : index
    %c0_227 = arith.constant 0 : index
    %560 = vector.load %arg16[%c0_225, %c0_226, %c0_227] : memref<1x2x2xf32, #tpu.memory_space<vmem>>, vector<1x2x2xf32>
    %561 = vector.shape_cast %560 : vector<1x2x2xf32> to vector<2x2xf32>
    %562 = vector.shape_cast %559 : vector<2x2xf32> to vector<1x2x2xf32>
    tpu.vector_store %arg16[%c0_225, %c0_226, %c0_227], %562 {strides = array<i32>} : memref<1x2x2xf32, #tpu.memory_space<vmem>>, vector<1x2x2xf32>,
    return
  }
  func.func @transform_0(%arg0: i32, %arg1: memref<2x8xi32, #tpu.memory_space<smem>>) -> (i32, i32) {
    %c0_i32 = arith.constant 0 : i32
    %c0_i32_0 = arith.constant 0 : i32
    %c0_i32_1 = arith.constant 0 : i32
    return %c0_i32, %c0_i32_0 : i32, i32
  }
  func.func @transform_1(%arg0: i32, %arg1: memref<2x8xi32, #tpu.memory_space<smem>>) -> (i32, i32) {
    %c0_i32 = arith.constant 0 : i32
    %c0_i32_0 = arith.constant 0 : i32
    %c0_i32_1 = arith.constant 0 : i32
    return %c0_i32, %c0_i32_0 : i32, i32
  }
  func.func @transform_2(%arg0: i32, %arg1: memref<2x8xi32, #tpu.memory_space<smem>>) -> (i32, i32) {
    %c0_i32 = arith.constant 0 : i32
    %c0_i32_0 = arith.constant 0 : i32
    %c0_i32_1 = arith.constant 0 : i32
    return %c0_i32, %c0_i32_0 : i32, i32
  }
  func.func @transform_3(%arg0: i32, %arg1: memref<2x8xi32, #tpu.memory_space<smem>>) -> (i32, i32, i32) {
    %c0_i32 = arith.constant 0 : i32
    %c0_i32_0 = arith.constant 0 : i32
    %c0_i32_1 = arith.constant 0 : i32
    return %arg0, %c0_i32, %c0_i32_0 : i32, i32, i32
  }
  func.func @transform_4(%arg0: i32, %arg1: memref<2x8xi32, #tpu.memory_space<smem>>) -> (i32, i32, i32) {
    %c0_i32 = arith.constant 0 : i32
    %c0_i32_0 = arith.constant 0 : i32
    %c0_i32_1 = arith.constant 0 : i32
    %c0_i32_2 = arith.constant 0 : i32
    return %c0_i32, %c0_i32_0, %c0_i32_1 : i32, i32, i32
  }
  func.func @transform_5(%arg0: i32, %arg1: memref<2x8xi32, #tpu.memory_space<smem>>) -> (i32, i32, i32) {
    %c0_i32 = arith.constant 0 : i32
    %c0_i32_0 = arith.constant 0 : i32
    %c0_i32_1 = arith.constant 0 : i32
    %c0_i32_2 = arith.constant 0 : i32
    return %c0_i32, %c0_i32_0, %c0_i32_1 : i32, i32, i32
  }
  func.func @transform_6(%arg0: i32, %arg1: memref<2x8xi32, #tpu.memory_space<smem>>) -> (i32, i32, i32) {
    %c0_i32 = arith.constant 0 : i32
    %c0_i32_0 = arith.constant 0 : i32
    %c0_i32_1 = arith.constant 0 : i32
    %c0_i32_2 = arith.constant 0 : i32
    return %c0_i32, %c0_i32_0, %c0_i32_1 : i32, i32, i32
  }
  func.func @transform_7(%arg0: i32, %arg1: memref<2x8xi32, #tpu.memory_space<smem>>) -> (i32, i32, i32) {
    %c0_i32 = arith.constant 0 : i32
    %c0_i32_0 = arith.constant 0 : i32
    %c0_i32_1 = arith.constant 0 : i32
    %c0_i32_2 = arith.constant 0 : i32
    return %c0_i32, %c0_i32_0, %c0_i32_1 : i32, i32, i32
  }
  func.func @transform_8(%arg0: i32, %arg1: memref<2x8xi32, #tpu.memory_space<smem>>) -> (i32, i32, i32) {
    %c0_i32 = arith.constant 0 : i32
    %c0_i32_0 = arith.constant 0 : i32
    %c0_i32_1 = arith.constant 0 : i32
    %c0_i32_2 = arith.constant 0 : i32
    return %c0_i32, %c0_i32_0, %c0_i32_1 : i32, i32, i32
  }
  func.func @transform_9(%arg0: i32, %arg1: memref<2x8xi32, #tpu.memory_space<smem>>) -> (i32, i32, i32) {
    %c0_i32 = arith.constant 0 : i32
    %c0_i32_0 = arith.constant 0 : i32
    %c0_i32_1 = arith.constant 0 : i32
    %c0_i32_2 = arith.constant 0 : i32
    return %c0_i32, %c0_i32_0, %c0_i32_1 : i32, i32, i32
  }
  func.func @transform_10(%arg0: i32, %arg1: memref<2x8xi32, #tpu.memory_space<smem>>) -> (i32, i32) {
    %c0_i32 = arith.constant 0 : i32
    %c0_i32_0 = arith.constant 0 : i32
    %c0_i32_1 = arith.constant 0 : i32
    return %c0_i32, %c0_i32_0 : i32, i32
  }
  func.func @transform_11(%arg0: i32, %arg1: memref<2x8xi32, #tpu.memory_space<smem>>) -> (i32, i32) {
    %c0_i32 = arith.constant 0 : i32
    %c0_i32_0 = arith.constant 0 : i32
    %c0_i32_1 = arith.constant 0 : i32
    return %c0_i32, %c0_i32_0 : i32, i32
  }
  func.func @transform_12(%arg0: i32, %arg1: memref<2x8xi32, #tpu.memory_space<smem>>) -> (i32, i32) {
    %c0_i32 = arith.constant 0 : i32
    %c0_i32_0 = arith.constant 0 : i32
    %c0_i32_1 = arith.constant 0 : i32
    return %c0_i32, %c0_i32_0 : i32, i32
  }
  func.func @transform_13(%arg0: i32, %arg1: memref<2x8xi32, #tpu.memory_space<smem>>) -> (i32, i32) {
    %c0_i32 = arith.constant 0 : i32
    %c0_i32_0 = arith.constant 0 : i32
    %c0_i32_1 = arith.constant 0 : i32
    return %c0_i32, %c0_i32_0 : i32, i32
  }
  func.func @transform_14(%arg0: i32, %arg1: memref<2x8xi32, #tpu.memory_space<smem>>) -> (i32, i32, i32) {
    %c0_i32 = arith.constant 0 : i32
    %c0_i32_0 = arith.constant 0 : i32
    %c0_i32_1 = arith.constant 0 : i32
    return %arg0, %c0_i32, %c0_i32_0 : i32, i32, i32
  }
}

</mosaic_0001>

<llo_original>
// kernel: tpu_custom_call.1
$region0: #{tpu_custom_call.1}
  #allocation0 [shape = 'u32[]', space=smem, size = 0x4, offset = 0x4, fixed_abs, tag = 'smem constant byte address 0x4 - core index']
  #allocation1 [shape = 'u32[144,128]{1,0:T(1,128)}', space=vmem, size = 0x12000, scoped, tag = 'internal scratch']
  #allocation2 [shape = 'f32[16,32]{1,0:T(8,128)}', space=vmem, size = 0x2000, scoped, tag = 'scratch operand']
  #allocation3 [shape = 's32[1]{0}', space=sflag, size = 0x4, scoped, tag = 'scoped memory for tpu_custom_call.1']
  #allocation4 [shape = 'u8[1024]{0}', space=smem, size = 0x400, scoped, tag = 'prefetched SMEM operand 0']
  %s0 = inlined_call_operand.vmem [shape: s32[2,8], index: 0, kind: input, shape index: {}]
  %s1 = inlined_call_operand.vmem [shape: f32[100,32], index: 1, kind: input, shape index: {}]
  %s2 = inlined_call_operand.vmem [shape: f32[16,32], index: 2, kind: input, shape index: {}]
  %s3 = inlined_call_operand.vmem [shape: f32[2,32], index: 3, kind: input, shape index: {}]
  %s4 = inlined_call_operand.vmem [shape: s32[2,1,8], index: 4, kind: input, shape index: {}]
  %s5 = inlined_call_operand.vmem [shape: f32[2,32,96], index: 5, kind: input, shape index: {}]
  %s6 = inlined_call_operand.vmem [shape: f32[2,1,96], index: 6, kind: input, shape index: {}]
  %s7 = inlined_call_operand.vmem [shape: f32[2,96,32], index: 7, kind: input, shape index: {}]
  %s8 = inlined_call_operand.vmem [shape: f32[2,32,64], index: 8, kind: input, shape index: {}]
  %s9 = inlined_call_operand.vmem [shape: f32[2,1,64], index: 9, kind: input, shape index: {}]
  %s10 = inlined_call_operand.vmem [shape: f32[2,6,32], index: 10, kind: input, shape index: {}]
  %s11 = inlined_call_operand.vmem [shape: f32[3,32], index: 11, kind: input, shape index: {}]
  %s12 = inlined_call_operand.vmem [shape: f32[32,32], index: 12, kind: input, shape index: {}]
  %s13 = inlined_call_operand.vmem [shape: f32[32,2], index: 13, kind: input, shape index: {}]
  %s14 = inlined_call_operand.vmem [shape: f32[1,2], index: 14, kind: input, shape index: {}]
  %s15 = inlined_call_operand.hbm [shape: f32[1,2,2], index: 15, kind: output, shape index: {}]
  %s16 = sld [smem:[#allocation0]]
  $region66: #{tpu_custom_call.1} parent=0
    _
  %s18 = ssub.s32 1, %s16
  %s19 = scalar_select 0, %s18, %s16
  %s20 = sshll.u32 %s0, 4
  %s21 = int_to_ptr.vmem [resolvable:$true] %s20
  %23 = dma.vmem_to_smem %s21, 32, [#allocation4], [#allocation3]
  %24 = dma.done [#allocation3], 32
  %25 = sfence
  $region1: #{tpu_custom_call.1} parent=0
    #allocation5 [shape = 'u8[1024]{0}', space=vmem, size = 0x400, scoped, tag = 'output window, operand 0, single buffered']
    #allocation6 [shape = 's32[1]{0}', space=sflag, size = 0x4, scoped, tag = 'scoped memory for tpu_custom_call.1']
    %26 = vsyncpa [#allocation6], 0
    // Predicated region
    $region2: #{tpu_custom_call.1} parent=1 // pred_check
      _
    $region3: #{tpu_custom_call.1} parent=1 // pred_check_branch
      %28 = sbr.rel (0) target = $region5
    $region4: #{tpu_custom_call.1} parent=1 // pred_region
      _
    $region5: #{tpu_custom_call.1} parent=1 // pred_fallthru
      _
    // Predicated region
    $region6: #{tpu_custom_call.1} parent=1 // pred_check
      _
    $region7: #{tpu_custom_call.1} parent=1 // pred_check_branch
      %30 = sbr.rel (0) target = $region9
    $region8: #{tpu_custom_call.1} parent=1 // pred_region
      _
    $region9: #{tpu_custom_call.1} parent=1 // pred_fallthru
      _
    // Predicated region
    $region10: #{tpu_custom_call.1} parent=1 // pred_check
      _
    $region11: #{tpu_custom_call.1} parent=1 // pred_check_branch
      %32 = sbr.rel (0) target = $region13
    $region12: #{tpu_custom_call.1} parent=1 // pred_region
      _
    $region13: #{tpu_custom_call.1} parent=1 // pred_fallthru
      _
    // Predicated region
    $region14: #{tpu_custom_call.1} parent=1 // pred_check
      _
    $region15: #{tpu_custom_call.1} parent=1 // pred_check_branch
      %34 = sbr.rel (0) target = $region17
    $region16: #{tpu_custom_call.1} parent=1 // pred_region
      _
    $region17: #{tpu_custom_call.1} parent=1 // pred_fallthru
      _
    // Predicated region
    $region18: #{tpu_custom_call.1} parent=1 // pred_check
      _
    $region19: #{tpu_custom_call.1} parent=1 // pred_check_branch
      %36 = sbr.rel (0) target = $region21
    $region20: #{tpu_custom_call.1} parent=1 // pred_region
      _
    $region21: #{tpu_custom_call.1} parent=1 // pred_fallthru
      _
    // Predicated region
    $region22: #{tpu_custom_call.1} parent=1 // pred_check
      _
    $region23: #{tpu_custom_call.1} parent=1 // pred_check_branch
      %38 = sbr.rel (0) target = $region25
    $region24: #{tpu_custom_call.1} parent=1 // pred_region
      _
    $region25: #{tpu_custom_call.1} parent=1 // pred_fallthru
      _
    // Predicated region
    $region26: #{tpu_custom_call.1} parent=1 // pred_check
      _
    $region27: #{tpu_custom_call.1} parent=1 // pred_check_branch
      %40 = sbr.rel (0) target = $region29
    $region28: #{tpu_custom_call.1} parent=1 // pred_region
      _
    $region29: #{tpu_custom_call.1} parent=1 // pred_fallthru
      _
    // Predicated region
    $region30: #{tpu_custom_call.1} parent=1 // pred_check
      _
    $region31: #{tpu_custom_call.1} parent=1 // pred_check_branch
      %42 = sbr.rel (0) target = $region33
    $region32: #{tpu_custom_call.1} parent=1 // pred_region
      _
    $region33: #{tpu_custom_call.1} parent=1 // pred_fallthru
      _
    // Predicated region
    $region34: #{tpu_custom_call.1} parent=1 // pred_check
      _
    $region35: #{tpu_custom_call.1} parent=1 // pred_check_branch
      %44 = sbr.rel (0) target = $region37
    $region36: #{tpu_custom_call.1} parent=1 // pred_region
      _
    $region37: #{tpu_custom_call.1} parent=1 // pred_fallthru
      _
    // Predicated region
    $region38: #{tpu_custom_call.1} parent=1 // pred_check
      _
    $region39: #{tpu_custom_call.1} parent=1 // pred_check_branch
      %46 = sbr.rel (0) target = $region41
    $region40: #{tpu_custom_call.1} parent=1 // pred_region
      _
    $region41: #{tpu_custom_call.1} parent=1 // pred_fallthru
      _
    // Predicated region
    $region42: #{tpu_custom_call.1} parent=1 // pred_check
      _
    $region43: #{tpu_custom_call.1} parent=1 // pred_check_branch
      %48 = sbr.rel (0) target = $region45
    $region44: #{tpu_custom_call.1} parent=1 // pred_region
      _
    $region45: #{tpu_custom_call.1} parent=1 // pred_fallthru
      _
    // Predicated region
    $region46: #{tpu_custom_call.1} parent=1 // pred_check
      _
    $region47: #{tpu_custom_call.1} parent=1 // pred_check_branch
      %50 = sbr.rel (0) target = $region49
    $region48: #{tpu_custom_call.1} parent=1 // pred_region
      _
    $region49: #{tpu_custom_call.1} parent=1 // pred_fallthru
      _
    // Predicated region
    $region50: #{tpu_custom_call.1} parent=1 // pred_check
      _
    $region51: #{tpu_custom_call.1} parent=1 // pred_check_branch
      %52 = sbr.rel (0) target = $region53
    $region52: #{tpu_custom_call.1} parent=1 // pred_region
      _
    $region53: #{tpu_custom_call.1} parent=1 // pred_fallthru
      _
    // Predicated region
    $region54: #{tpu_custom_call.1} parent=1 // pred_check
      _
    $region55: #{tpu_custom_call.1} parent=1 // pred_check_branch
      %54 = sbr.rel (0) target = $region57
    $region56: #{tpu_custom_call.1} parent=1 // pred_region
      _
    $region57: #{tpu_custom_call.1} parent=1 // pred_fallthru
      _
    %v55 = vld [vmem:[%s2] sm:$0xff]
    %v56 = vld [vmem:[%s3] sm:$0x1]
    %v57 = vadd.f32 %v55, %v56
    %v59 = vrot.slane %v56, 7
    %v61 = vadd.f32 %v55, %v59
    %v62 = vrot.slane %v56, 6
    %v64 = vadd.f32 %v55, %v62
    %v65 = vrot.slane %v56, 5
    %v67 = vadd.f32 %v55, %v65
    %v68 = vrot.slane %v56, 4
    %v70 = vadd.f32 %v55, %v68
    %v71 = vrot.slane %v56, 3
    %v73 = vadd.f32 %v55, %v71
    %v74 = vrot.slane %v56, 2
    %v76 = vadd.f32 %v55, %v74
    %v77 = vrot.slane %v56, 1
    %v79 = vadd.f32 %v55, %v77
    %s80 = smul.u32 0, 2
    %s81 = smul.u32 %s80, 128
    %s82 = sld [smem:[#allocation4 + %s81]]
    %s83 = scalar_lea.vmem %s1, %s82
    %v84 = vld [vmem:[%s83] sm:$0x1]
    %v85 = vadd.f32 %v84, %v57
    %vm86 = vcmask 253952
    %87 = vst.msk [vmem:[#allocation2] sm:$0x1] %vm86, %v85
    %s88 = sadd.s32 %s81, 1
    %s89 = sld [smem:[#allocation4 + %s88]]
    %s90 = scalar_lea.vmem %s1, %s89
    %v91 = vld [vmem:[%s90] sm:$0x1]
    %v93 = vrot.slane %v61, 1
    %v95 = vadd.f32 %v91, %v93
    %96 = vst.msk [vmem:[#allocation2 + $0x1] sm:$0x1] %vm86, %v95
    %s97 = sadd.s32 %s81, 2
    %s98 = sld [smem:[#allocation4 + %s97]]
    %s99 = scalar_lea.vmem %s1, %s98
    %v100 = vld [vmem:[%s99] sm:$0x1]
    %v102 = vrot.slane %v64, 2
    %v104 = vadd.f32 %v100, %v102
    %105 = vst.msk [vmem:[#allocation2 + $0x2] sm:$0x1] %vm86, %v104
    %s106 = sadd.s32 %s81, 3
    %s107 = sld [smem:[#allocation4 + %s106]]
    %s108 = scalar_lea.vmem %s1, %s107
    %v109 = vld [vmem:[%s108] sm:$0x1]
    %v111 = vrot.slane %v67, 3
    %v113 = vadd.f32 %v109, %v111
    %114 = vst.msk [vmem:[#allocation2 + $0x3] sm:$0x1] %vm86, %v113
    %s115 = sadd.s32 %s81, 4
    %s116 = sld [smem:[#allocation4 + %s115]]
    %s117 = scalar_lea.vmem %s1, %s116
    %v118 = vld [vmem:[%s117] sm:$0x1]
    %v120 = vrot.slane %v70, 4
    %v122 = vadd.f32 %v118, %v120
    %123 = vst.msk [vmem:[#allocation2 + $0x4] sm:$0x1] %vm86, %v122
    %s124 = sadd.s32 %s81, 5
    %s125 = sld [smem:[#allocation4 + %s124]]
    %s126 = scalar_lea.vmem %s1, %s125
    %v127 = vld [vmem:[%s126] sm:$0x1]
    %v129 = vrot.slane %v73, 5
    %v131 = vadd.f32 %v127, %v129
    %132 = vst.msk [vmem:[#allocation2 + $0x5] sm:$0x1] %vm86, %v131
    %s133 = sadd.s32 %s81, 6
    %s134 = sld [smem:[#allocation4 + %s133]]
    %s135 = scalar_lea.vmem %s1, %s134
    %v136 = vld [vmem:[%s135] sm:$0x1]
    %v138 = vrot.slane %v76, 6
    %v140 = vadd.f32 %v136, %v138
    %141 = vst.msk [vmem:[#allocation2 + $0x6] sm:$0x1] %vm86, %v140
    %s142 = sadd.s32 %s81, 7
    %s143 = sld [smem:[#allocation4 + %s142]]
    %s144 = scalar_lea.vmem %s1, %s143
    %v145 = vld [vmem:[%s144] sm:$0x1]
    %v147 = vrot.slane %v79, 7
    %v149 = vadd.f32 %v145, %v147
    %150 = vst.msk [vmem:[#allocation2 + $0x7] sm:$0x1] %vm86, %v149
    %s151 = sadd.s32 %s80, 1
    %s152 = smul.u32 %s151, 128
    %s153 = sld [smem:[#allocation4 + %s152]]
    %s154 = scalar_lea.vmem %s1, %s153
    %v155 = vld [vmem:[%s154] sm:$0x1]
    %v156 = vadd.f32 %v155, %v57
    %157 = vst.msk [vmem:[#allocation2 + $0x8] sm:$0x1] %vm86, %v156
    %s158 = sadd.s32 %s152, 1
    %s159 = sld [smem:[#allocation4 + %s158]]
    %s160 = scalar_lea.vmem %s1, %s159
    %v161 = vld [vmem:[%s160] sm:$0x1]
    %v162 = vadd.f32 %v161, %v93
    %163 = vst.msk [vmem:[#allocation2 + $0x9] sm:$0x1] %vm86, %v162
    %s164 = sadd.s32 %s152, 2
    %s165 = sld [smem:[#allocation4 + %s164]]
    %s166 = scalar_lea.vmem %s1, %s165
    %v167 = vld [vmem:[%s166] sm:$0x1]
    %v168 = vadd.f32 %v167, %v102
    %169 = vst.msk [vmem:[#allocation2 + $0xa] sm:$0x1] %vm86, %v168
    %s170 = sadd.s32 %s152, 3
    %s171 = sld [smem:[#allocation4 + %s170]]
    %s172 = scalar_lea.vmem %s1, %s171
    %v173 = vld [vmem:[%s172] sm:$0x1]
    %v174 = vadd.f32 %v173, %v111
    %175 = vst.msk [vmem:[#allocation2 + $0xb] sm:$0x1] %vm86, %v174
    %s176 = sadd.s32 %s152, 4
    %s177 = sld [smem:[#allocation4 + %s176]]
    %s178 = scalar_lea.vmem %s1, %s177
    %v179 = vld [vmem:[%s178] sm:$0x1]
    %v180 = vadd.f32 %v179, %v120
    %181 = vst.msk [vmem:[#allocation2 + $0xc] sm:$0x1] %vm86, %v180
    %s182 = sadd.s32 %s152, 5
    %s183 = sld [smem:[#allocation4 + %s182]]
    %s184 = scalar_lea.vmem %s1, %s183
    %v185 = vld [vmem:[%s184] sm:$0x1]
    %v186 = vadd.f32 %v185, %v129
    %187 = vst.msk [vmem:[#allocation2 + $0xd] sm:$0x1] %vm86, %v186
    %s188 = sadd.s32 %s152, 6
    %s189 = sld [smem:[#allocation4 + %s188]]
    %s190 = scalar_lea.vmem %s1, %s189
    %v191 = vld [vmem:[%s190] sm:$0x1]
    %v192 = vadd.f32 %v191, %v138
    %193 = vst.msk [vmem:[#allocation2 + $0xe] sm:$0x1] %vm86, %v192
    %s194 = sadd.s32 %s152, 7
    %s195 = sld [smem:[#allocation4 + %s194]]
    %s196 = scalar_lea.vmem %s1, %s195
    %v197 = vld [vmem:[%s196] sm:$0x1]
    %v198 = vadd.f32 %v197, %v147
    %199 = vst.msk [vmem:[#allocation2 + $0xf] sm:$0x1] %vm86, %v198
    %v200 = vld [vmem:[%s11] sm:$0x7]
    %v201 = vld [vmem:[#allocation2] sm:$0xff]
    %v202 = vld [vmem:[#allocation2 + $0x8] sm:$0xff]
    %vm203 = vcmask 261120
    %v204 = vsel %vm203, %v201, 0.0
    %205 = vadd.xlane.f32.xlu0 %v204
    %v206 = vpop.xlane.xlu0 %205
    %v207 = vsel %vm203, %v202, 0.0
    %208 = vadd.xlane.f32.xlu0 %v207
    %v209 = vpop.xlane.xlu0 %208
    %v210 = vrcp.pop 32.0
    %v211 = vmul.f32 %v206, %v210
    %v212 = vmul.f32 %v209, %v210
    %v213 = vmul.f32 %v201, %v201
    %v214 = vmul.f32 %v202, %v202
    %v215 = vsel %vm203, %v213, 0.0
    %216 = vadd.xlane.f32.xlu0 %v215
    %v217 = vpop.xlane.xlu0 %216
    %v218 = vsel %vm203, %v214, 0.0
    %219 = vadd.xlane.f32.xlu0 %v218
    %v220 = vpop.xlane.xlu0 %219
    %v221 = vmul.f32 %v217, %v210
    %v222 = vmul.f32 %v220, %v210
    %v223 = vmul.f32 %v211, %v211
    %v224 = vmul.f32 %v212, %v212
    %v225 = vsub.f32 %v221, %v223
    %v226 = vsub.f32 %v222, %v224
    %v227 = vmax.f32 %v225, 0.0
    %v228 = vmax.f32 %v226, 0.0
    %v229 = vsub.f32 %v201, %v211
    %v230 = vsub.f32 %v202, %v212
    %v231 = vadd.f32 %v227, 1e-12
    %v232 = vadd.f32 %v228, 1e-12
    %v233 = vrsqrt.pop %v231
    %v234 = vrsqrt.pop %v232
    %v235 = vmul.f32 %v229, %v233
    %v236 = vmul.f32 %v230, %v234
    %v237 = vlaneseq
    %v238 = vshrl.u32 %v237, 7
    %v239 = vsub.s32 0, %v238
    %v240 = vrot.slane %v200, %v239
    %v241 = vmul.f32 %v235, %v240
    %v242 = vmul.f32 %v236, %v240
    %v243 = vlaneseq
    %v244 = vshrl.u32 %v243, 7
    %v245 = vsub.s32 1, %v244
    %v246 = vrot.slane %v200, %v245
    %v247 = vadd.f32 %v241, %v246
    %v248 = vadd.f32 %v242, %v246
    %v249 = vld [vmem:[%s4] sm:$0x1]
    %v250 = vld [vmem:[%s4 + $0x1] sm:$0x1]
    %v251 = vcvt.s32.f32 %v249
    %v252 = vcvt.s32.f32 %v250
    %v253 = vsub.f32 1.0, %v251
    %v254 = vsub.f32 1.0, %v252
    %v255 = vmul.f32 %v253, -10000.0
    %v256 = vmul.f32 %v254, -10000.0
    %v257 = vld [vmem:[%s10] sm:$0x3f]
    %v258 = vld [vmem:[%s7] sm:$0xff]
    %v259 = vld [vmem:[%s7 + $0x8] sm:$0xff]
    %v260 = vld [vmem:[%s7 + $0x10] sm:$0xff]
    %v261 = vld [vmem:[%s7 + $0x18] sm:$0xff]
    %v262 = vld [vmem:[%s7 + $0x20] sm:$0xff]
    %v263 = vld [vmem:[%s7 + $0x28] sm:$0xff]
    %v264 = vld [vmem:[%s7 + $0x30] sm:$0xff]
    %v265 = vld [vmem:[%s7 + $0x38] sm:$0xff]
    %v266 = vld [vmem:[%s7 + $0x40] sm:$0xff]
    %v267 = vld [vmem:[%s7 + $0x48] sm:$0xff]
    %v268 = vld [vmem:[%s7 + $0x50] sm:$0xff]
    %v269 = vld [vmem:[%s7 + $0x58] sm:$0xff]
    %v270 = vld [vmem:[%s5] sm:$0xff]
    %v271 = vld [vmem:[%s5 + $0x8] sm:$0xff]
    %v272 = vld [vmem:[%s5 + $0x10] sm:$0xff]
    %v273 = vld [vmem:[%s5 + $0x18] sm:$0xff]
    %v274 = vld [vmem:[%s6] sm:$0x1]
    %v276 = vlaneseq
    %v277 = vshrl.u32 %v276, 7
    %v278 = vsub.s32 0, %v277
    %v279 = vrot.slane %v274, %v278
    %v282 = vsel %vm203, %v247, 0
    %v285 = vsel %vm203, %v248, 0
    %287 = vmatprep.subr.mxu0 0.0
    %288 = vmatpush1.msra.mxu0 0.0
    %289 = vmatprep.subr.mxu0 0.0
    %290 = vmatpush1.msra.mxu0 0.0
    %291 = vmatprep.subr.mxu0 0.0
    %292 = vmatpush1.msra.mxu0 0.0
    %293 = vmatprep.subr.mxu0 0.0
    %294 = vmatpush1.msra.mxu0 0.0
    %295 = vmatprep.subr.mxu0 0.0
    %296 = vmatpush1.msra.mxu0 0.0
    %297 = vmatprep.subr.mxu0 0.0
    %298 = vmatpush1.msra.mxu0 0.0
    %299 = vmatprep.subr.mxu0 0.0
    %300 = vmatpush1.msra.mxu0 0.0
    %301 = vmatprep.subr.mxu0 0.0
    %302 = vmatpush1.msra.mxu0 0.0
    %303 = vmatprep.subr.mxu0 0.0
    %304 = vmatpush1.msra.mxu0 0.0
    %305 = vmatprep.subr.mxu0 0.0
    %306 = vmatpush1.msra.mxu0 0.0
    %307 = vmatprep.subr.mxu0 0.0
    %308 = vmatpush1.msra.mxu0 0.0
    %309 = vmatprep.subr.mxu0 0.0
    %310 = vmatpush1.msra.mxu0 0.0
    %311 = vmatprep.subr.mxu0 0.0
    %312 = vmatpush1.msra.mxu0 %v273
    %313 = vmatprep.subr.mxu0 0.0
    %314 = vmatpush1.msra.mxu0 %v272
    %315 = vmatprep.subr.mxu0 0.0
    %316 = vmatpush1.msra.mxu0 %v271
    %317 = vmatprep.subr.mxu0 0.0
    %318 = vmatpush1.msra.mxu0 %v270
    %319 = vmatprep.subr.mxu0 0.0
    %320 = vmatpush2.msra.mxu0 0.0
    %321 = vmatprep.subr.mxu0 0.0
    %322 = vmatpush2.msra.mxu0 0.0
    %323 = vmatprep.subr.mxu0 0.0
    %324 = vmatpush2.msra.mxu0 0.0
    %325 = vmatprep.subr.mxu0 0.0
    %326 = vmatpush2.msra.mxu0 0.0
    %327 = vmatprep.subr.mxu0 0.0
    %328 = vmatpush2.msra.mxu0 0.0
    %329 = vmatprep.subr.mxu0 0.0
    %330 = vmatpush2.msra.mxu0 0.0
    %331 = vmatprep.subr.mxu0 0.0
    %332 = vmatpush2.msra.mxu0 0.0
    %333 = vmatprep.subr.mxu0 0.0
    %334 = vmatpush2.msra.mxu0 0.0
    %335 = vmatprep.subr.mxu0 0.0
    %336 = vmatpush2.msra.mxu0 0.0
    %337 = vmatprep.subr.mxu0 0.0
    %338 = vmatpush2.msra.mxu0 0.0
    %339 = vmatprep.subr.mxu0 0.0
    %340 = vmatpush2.msra.mxu0 0.0
    %341 = vmatprep.subr.mxu0 0.0
    %342 = vmatpush2.msra.mxu0 0.0
    %343 = vmatprep.subr.mxu0 0.0
    %344 = vmatpush2.msra.mxu0 0.0
    %345 = vmatprep.subr.mxu0 0.0
    %346 = vmatpush2.msra.mxu0 0.0
    %347 = vmatprep.subr.mxu0 0.0
    %348 = vmatpush2.msra.mxu0 0.0
    %349 = vmatprep.subr.mxu0 0.0
    %350 = vmatpush2.msra.mxu0 0.0
    %351 = vmatprep.mubr.f32.mxu0 0.0
    %352 = vmatmul.mubr.f32.gmra.mxu0 %v282
    %v353 = vpop.f32.mrf.mxu0
    %v354 = vadd.f32 %v279, %v353
    %v355 = vpop.f32.mrf.mxu0
    %356 = vmatprep.mubr.f32.mxu0 0.0
    %357 = vmatmul.mubr.f32.gmra.mxu0 %v285
    %v358 = vpop.f32.mrf.mxu0
    %v359 = vadd.f32 %v279, %v358
    %v360 = vpop.f32.mrf.mxu0
    %361 = vdwg.mxu0
    %363 = vrot.lane.b32.xlu0 %v354, 96
    %v364 = vpop.permute.xlu0 %363
    %vm365 = vcmask 130048
    %v366 = vsel %vm365, %v354, 0
    %v368 = vsel %vm365, %v364, 0
    %370 = vmatprep.subr.mxu0 0.0
    %371 = vmatpush1.xpose.msra.mxu0 0.0
    %372 = vmatprep.subr.mxu0 0.0
    %373 = vmatpush1.xpose.msra.mxu0 0.0
    %374 = vmatprep.subr.mxu0 0.0
    %375 = vmatpush1.xpose.msra.mxu0 0.0
    %376 = vmatprep.subr.mxu0 0.0
    %377 = vmatpush1.xpose.msra.mxu0 0.0
    %378 = vmatprep.subr.mxu0 0.0
    %379 = vmatpush1.xpose.msra.mxu0 0.0
    %380 = vmatprep.subr.mxu0 0.0
    %381 = vmatpush1.xpose.msra.mxu0 0.0
    %382 = vmatprep.subr.mxu0 0.0
    %383 = vmatpush1.xpose.msra.mxu0 0.0
    %384 = vmatprep.subr.mxu0 0.0
    %385 = vmatpush1.xpose.msra.mxu0 0.0
    %386 = vmatprep.subr.mxu0 0.0
    %387 = vmatpush1.xpose.msra.mxu0 0.0
    %388 = vmatprep.subr.mxu0 0.0
    %389 = vmatpush1.xpose.msra.mxu0 0.0
    %390 = vmatprep.subr.mxu0 0.0
    %391 = vmatpush1.xpose.msra.mxu0 0.0
    %392 = vmatprep.subr.mxu0 0.0
    %393 = vmatpush1.xpose.msra.mxu0 0.0
    %394 = vmatprep.subr.mxu0 0.0
    %395 = vmatpush1.xpose.msra.mxu0 0.0
    %396 = vmatprep.subr.mxu0 0.0
    %397 = vmatpush1.xpose.msra.mxu0 0.0
    %398 = vmatprep.subr.mxu0 0.0
    %399 = vmatpush1.xpose.msra.mxu0 0.0
    %400 = vmatprep.subr.mxu0 0.0
    %401 = vmatpush1.xpose.msra.mxu0 %v368
    %402 = vmatprep.subr.mxu0 0.0
    %403 = vmatpush2.xpose.msra.mxu0 0.0
    %404 = vmatprep.subr.mxu0 0.0
    %405 = vmatpush2.xpose.msra.mxu0 0.0
    %406 = vmatprep.subr.mxu0 0.0
    %407 = vmatpush2.xpose.msra.mxu0 0.0
    %408 = vmatprep.subr.mxu0 0.0
    %409 = vmatpush2.xpose.msra.mxu0 0.0
    %410 = vmatprep.subr.mxu0 0.0
    %411 = vmatpush2.xpose.msra.mxu0 0.0
    %412 = vmatprep.subr.mxu0 0.0
    %413 = vmatpush2.xpose.msra.mxu0 0.0
    %414 = vmatprep.subr.mxu0 0.0
    %415 = vmatpush2.xpose.msra.mxu0 0.0
    %416 = vmatprep.subr.mxu0 0.0
    %417 = vmatpush2.xpose.msra.mxu0 0.0
    %418 = vmatprep.subr.mxu0 0.0
    %419 = vmatpush2.xpose.msra.mxu0 0.0
    %420 = vmatprep.subr.mxu0 0.0
    %421 = vmatpush2.xpose.msra.mxu0 0.0
    %422 = vmatprep.subr.mxu0 0.0
    %423 = vmatpush2.xpose.msra.mxu0 0.0
    %424 = vmatprep.subr.mxu0 0.0
    %425 = vmatpush2.xpose.msra.mxu0 0.0
    %426 = vmatprep.subr.mxu0 0.0
    %427 = vmatpush2.xpose.msra.mxu0 0.0
    %428 = vmatprep.subr.mxu0 0.0
    %429 = vmatpush2.xpose.msra.mxu0 0.0
    %430 = vmatprep.subr.mxu0 0.0
    %431 = vmatpush2.xpose.msra.mxu0 0.0
    %432 = vmatprep.subr.mxu0 0.0
    %433 = vmatpush2.xpose.msra.mxu0 0.0
    %434 = vmatprep.mubr.f32.mxu0 0.0
    %435 = vmatmul.mubr.f32.gmra.mxu0 %v366
    %v436 = vpop.f32.mrf.mxu0
    %v437 = vadd.f32 0.0, %v436
    %v438 = vpop.f32.mrf.mxu0
    %439 = vdwg.mxu0
    %v440 = vmul.f32 %v437, 0.25
    %v442 = vlaneseq
    %v443 = vshrl.u32 %v442, 7
    %v444 = vsub.s32 0, %v443
    %v445 = vrot.slane %v255, %v444
    %v447 = vadd.f32 %v440, %v445
    %vm448 = vcmask 64512
    %v449 = vsel %vm448, %v447, -inf
    %450 = vmax.xlane.f32.xlu0 %v449
    %v451 = vpop.xlane.xlu0 %450
    %v452 = vsub.f32 %v447, %v451
    %v453 = vmul.f32 %v452, 1.442695
    %v454 = vpow.pop %v453
    %v455 = vsel %vm448, %v454, 0.0
    %456 = vadd.xlane.f32.xlu0 %v455
    %v457 = vpop.xlane.xlu0 %456
    %v458 = vrcp.pop %v457
    %v459 = vmul.f32 %v454, %v458
    %460 = vrot.lane.b32.xlu0 %v354, 64
    %v461 = vpop.permute.xlu0 %460
    %v464 = vsel %vm448, %v459, 0
    %466 = vmatprep.subr.mxu0 0.0
    %467 = vmatpush1.msra.mxu0 0.0
    %468 = vmatprep.subr.mxu0 0.0
    %469 = vmatpush1.msra.mxu0 0.0
    %470 = vmatprep.subr.mxu0 0.0
    %471 = vmatpush1.msra.mxu0 0.0
    %472 = vmatprep.subr.mxu0 0.0
    %473 = vmatpush1.msra.mxu0 0.0
    %474 = vmatprep.subr.mxu0 0.0
    %475 = vmatpush1.msra.mxu0 0.0
    %476 = vmatprep.subr.mxu0 0.0
    %477 = vmatpush1.msra.mxu0 0.0
    %478 = vmatprep.subr.mxu0 0.0
    %479 = vmatpush1.msra.mxu0 0.0
    %480 = vmatprep.subr.mxu0 0.0
    %481 = vmatpush1.msra.mxu0 0.0
    %482 = vmatprep.subr.mxu0 0.0
    %483 = vmatpush1.msra.mxu0 0.0
    %484 = vmatprep.subr.mxu0 0.0
    %485 = vmatpush1.msra.mxu0 0.0
    %486 = vmatprep.subr.mxu0 0.0
    %487 = vmatpush1.msra.mxu0 0.0
    %488 = vmatprep.subr.mxu0 0.0
    %489 = vmatpush1.msra.mxu0 0.0
    %490 = vmatprep.subr.mxu0 0.0
    %491 = vmatpush1.msra.mxu0 0.0
    %492 = vmatprep.subr.mxu0 0.0
    %493 = vmatpush1.msra.mxu0 0.0
    %494 = vmatprep.subr.mxu0 0.0
    %495 = vmatpush1.msra.mxu0 0.0
    %496 = vmatprep.subr.mxu0 0.0
    %497 = vmatpush1.msra.mxu0 %v461
    %498 = vmatprep.subr.mxu0 0.0
    %499 = vmatpush2.msra.mxu0 0.0
    %500 = vmatprep.subr.mxu0 0.0
    %501 = vmatpush2.msra.mxu0 0.0
    %502 = vmatprep.subr.mxu0 0.0
    %503 = vmatpush2.msra.mxu0 0.0
    %504 = vmatprep.subr.mxu0 0.0
    %505 = vmatpush2.msra.mxu0 0.0
    %506 = vmatprep.subr.mxu0 0.0
    %507 = vmatpush2.msra.mxu0 0.0
    %508 = vmatprep.subr.mxu0 0.0
    %509 = vmatpush2.msra.mxu0 0.0
    %510 = vmatprep.subr.mxu0 0.0
    %511 = vmatpush2.msra.mxu0 0.0
    %512 = vmatprep.subr.mxu0 0.0
    %513 = vmatpush2.msra.mxu0 0.0
    %514 = vmatprep.subr.mxu0 0.0
    %515 = vmatpush2.msra.mxu0 0.0
    %516 = vmatprep.subr.mxu0 0.0
    %517 = vmatpush2.msra.mxu0 0.0
    %518 = vmatprep.subr.mxu0 0.0
    %519 = vmatpush2.msra.mxu0 0.0
    %520 = vmatprep.subr.mxu0 0.0
    %521 = vmatpush2.msra.mxu0 0.0
    %522 = vmatprep.subr.mxu0 0.0
    %523 = vmatpush2.msra.mxu0 0.0
    %524 = vmatprep.subr.mxu0 0.0
    %525 = vmatpush2.msra.mxu0 0.0
    %526 = vmatprep.subr.mxu0 0.0
    %527 = vmatpush2.msra.mxu0 0.0
    %528 = vmatprep.subr.mxu0 0.0
    %529 = vmatpush2.msra.mxu0 0.0
    %530 = vmatprep.mubr.f32.mxu0 0.0
    %531 = vmatmul.mubr.f32.gmra.mxu0 %v464
    %v532 = vpop.f32.mrf.mxu0
    %v533 = vadd.f32 0.0, %v532
    %v534 = vpop.f32.mrf.mxu0
    %535 = vdwg.mxu0
    %536 = vrot.lane.b32.xlu0 %v354, 112
    %v537 = vpop.permute.xlu0 %536
    %538 = vrot.lane.b32.xlu0 %v354, 80
    %v539 = vpop.permute.xlu0 %538
    %v540 = vsel %vm365, %v537, 0
    %v542 = vsel %vm365, %v539, 0
    %544 = vmatprep.subr.mxu0 0.0
    %545 = vmatpush1.xpose.msra.mxu0 0.0
    %546 = vmatprep.subr.mxu0 0.0
    %547 = vmatpush1.xpose.msra.mxu0 0.0
    %548 = vmatprep.subr.mxu0 0.0
    %549 = vmatpush1.xpose.msra.mxu0 0.0
    %550 = vmatprep.subr.mxu0 0.0
    %551 = vmatpush1.xpose.msra.mxu0 0.0
    %552 = vmatprep.subr.mxu0 0.0
    %553 = vmatpush1.xpose.msra.mxu0 0.0
    %554 = vmatprep.subr.mxu0 0.0
    %555 = vmatpush1.xpose.msra.mxu0 0.0
    %556 = vmatprep.subr.mxu0 0.0
    %557 = vmatpush1.xpose.msra.mxu0 0.0
    %558 = vmatprep.subr.mxu0 0.0
    %559 = vmatpush1.xpose.msra.mxu0 0.0
    %560 = vmatprep.subr.mxu0 0.0
    %561 = vmatpush1.xpose.msra.mxu0 0.0
    %562 = vmatprep.subr.mxu0 0.0
    %563 = vmatpush1.xpose.msra.mxu0 0.0
    %564 = vmatprep.subr.mxu0 0.0
    %565 = vmatpush1.xpose.msra.mxu0 0.0
    %566 = vmatprep.subr.mxu0 0.0
    %567 = vmatpush1.xpose.msra.mxu0 0.0
    %568 = vmatprep.subr.mxu0 0.0
    %569 = vmatpush1.xpose.msra.mxu0 0.0
    %570 = vmatprep.subr.mxu0 0.0
    %571 = vmatpush1.xpose.msra.mxu0 0.0
    %572 = vmatprep.subr.mxu0 0.0
    %573 = vmatpush1.xpose.msra.mxu0 0.0
    %574 = vmatprep.subr.mxu0 0.0
    %575 = vmatpush1.xpose.msra.mxu0 %v542
    %576 = vmatprep.subr.mxu0 0.0
    %577 = vmatpush2.xpose.msra.mxu0 0.0
    %578 = vmatprep.subr.mxu0 0.0
    %579 = vmatpush2.xpose.msra.mxu0 0.0
    %580 = vmatprep.subr.mxu0 0.0
    %581 = vmatpush2.xpose.msra.mxu0 0.0
    %582 = vmatprep.subr.mxu0 0.0
    %583 = vmatpush2.xpose.msra.mxu0 0.0
    %584 = vmatprep.subr.mxu0 0.0
    %585 = vmatpush2.xpose.msra.mxu0 0.0
    %586 = vmatprep.subr.mxu0 0.0
    %587 = vmatpush2.xpose.msra.mxu0 0.0
    %588 = vmatprep.subr.mxu0 0.0
    %589 = vmatpush2.xpose.msra.mxu0 0.0
    %590 = vmatprep.subr.mxu0 0.0
    %591 = vmatpush2.xpose.msra.mxu0 0.0
    %592 = vmatprep.subr.mxu0 0.0
    %593 = vmatpush2.xpose.msra.mxu0 0.0
    %594 = vmatprep.subr.mxu0 0.0
    %595 = vmatpush2.xpose.msra.mxu0 0.0
    %596 = vmatprep.subr.mxu0 0.0
    %597 = vmatpush2.xpose.msra.mxu0 0.0
    %598 = vmatprep.subr.mxu0 0.0
    %599 = vmatpush2.xpose.msra.mxu0 0.0
    %600 = vmatprep.subr.mxu0 0.0
    %601 = vmatpush2.xpose.msra.mxu0 0.0
    %602 = vmatprep.subr.mxu0 0.0
    %603 = vmatpush2.xpose.msra.mxu0 0.0
    %604 = vmatprep.subr.mxu0 0.0
    %605 = vmatpush2.xpose.msra.mxu0 0.0
    %606 = vmatprep.subr.mxu0 0.0
    %607 = vmatpush2.xpose.msra.mxu0 0.0
    %608 = vmatprep.mubr.f32.mxu0 0.0
    %609 = vmatmul.mubr.f32.gmra.mxu0 %v540
    %v610 = vpop.f32.mrf.mxu0
    %v611 = vadd.f32 0.0, %v610
    %v612 = vpop.f32.mrf.mxu0
    %613 = vdwg.mxu0
    %v614 = vmul.f32 %v611, 0.25
    %v615 = vadd.f32 %v614, %v445
    %v616 = vsel %vm448, %v615, -inf
    %617 = vmax.xlane.f32.xlu0 %v616
    %v618 = vpop.xlane.xlu0 %617
    %v619 = vsub.f32 %v615, %v618
    %v620 = vmul.f32 %v619, 1.442695
    %v621 = vpow.pop %v620
    %v622 = vsel %vm448, %v621, 0.0
    %623 = vadd.xlane.f32.xlu0 %v622
    %v624 = vpop.xlane.xlu0 %623
    %v625 = vrcp.pop %v624
    %v626 = vmul.f32 %v621, %v625
    %627 = vrot.lane.b32.xlu0 %v354, 48
    %v628 = vpop.permute.xlu0 %627
    %v631 = vsel %vm448, %v626, 0
    %633 = vmatprep.subr.mxu0 0.0
    %634 = vmatpush1.msra.mxu0 0.0
    %635 = vmatprep.subr.mxu0 0.0
    %636 = vmatpush1.msra.mxu0 0.0
    %637 = vmatprep.subr.mxu0 0.0
    %638 = vmatpush1.msra.mxu0 0.0
    %639 = vmatprep.subr.mxu0 0.0
    %640 = vmatpush1.msra.mxu0 0.0
    %641 = vmatprep.subr.mxu0 0.0
    %642 = vmatpush1.msra.mxu0 0.0
    %643 = vmatprep.subr.mxu0 0.0
    %644 = vmatpush1.msra.mxu0 0.0
    %645 = vmatprep.subr.mxu0 0.0
    %646 = vmatpush1.msra.mxu0 0.0
    %647 = vmatprep.subr.mxu0 0.0
    %648 = vmatpush1.msra.mxu0 0.0
    %649 = vmatprep.subr.mxu0 0.0
    %650 = vmatpush1.msra.mxu0 0.0
    %651 = vmatprep.subr.mxu0 0.0
    %652 = vmatpush1.msra.mxu0 0.0
    %653 = vmatprep.subr.mxu0 0.0
    %654 = vmatpush1.msra.mxu0 0.0
    %655 = vmatprep.subr.mxu0 0.0
    %656 = vmatpush1.msra.mxu0 0.0
    %657 = vmatprep.subr.mxu0 0.0
    %658 = vmatpush1.msra.mxu0 0.0
    %659 = vmatprep.subr.mxu0 0.0
    %660 = vmatpush1.msra.mxu0 0.0
    %661 = vmatprep.subr.mxu0 0.0
    %662 = vmatpush1.msra.mxu0 0.0
    %663 = vmatprep.subr.mxu0 0.0
    %664 = vmatpush1.msra.mxu0 %v628
    %665 = vmatprep.subr.mxu0 0.0
    %666 = vmatpush2.msra.mxu0 0.0
    %667 = vmatprep.subr.mxu0 0.0
    %668 = vmatpush2.msra.mxu0 0.0
    %669 = vmatprep.subr.mxu0 0.0
    %670 = vmatpush2.msra.mxu0 0.0
    %671 = vmatprep.subr.mxu0 0.0
    %672 = vmatpush2.msra.mxu0 0.0
    %673 = vmatprep.subr.mxu0 0.0
    %674 = vmatpush2.msra.mxu0 0.0
    %675 = vmatprep.subr.mxu0 0.0
    %676 = vmatpush2.msra.mxu0 0.0
    %677 = vmatprep.subr.mxu0 0.0
    %678 = vmatpush2.msra.mxu0 0.0
    %679 = vmatprep.subr.mxu0 0.0
    %680 = vmatpush2.msra.mxu0 0.0
    %681 = vmatprep.subr.mxu0 0.0
    %682 = vmatpush2.msra.mxu0 0.0
    %683 = vmatprep.subr.mxu0 0.0
    %684 = vmatpush2.msra.mxu0 0.0
    %685 = vmatprep.subr.mxu0 0.0
    %686 = vmatpush2.msra.mxu0 0.0
    %687 = vmatprep.subr.mxu0 0.0
    %688 = vmatpush2.msra.mxu0 0.0
    %689 = vmatprep.subr.mxu0 0.0
    %690 = vmatpush2.msra.mxu0 0.0
    %691 = vmatprep.subr.mxu0 0.0
    %692 = vmatpush2.msra.mxu0 0.0
    %693 = vmatprep.subr.mxu0 0.0
    %694 = vmatpush2.msra.mxu0 0.0
    %695 = vmatprep.subr.mxu0 0.0
    %696 = vmatpush2.msra.mxu0 0.0
    %697 = vmatprep.mubr.f32.mxu0 0.0
    %698 = vmatmul.mubr.f32.gmra.mxu0 %v631
    %v699 = vpop.f32.mrf.mxu0
    %v700 = vadd.f32 0.0, %v699
    %v701 = vpop.f32.mrf.mxu0
    %702 = vdwg.mxu0
    %v704 = vsel %vm365, %v700, 0
    %706 = vmatprep.subr.mxu0 0.0
    %707 = vmatpush1.msra.mxu0 0.0
    %708 = vmatprep.subr.mxu0 0.0
    %709 = vmatpush1.msra.mxu0 0.0
    %710 = vmatprep.subr.mxu0 0.0
    %711 = vmatpush1.msra.mxu0 0.0
    %712 = vmatprep.subr.mxu0 0.0
    %713 = vmatpush1.msra.mxu0 0.0
    %714 = vmatprep.subr.mxu0 0.0
    %715 = vmatpush1.msra.mxu0 0.0
    %716 = vmatprep.subr.mxu0 0.0
    %717 = vmatpush1.msra.mxu0 0.0
    %718 = vmatprep.subr.mxu0 0.0
    %719 = vmatpush1.msra.mxu0 0.0
    %720 = vmatprep.subr.mxu0 0.0
    %721 = vmatpush1.msra.mxu0 0.0
    %722 = vmatprep.subr.mxu0 0.0
    %723 = vmatpush1.msra.mxu0 0.0
    %724 = vmatprep.subr.mxu0 0.0
    %725 = vmatpush1.msra.mxu0 0.0
    %726 = vmatprep.subr.mxu0 0.0
    %727 = vmatpush1.msra.mxu0 0.0
    %728 = vmatprep.subr.mxu0 0.0
    %729 = vmatpush1.msra.mxu0 0.0
    %730 = vmatprep.subr.mxu0 0.0
    %731 = vmatpush1.msra.mxu0 0.0
    %732 = vmatprep.subr.mxu0 0.0
    %733 = vmatpush1.msra.mxu0 0.0
    %734 = vmatprep.subr.mxu0 0.0
    %735 = vmatpush1.msra.mxu0 %v261
    %736 = vmatprep.subr.mxu0 0.0
    %737 = vmatpush1.msra.mxu0 %v260
    %738 = vmatprep.subr.mxu0 0.0
    %739 = vmatpush2.msra.mxu0 0.0
    %740 = vmatprep.subr.mxu0 0.0
    %741 = vmatpush2.msra.mxu0 0.0
    %742 = vmatprep.subr.mxu0 0.0
    %743 = vmatpush2.msra.mxu0 0.0
    %744 = vmatprep.subr.mxu0 0.0
    %745 = vmatpush2.msra.mxu0 0.0
    %746 = vmatprep.subr.mxu0 0.0
    %747 = vmatpush2.msra.mxu0 0.0
    %748 = vmatprep.subr.mxu0 0.0
    %749 = vmatpush2.msra.mxu0 0.0
    %750 = vmatprep.subr.mxu0 0.0
    %751 = vmatpush2.msra.mxu0 0.0
    %752 = vmatprep.subr.mxu0 0.0
    %753 = vmatpush2.msra.mxu0 0.0
    %754 = vmatprep.subr.mxu0 0.0
    %755 = vmatpush2.msra.mxu0 0.0
    %756 = vmatprep.subr.mxu0 0.0
    %757 = vmatpush2.msra.mxu0 0.0
    %758 = vmatprep.subr.mxu0 0.0
    %759 = vmatpush2.msra.mxu0 0.0
    %760 = vmatprep.subr.mxu0 0.0
    %761 = vmatpush2.msra.mxu0 0.0
    %762 = vmatprep.subr.mxu0 0.0
    %763 = vmatpush2.msra.mxu0 0.0
    %764 = vmatprep.subr.mxu0 0.0
    %765 = vmatpush2.msra.mxu0 0.0
    %766 = vmatprep.subr.mxu0 0.0
    %767 = vmatpush2.msra.mxu0 0.0
    %768 = vmatprep.subr.mxu0 0.0
    %769 = vmatpush2.msra.mxu0 0.0
    %770 = vmatprep.mubr.f32.mxu0 0.0
    %771 = vmatmul.mubr.f32.gmra.mxu0 %v704
    %v772 = vpop.f32.mrf.mxu0
    %v773 = vadd.f32 0.0, %v772
    %v774 = vpop.f32.mrf.mxu0
    %775 = vdwg.mxu0
    %v777 = vsel %vm365, %v533, 0
    %779 = vmatprep.subr.mxu0 0.0
    %780 = vmatpush1.msra.mxu0 0.0
    %781 = vmatprep.subr.mxu0 0.0
    %782 = vmatpush1.msra.mxu0 0.0
    %783 = vmatprep.subr.mxu0 0.0
    %784 = vmatpush1.msra.mxu0 0.0
    %785 = vmatprep.subr.mxu0 0.0
    %786 = vmatpush1.msra.mxu0 0.0
    %787 = vmatprep.subr.mxu0 0.0
    %788 = vmatpush1.msra.mxu0 0.0
    %789 = vmatprep.subr.mxu0 0.0
    %790 = vmatpush1.msra.mxu0 0.0
    %791 = vmatprep.subr.mxu0 0.0
    %792 = vmatpush1.msra.mxu0 0.0
    %793 = vmatprep.subr.mxu0 0.0
    %794 = vmatpush1.msra.mxu0 0.0
    %795 = vmatprep.subr.mxu0 0.0
    %796 = vmatpush1.msra.mxu0 0.0
    %797 = vmatprep.subr.mxu0 0.0
    %798 = vmatpush1.msra.mxu0 0.0
    %799 = vmatprep.subr.mxu0 0.0
    %800 = vmatpush1.msra.mxu0 0.0
    %801 = vmatprep.subr.mxu0 0.0
    %802 = vmatpush1.msra.mxu0 0.0
    %803 = vmatprep.subr.mxu0 0.0
    %804 = vmatpush1.msra.mxu0 0.0
    %805 = vmatprep.subr.mxu0 0.0
    %806 = vmatpush1.msra.mxu0 0.0
    %807 = vmatprep.subr.mxu0 0.0
    %808 = vmatpush1.msra.mxu0 %v259
    %809 = vmatprep.subr.mxu0 0.0
    %810 = vmatpush1.msra.mxu0 %v258
    %811 = vmatprep.subr.mxu0 0.0
    %812 = vmatpush2.msra.mxu0 0.0
    %813 = vmatprep.subr.mxu0 0.0
    %814 = vmatpush2.msra.mxu0 0.0
    %815 = vmatprep.subr.mxu0 0.0
    %816 = vmatpush2.msra.mxu0 0.0
    %817 = vmatprep.subr.mxu0 0.0
    %818 = vmatpush2.msra.mxu0 0.0
    %819 = vmatprep.subr.mxu0 0.0
    %820 = vmatpush2.msra.mxu0 0.0
    %821 = vmatprep.subr.mxu0 0.0
    %822 = vmatpush2.msra.mxu0 0.0
    %823 = vmatprep.subr.mxu0 0.0
    %824 = vmatpush2.msra.mxu0 0.0
    %825 = vmatprep.subr.mxu0 0.0
    %826 = vmatpush2.msra.mxu0 0.0
    %827 = vmatprep.subr.mxu0 0.0
    %828 = vmatpush2.msra.mxu0 0.0
    %829 = vmatprep.subr.mxu0 0.0
    %830 = vmatpush2.msra.mxu0 0.0
    %831 = vmatprep.subr.mxu0 0.0
    %832 = vmatpush2.msra.mxu0 0.0
    %833 = vmatprep.subr.mxu0 0.0
    %834 = vmatpush2.msra.mxu0 0.0
    %835 = vmatprep.subr.mxu0 0.0
    %836 = vmatpush2.msra.mxu0 0.0
    %837 = vmatprep.subr.mxu0 0.0
    %838 = vmatpush2.msra.mxu0 0.0
    %839 = vmatprep.subr.mxu0 0.0
    %840 = vmatpush2.msra.mxu0 0.0
    %841 = vmatprep.subr.mxu0 0.0
    %842 = vmatpush2.msra.mxu0 0.0
    %843 = vmatprep.mubr.f32.mxu0 0.0
    %844 = vmatmul.mubr.f32.gmra.mxu0 %v777
    %v845 = vpop.f32.mrf.mxu0
    %v846 = vadd.f32 %v773, %v845
    %v847 = vpop.f32.mrf.mxu0
    %848 = vdwg.mxu0
    %850 = vrot.lane.b32.xlu0 %v359, 96
    %v851 = vpop.permute.xlu0 %850
    %v852 = vsel %vm365, %v359, 0
    %v854 = vsel %vm365, %v851, 0
    %856 = vmatprep.subr.mxu0 0.0
    %857 = vmatpush1.xpose.msra.mxu0 0.0
    %858 = vmatprep.subr.mxu0 0.0
    %859 = vmatpush1.xpose.msra.mxu0 0.0
    %860 = vmatprep.subr.mxu0 0.0
    %861 = vmatpush1.xpose.msra.mxu0 0.0
    %862 = vmatprep.subr.mxu0 0.0
    %863 = vmatpush1.xpose.msra.mxu0 0.0
    %864 = vmatprep.subr.mxu0 0.0
    %865 = vmatpush1.xpose.msra.mxu0 0.0
    %866 = vmatprep.subr.mxu0 0.0
    %867 = vmatpush1.xpose.msra.mxu0 0.0
    %868 = vmatprep.subr.mxu0 0.0
    %869 = vmatpush1.xpose.msra.mxu0 0.0
    %870 = vmatprep.subr.mxu0 0.0
    %871 = vmatpush1.xpose.msra.mxu0 0.0
    %872 = vmatprep.subr.mxu0 0.0
    %873 = vmatpush1.xpose.msra.mxu0 0.0
    %874 = vmatprep.subr.mxu0 0.0
    %875 = vmatpush1.xpose.msra.mxu0 0.0
    %876 = vmatprep.subr.mxu0 0.0
    %877 = vmatpush1.xpose.msra.mxu0 0.0
    %878 = vmatprep.subr.mxu0 0.0
    %879 = vmatpush1.xpose.msra.mxu0 0.0
    %880 = vmatprep.subr.mxu0 0.0
    %881 = vmatpush1.xpose.msra.mxu0 0.0
    %882 = vmatprep.subr.mxu0 0.0
    %883 = vmatpush1.xpose.msra.mxu0 0.0
    %884 = vmatprep.subr.mxu0 0.0
    %885 = vmatpush1.xpose.msra.mxu0 0.0
    %886 = vmatprep.subr.mxu0 0.0
    %887 = vmatpush1.xpose.msra.mxu0 %v854
    %888 = vmatprep.subr.mxu0 0.0
    %889 = vmatpush2.xpose.msra.mxu0 0.0
    %890 = vmatprep.subr.mxu0 0.0
    %891 = vmatpush2.xpose.msra.mxu0 0.0
    %892 = vmatprep.subr.mxu0 0.0
    %893 = vmatpush2.xpose.msra.mxu0 0.0
    %894 = vmatprep.subr.mxu0 0.0
    %895 = vmatpush2.xpose.msra.mxu0 0.0
    %896 = vmatprep.subr.mxu0 0.0
    %897 = vmatpush2.xpose.msra.mxu0 0.0
    %898 = vmatprep.subr.mxu0 0.0
    %899 = vmatpush2.xpose.msra.mxu0 0.0
    %900 = vmatprep.subr.mxu0 0.0
    %901 = vmatpush2.xpose.msra.mxu0 0.0
    %902 = vmatprep.subr.mxu0 0.0
    %903 = vmatpush2.xpose.msra.mxu0 0.0
    %904 = vmatprep.subr.mxu0 0.0
    %905 = vmatpush2.xpose.msra.mxu0 0.0
    %906 = vmatprep.subr.mxu0 0.0
    %907 = vmatpush2.xpose.msra.mxu0 0.0
    %908 = vmatprep.subr.mxu0 0.0
    %909 = vmatpush2.xpose.msra.mxu0 0.0
    %910 = vmatprep.subr.mxu0 0.0
    %911 = vmatpush2.xpose.msra.mxu0 0.0
    %912 = vmatprep.subr.mxu0 0.0
    %913 = vmatpush2.xpose.msra.mxu0 0.0
    %914 = vmatprep.subr.mxu0 0.0
    %915 = vmatpush2.xpose.msra.mxu0 0.0
    %916 = vmatprep.subr.mxu0 0.0
    %917 = vmatpush2.xpose.msra.mxu0 0.0
    %918 = vmatprep.subr.mxu0 0.0
    %919 = vmatpush2.xpose.msra.mxu0 0.0
    %920 = vmatprep.mubr.f32.mxu0 0.0
    %921 = vmatmul.mubr.f32.gmra.mxu0 %v852
    %v922 = vpop.f32.mrf.mxu0
    %v923 = vadd.f32 0.0, %v922
    %v924 = vpop.f32.mrf.mxu0
    %925 = vdwg.mxu0
    %v926 = vmul.f32 %v923, 0.25
    %v928 = vlaneseq
    %v929 = vshrl.u32 %v928, 7
    %v930 = vsub.s32 0, %v929
    %v931 = vrot.slane %v256, %v930
    %v933 = vadd.f32 %v926, %v931
    %v934 = vsel %vm448, %v933, -inf
    %935 = vmax.xlane.f32.xlu0 %v934
    %v936 = vpop.xlane.xlu0 %935
    %v937 = vsub.f32 %v933, %v936
    %v938 = vmul.f32 %v937, 1.442695
    %v939 = vpow.pop %v938
    %v940 = vsel %vm448, %v939, 0.0
    %941 = vadd.xlane.f32.xlu0 %v940
    %v942 = vpop.xlane.xlu0 %941
    %v943 = vrcp.pop %v942
    %v944 = vmul.f32 %v939, %v943
    %945 = vrot.lane.b32.xlu0 %v359, 64
    %v946 = vpop.permute.xlu0 %945
    %v949 = vsel %vm448, %v944, 0
    %951 = vmatprep.subr.mxu0 0.0
    %952 = vmatpush1.msra.mxu0 0.0
    %953 = vmatprep.subr.mxu0 0.0
    %954 = vmatpush1.msra.mxu0 0.0
    %955 = vmatprep.subr.mxu0 0.0
    %956 = vmatpush1.msra.mxu0 0.0
    %957 = vmatprep.subr.mxu0 0.0
    %958 = vmatpush1.msra.mxu0 0.0
    %959 = vmatprep.subr.mxu0 0.0
    %960 = vmatpush1.msra.mxu0 0.0
    %961 = vmatprep.subr.mxu0 0.0
    %962 = vmatpush1.msra.mxu0 0.0
    %963 = vmatprep.subr.mxu0 0.0
    %964 = vmatpush1.msra.mxu0 0.0
    %965 = vmatprep.subr.mxu0 0.0
    %966 = vmatpush1.msra.mxu0 0.0
    %967 = vmatprep.subr.mxu0 0.0
    %968 = vmatpush1.msra.mxu0 0.0
    %969 = vmatprep.subr.mxu0 0.0
    %970 = vmatpush1.msra.mxu0 0.0
    %971 = vmatprep.subr.mxu0 0.0
    %972 = vmatpush1.msra.mxu0 0.0
    %973 = vmatprep.subr.mxu0 0.0
    %974 = vmatpush1.msra.mxu0 0.0
    %975 = vmatprep.subr.mxu0 0.0
    %976 = vmatpush1.msra.mxu0 0.0
    %977 = vmatprep.subr.mxu0 0.0
    %978 = vmatpush1.msra.mxu0 0.0
    %979 = vmatprep.subr.mxu0 0.0
    %980 = vmatpush1.msra.mxu0 0.0
    %981 = vmatprep.subr.mxu0 0.0
    %982 = vmatpush1.msra.mxu0 %v946
    %983 = vmatprep.subr.mxu0 0.0
    %984 = vmatpush2.msra.mxu0 0.0
    %985 = vmatprep.subr.mxu0 0.0
    %986 = vmatpush2.msra.mxu0 0.0
    %987 = vmatprep.subr.mxu0 0.0
    %988 = vmatpush2.msra.mxu0 0.0
    %989 = vmatprep.subr.mxu0 0.0
    %990 = vmatpush2.msra.mxu0 0.0
    %991 = vmatprep.subr.mxu0 0.0
    %992 = vmatpush2.msra.mxu0 0.0
    %993 = vmatprep.subr.mxu0 0.0
    %994 = vmatpush2.msra.mxu0 0.0
    %995 = vmatprep.subr.mxu0 0.0
    %996 = vmatpush2.msra.mxu0 0.0
    %997 = vmatprep.subr.mxu0 0.0
    %998 = vmatpush2.msra.mxu0 0.0
    %999 = vmatprep.subr.mxu0 0.0
    %1000 = vmatpush2.msra.mxu0 0.0
    %1001 = vmatprep.subr.mxu0 0.0
    %1002 = vmatpush2.msra.mxu0 0.0
    %1003 = vmatprep.subr.mxu0 0.0
    %1004 = vmatpush2.msra.mxu0 0.0
    %1005 = vmatprep.subr.mxu0 0.0
    %1006 = vmatpush2.msra.mxu0 0.0
    %1007 = vmatprep.subr.mxu0 0.0
    %1008 = vmatpush2.msra.mxu0 0.0
    %1009 = vmatprep.subr.mxu0 0.0
    %1010 = vmatpush2.msra.mxu0 0.0
    %1011 = vmatprep.subr.mxu0 0.0
    %1012 = vmatpush2.msra.mxu0 0.0
    %1013 = vmatprep.subr.mxu0 0.0
    %1014 = vmatpush2.msra.mxu0 0.0
    %1015 = vmatprep.mubr.f32.mxu0 0.0
    %1016 = vmatmul.mubr.f32.gmra.mxu0 %v949
    %v1017 = vpop.f32.mrf.mxu0
    %v1018 = vadd.f32 0.0, %v1017
    %v1019 = vpop.f32.mrf.mxu0
    %1020 = vdwg.mxu0
    %1021 = vrot.lane.b32.xlu0 %v359, 112
    %v1022 = vpop.permute.xlu0 %1021
    %1023 = vrot.lane.b32.xlu0 %v359, 80
    %v1024 = vpop.permute.xlu0 %1023
    %v1025 = vsel %vm365, %v1022, 0
    %v1027 = vsel %vm365, %v1024, 0
    %1029 = vmatprep.subr.mxu0 0.0
    %1030 = vmatpush1.xpose.msra.mxu0 0.0
    %1031 = vmatprep.subr.mxu0 0.0
    %1032 = vmatpush1.xpose.msra.mxu0 0.0
    %1033 = vmatprep.subr.mxu0 0.0
    %1034 = vmatpush1.xpose.msra.mxu0 0.0
    %1035 = vmatprep.subr.mxu0 0.0
    %1036 = vmatpush1.xpose.msra.mxu0 0.0
    %1037 = vmatprep.subr.mxu0 0.0
    %1038 = vmatpush1.xpose.msra.mxu0 0.0
    %1039 = vmatprep.subr.mxu0 0.0
    %1040 = vmatpush1.xpose.msra.mxu0 0.0
    %1041 = vmatprep.subr.mxu0 0.0
    %1042 = vmatpush1.xpose.msra.mxu0 0.0
    %1043 = vmatprep.subr.mxu0 0.0
    %1044 = vmatpush1.xpose.msra.mxu0 0.0
    %1045 = vmatprep.subr.mxu0 0.0
    %1046 = vmatpush1.xpose.msra.mxu0 0.0
    %1047 = vmatprep.subr.mxu0 0.0
    %1048 = vmatpush1.xpose.msra.mxu0 0.0
    %1049 = vmatprep.subr.mxu0 0.0
    %1050 = vmatpush1.xpose.msra.mxu0 0.0
    %1051 = vmatprep.subr.mxu0 0.0
    %1052 = vmatpush1.xpose.msra.mxu0 0.0
    %1053 = vmatprep.subr.mxu0 0.0
    %1054 = vmatpush1.xpose.msra.mxu0 0.0
    %1055 = vmatprep.subr.mxu0 0.0
    %1056 = vmatpush1.xpose.msra.mxu0 0.0
    %1057 = vmatprep.subr.mxu0 0.0
    %1058 = vmatpush1.xpose.msra.mxu0 0.0
    %1059 = vmatprep.subr.mxu0 0.0
    %1060 = vmatpush1.xpose.msra.mxu0 %v1027
    %1061 = vmatprep.subr.mxu0 0.0
    %1062 = vmatpush2.xpose.msra.mxu0 0.0
    %1063 = vmatprep.subr.mxu0 0.0
    %1064 = vmatpush2.xpose.msra.mxu0 0.0
    %1065 = vmatprep.subr.mxu0 0.0
    %1066 = vmatpush2.xpose.msra.mxu0 0.0
    %1067 = vmatprep.subr.mxu0 0.0
    %1068 = vmatpush2.xpose.msra.mxu0 0.0
    %1069 = vmatprep.subr.mxu0 0.0
    %1070 = vmatpush2.xpose.msra.mxu0 0.0
    %1071 = vmatprep.subr.mxu0 0.0
    %1072 = vmatpush2.xpose.msra.mxu0 0.0
    %1073 = vmatprep.subr.mxu0 0.0
    %1074 = vmatpush2.xpose.msra.mxu0 0.0
    %1075 = vmatprep.subr.mxu0 0.0
    %1076 = vmatpush2.xpose.msra.mxu0 0.0
    %1077 = vmatprep.subr.mxu0 0.0
    %1078 = vmatpush2.xpose.msra.mxu0 0.0
    %1079 = vmatprep.subr.mxu0 0.0
    %1080 = vmatpush2.xpose.msra.mxu0 0.0
    %1081 = vmatprep.subr.mxu0 0.0
    %1082 = vmatpush2.xpose.msra.mxu0 0.0
    %1083 = vmatprep.subr.mxu0 0.0
    %1084 = vmatpush2.xpose.msra.mxu0 0.0
    %1085 = vmatprep.subr.mxu0 0.0
    %1086 = vmatpush2.xpose.msra.mxu0 0.0
    %1087 = vmatprep.subr.mxu0 0.0
    %1088 = vmatpush2.xpose.msra.mxu0 0.0
    %1089 = vmatprep.subr.mxu0 0.0
    %1090 = vmatpush2.xpose.msra.mxu0 0.0
    %1091 = vmatprep.subr.mxu0 0.0
    %1092 = vmatpush2.xpose.msra.mxu0 0.0
    %1093 = vmatprep.mubr.f32.mxu0 0.0
    %1094 = vmatmul.mubr.f32.gmra.mxu0 %v1025
    %v1095 = vpop.f32.mrf.mxu0
    %v1096 = vadd.f32 0.0, %v1095
    %v1097 = vpop.f32.mrf.mxu0
    %1098 = vdwg.mxu0
    %v1099 = vmul.f32 %v1096, 0.25
    %v1100 = vadd.f32 %v1099, %v931
    %v1101 = vsel %vm448, %v1100, -inf
    %1102 = vmax.xlane.f32.xlu0 %v1101
    %v1103 = vpop.xlane.xlu0 %1102
    %v1104 = vsub.f32 %v1100, %v1103
    %v1105 = vmul.f32 %v1104, 1.442695
    %v1106 = vpow.pop %v1105
    %v1107 = vsel %vm448, %v1106, 0.0
    %1108 = vadd.xlane.f32.xlu0 %v1107
    %v1109 = vpop.xlane.xlu0 %1108
    %v1110 = vrcp.pop %v1109
    %v1111 = vmul.f32 %v1106, %v1110
    %1112 = vrot.lane.b32.xlu0 %v359, 48
    %v1113 = vpop.permute.xlu0 %1112
    %v1116 = vsel %vm448, %v1111, 0
    %1118 = vmatprep.subr.mxu0 0.0
    %1119 = vmatpush1.msra.mxu0 0.0
    %1120 = vmatprep.subr.mxu0 0.0
    %1121 = vmatpush1.msra.mxu0 0.0
    %1122 = vmatprep.subr.mxu0 0.0
    %1123 = vmatpush1.msra.mxu0 0.0
    %1124 = vmatprep.subr.mxu0 0.0
    %1125 = vmatpush1.msra.mxu0 0.0
    %1126 = vmatprep.subr.mxu0 0.0
    %1127 = vmatpush1.msra.mxu0 0.0
    %1128 = vmatprep.subr.mxu0 0.0
    %1129 = vmatpush1.msra.mxu0 0.0
    %1130 = vmatprep.subr.mxu0 0.0
    %1131 = vmatpush1.msra.mxu0 0.0
    %1132 = vmatprep.subr.mxu0 0.0
    %1133 = vmatpush1.msra.mxu0 0.0
    %1134 = vmatprep.subr.mxu0 0.0
    %1135 = vmatpush1.msra.mxu0 0.0
    %1136 = vmatprep.subr.mxu0 0.0
    %1137 = vmatpush1.msra.mxu0 0.0
    %1138 = vmatprep.subr.mxu0 0.0
    %1139 = vmatpush1.msra.mxu0 0.0
    %1140 = vmatprep.subr.mxu0 0.0
    %1141 = vmatpush1.msra.mxu0 0.0
    %1142 = vmatprep.subr.mxu0 0.0
    %1143 = vmatpush1.msra.mxu0 0.0
    %1144 = vmatprep.subr.mxu0 0.0
    %1145 = vmatpush1.msra.mxu0 0.0
    %1146 = vmatprep.subr.mxu0 0.0
    %1147 = vmatpush1.msra.mxu0 0.0
    %1148 = vmatprep.subr.mxu0 0.0
    %1149 = vmatpush1.msra.mxu0 %v1113
    %1150 = vmatprep.subr.mxu0 0.0
    %1151 = vmatpush2.msra.mxu0 0.0
    %1152 = vmatprep.subr.mxu0 0.0
    %1153 = vmatpush2.msra.mxu0 0.0
    %1154 = vmatprep.subr.mxu0 0.0
    %1155 = vmatpush2.msra.mxu0 0.0
    %1156 = vmatprep.subr.mxu0 0.0
    %1157 = vmatpush2.msra.mxu0 0.0
    %1158 = vmatprep.subr.mxu0 0.0
    %1159 = vmatpush2.msra.mxu0 0.0
    %1160 = vmatprep.subr.mxu0 0.0
    %1161 = vmatpush2.msra.mxu0 0.0
    %1162 = vmatprep.subr.mxu0 0.0
    %1163 = vmatpush2.msra.mxu0 0.0
    %1164 = vmatprep.subr.mxu0 0.0
    %1165 = vmatpush2.msra.mxu0 0.0
    %1166 = vmatprep.subr.mxu0 0.0
    %1167 = vmatpush2.msra.mxu0 0.0
    %1168 = vmatprep.subr.mxu0 0.0
    %1169 = vmatpush2.msra.mxu0 0.0
    %1170 = vmatprep.subr.mxu0 0.0
    %1171 = vmatpush2.msra.mxu0 0.0
    %1172 = vmatprep.subr.mxu0 0.0
    %1173 = vmatpush2.msra.mxu0 0.0
    %1174 = vmatprep.subr.mxu0 0.0
    %1175 = vmatpush2.msra.mxu0 0.0
    %1176 = vmatprep.subr.mxu0 0.0
    %1177 = vmatpush2.msra.mxu0 0.0
    %1178 = vmatprep.subr.mxu0 0.0
    %1179 = vmatpush2.msra.mxu0 0.0
    %1180 = vmatprep.subr.mxu0 0.0
    %1181 = vmatpush2.msra.mxu0 0.0
    %1182 = vmatprep.mubr.f32.mxu0 0.0
    %1183 = vmatmul.mubr.f32.gmra.mxu0 %v1116
    %v1184 = vpop.f32.mrf.mxu0
    %v1185 = vadd.f32 0.0, %v1184
    %v1186 = vpop.f32.mrf.mxu0
    %1187 = vdwg.mxu0
    %v1189 = vsel %vm365, %v1185, 0
    %1191 = vmatprep.subr.mxu0 0.0
    %1192 = vmatpush1.msra.mxu0 0.0
    %1193 = vmatprep.subr.mxu0 0.0
    %1194 = vmatpush1.msra.mxu0 0.0
    %1195 = vmatprep.subr.mxu0 0.0
    %1196 = vmatpush1.msra.mxu0 0.0
    %1197 = vmatprep.subr.mxu0 0.0
    %1198 = vmatpush1.msra.mxu0 0.0
    %1199 = vmatprep.subr.mxu0 0.0
    %1200 = vmatpush1.msra.mxu0 0.0
    %1201 = vmatprep.subr.mxu0 0.0
    %1202 = vmatpush1.msra.mxu0 0.0
    %1203 = vmatprep.subr.mxu0 0.0
    %1204 = vmatpush1.msra.mxu0 0.0
    %1205 = vmatprep.subr.mxu0 0.0
    %1206 = vmatpush1.msra.mxu0 0.0
    %1207 = vmatprep.subr.mxu0 0.0
    %1208 = vmatpush1.msra.mxu0 0.0
    %1209 = vmatprep.subr.mxu0 0.0
    %1210 = vmatpush1.msra.mxu0 0.0
    %1211 = vmatprep.subr.mxu0 0.0
    %1212 = vmatpush1.msra.mxu0 0.0
    %1213 = vmatprep.subr.mxu0 0.0
    %1214 = vmatpush1.msra.mxu0 0.0
    %1215 = vmatprep.subr.mxu0 0.0
    %1216 = vmatpush1.msra.mxu0 0.0
    %1217 = vmatprep.subr.mxu0 0.0
    %1218 = vmatpush1.msra.mxu0 0.0
    %1219 = vmatprep.subr.mxu0 0.0
    %1220 = vmatpush1.msra.mxu0 %v261
    %1221 = vmatprep.subr.mxu0 0.0
    %1222 = vmatpush1.msra.mxu0 %v260
    %1223 = vmatprep.subr.mxu0 0.0
    %1224 = vmatpush2.msra.mxu0 0.0
    %1225 = vmatprep.subr.mxu0 0.0
    %1226 = vmatpush2.msra.mxu0 0.0
    %1227 = vmatprep.subr.mxu0 0.0
    %1228 = vmatpush2.msra.mxu0 0.0
    %1229 = vmatprep.subr.mxu0 0.0
    %1230 = vmatpush2.msra.mxu0 0.0
    %1231 = vmatprep.subr.mxu0 0.0
    %1232 = vmatpush2.msra.mxu0 0.0
    %1233 = vmatprep.subr.mxu0 0.0
    %1234 = vmatpush2.msra.mxu0 0.0
    %1235 = vmatprep.subr.mxu0 0.0
    %1236 = vmatpush2.msra.mxu0 0.0
    %1237 = vmatprep.subr.mxu0 0.0
    %1238 = vmatpush2.msra.mxu0 0.0
    %1239 = vmatprep.subr.mxu0 0.0
    %1240 = vmatpush2.msra.mxu0 0.0
    %1241 = vmatprep.subr.mxu0 0.0
    %1242 = vmatpush2.msra.mxu0 0.0
    %1243 = vmatprep.subr.mxu0 0.0
    %1244 = vmatpush2.msra.mxu0 0.0
    %1245 = vmatprep.subr.mxu0 0.0
    %1246 = vmatpush2.msra.mxu0 0.0
    %1247 = vmatprep.subr.mxu0 0.0
    %1248 = vmatpush2.msra.mxu0 0.0
    %1249 = vmatprep.subr.mxu0 0.0
    %1250 = vmatpush2.msra.mxu0 0.0
    %1251 = vmatprep.subr.mxu0 0.0
    %1252 = vmatpush2.msra.mxu0 0.0
    %1253 = vmatprep.subr.mxu0 0.0
    %1254 = vmatpush2.msra.mxu0 0.0
    %1255 = vmatprep.mubr.f32.mxu0 0.0
    %1256 = vmatmul.mubr.f32.gmra.mxu0 %v1189
    %v1257 = vpop.f32.mrf.mxu0
    %v1258 = vadd.f32 0.0, %v1257
    %v1259 = vpop.f32.mrf.mxu0
    %1260 = vdwg.mxu0
    %v1262 = vsel %vm365, %v1018, 0
    %1264 = vmatprep.subr.mxu0 0.0
    %1265 = vmatpush1.msra.mxu0 0.0
    %1266 = vmatprep.subr.mxu0 0.0
    %1267 = vmatpush1.msra.mxu0 0.0
    %1268 = vmatprep.subr.mxu0 0.0
    %1269 = vmatpush1.msra.mxu0 0.0
    %1270 = vmatprep.subr.mxu0 0.0
    %1271 = vmatpush1.msra.mxu0 0.0
    %1272 = vmatprep.subr.mxu0 0.0
    %1273 = vmatpush1.msra.mxu0 0.0
    %1274 = vmatprep.subr.mxu0 0.0
    %1275 = vmatpush1.msra.mxu0 0.0
    %1276 = vmatprep.subr.mxu0 0.0
    %1277 = vmatpush1.msra.mxu0 0.0
    %1278 = vmatprep.subr.mxu0 0.0
    %1279 = vmatpush1.msra.mxu0 0.0
    %1280 = vmatprep.subr.mxu0 0.0
    %1281 = vmatpush1.msra.mxu0 0.0
    %1282 = vmatprep.subr.mxu0 0.0
    %1283 = vmatpush1.msra.mxu0 0.0
    %1284 = vmatprep.subr.mxu0 0.0
    %1285 = vmatpush1.msra.mxu0 0.0
    %1286 = vmatprep.subr.mxu0 0.0
    %1287 = vmatpush1.msra.mxu0 0.0
    %1288 = vmatprep.subr.mxu0 0.0
    %1289 = vmatpush1.msra.mxu0 0.0
    %1290 = vmatprep.subr.mxu0 0.0
    %1291 = vmatpush1.msra.mxu0 0.0
    %1292 = vmatprep.subr.mxu0 0.0
    %1293 = vmatpush1.msra.mxu0 %v259
    %1294 = vmatprep.subr.mxu0 0.0
    %1295 = vmatpush1.msra.mxu0 %v258
    %1296 = vmatprep.subr.mxu0 0.0
    %1297 = vmatpush2.msra.mxu0 0.0
    %1298 = vmatprep.subr.mxu0 0.0
    %1299 = vmatpush2.msra.mxu0 0.0
    %1300 = vmatprep.subr.mxu0 0.0
    %1301 = vmatpush2.msra.mxu0 0.0
    %1302 = vmatprep.subr.mxu0 0.0
    %1303 = vmatpush2.msra.mxu0 0.0
    %1304 = vmatprep.subr.mxu0 0.0
    %1305 = vmatpush2.msra.mxu0 0.0
    %1306 = vmatprep.subr.mxu0 0.0
    %1307 = vmatpush2.msra.mxu0 0.0
    %1308 = vmatprep.subr.mxu0 0.0
    %1309 = vmatpush2.msra.mxu0 0.0
    %1310 = vmatprep.subr.mxu0 0.0
    %1311 = vmatpush2.msra.mxu0 0.0
    %1312 = vmatprep.subr.mxu0 0.0
    %1313 = vmatpush2.msra.mxu0 0.0
    %1314 = vmatprep.subr.mxu0 0.0
    %1315 = vmatpush2.msra.mxu0 0.0
    %1316 = vmatprep.subr.mxu0 0.0
    %1317 = vmatpush2.msra.mxu0 0.0
    %1318 = vmatprep.subr.mxu0 0.0
    %1319 = vmatpush2.msra.mxu0 0.0
    %1320 = vmatprep.subr.mxu0 0.0
    %1321 = vmatpush2.msra.mxu0 0.0
    %1322 = vmatprep.subr.mxu0 0.0
    %1323 = vmatpush2.msra.mxu0 0.0
    %1324 = vmatprep.subr.mxu0 0.0
    %1325 = vmatpush2.msra.mxu0 0.0
    %1326 = vmatprep.subr.mxu0 0.0
    %1327 = vmatpush2.msra.mxu0 0.0
    %1328 = vmatprep.mubr.f32.mxu0 0.0
    %1329 = vmatmul.mubr.f32.gmra.mxu0 %v1262
    %v1330 = vpop.f32.mrf.mxu0
    %v1331 = vadd.f32 %v1258, %v1330
    %v1332 = vpop.f32.mrf.mxu0
    %1333 = vdwg.mxu0
    %v1334 = vlaneseq
    %v1335 = vshrl.u32 %v1334, 7
    %v1336 = vsub.s32 0, %v1335
    %v1337 = vrot.slane %v257, %v1336
    %v1338 = vadd.f32 %v846, %v1337
    %v1339 = vadd.f32 %v1331, %v1337
    %v1340 = vadd.f32 %v1338, %v247
    %v1341 = vadd.f32 %v1339, %v248
    %v1342 = vsel %vm203, %v1340, 0.0
    %1343 = vadd.xlane.f32.xlu0 %v1342
    %v1344 = vpop.xlane.xlu0 %1343
    %v1345 = vsel %vm203, %v1341, 0.0
    %1346 = vadd.xlane.f32.xlu0 %v1345
    %v1347 = vpop.xlane.xlu0 %1346
    %v1348 = vmul.f32 %v1344, %v210
    %v1349 = vmul.f32 %v1347, %v210
    %v1350 = vmul.f32 %v1340, %v1340
    %v1351 = vmul.f32 %v1341, %v1341
    %v1352 = vsel %vm203, %v1350, 0.0
    %1353 = vadd.xlane.f32.xlu0 %v1352
    %v1354 = vpop.xlane.xlu0 %1353
    %v1355 = vsel %vm203, %v1351, 0.0
    %1356 = vadd.xlane.f32.xlu0 %v1355
    %v1357 = vpop.xlane.xlu0 %1356
    %v1358 = vmul.f32 %v1354, %v210
    %v1359 = vmul.f32 %v1357, %v210
    %v1360 = vmul.f32 %v1348, %v1348
    %v1361 = vmul.f32 %v1349, %v1349
    %v1362 = vsub.f32 %v1358, %v1360
    %v1363 = vsub.f32 %v1359, %v1361
    %v1364 = vmax.f32 %v1362, 0.0
    %v1365 = vmax.f32 %v1363, 0.0
    %v1366 = vsub.f32 %v1340, %v1348
    %v1367 = vsub.f32 %v1341, %v1349
    %v1368 = vadd.f32 %v1364, 1e-12
    %v1369 = vadd.f32 %v1365, 1e-12
    %v1370 = vrsqrt.pop %v1368
    %v1371 = vrsqrt.pop %v1369
    %v1372 = vmul.f32 %v1366, %v1370
    %v1373 = vmul.f32 %v1367, %v1371
    %v1374 = vlaneseq
    %v1375 = vshrl.u32 %v1374, 7
    %v1376 = vsub.s32 1, %v1375
    %v1377 = vrot.slane %v257, %v1376
    %v1378 = vmul.f32 %v1372, %v1377
    %v1379 = vmul.f32 %v1373, %v1377
    %v1380 = vlaneseq
    %v1381 = vshrl.u32 %v1380, 7
    %v1382 = vsub.s32 2, %v1381
    %v1383 = vrot.slane %v257, %v1382
    %v1384 = vadd.f32 %v1378, %v1383
    %v1385 = vadd.f32 %v1379, %v1383
    %v1386 = vld [vmem:[%s8] sm:$0xff]
    %v1387 = vld [vmem:[%s8 + $0x8] sm:$0xff]
    %v1388 = vld [vmem:[%s8 + $0x10] sm:$0xff]
    %v1389 = vld [vmem:[%s8 + $0x18] sm:$0xff]
    %v1390 = vld [vmem:[%s9] sm:$0x1]
    %v1392 = vlaneseq
    %v1393 = vshrl.u32 %v1392, 7
    %v1394 = vsub.s32 0, %v1393
    %v1395 = vrot.slane %v1390, %v1394
    %v1398 = vsel %vm203, %v1384, 0
    %v1401 = vsel %vm203, %v1385, 0
    %1403 = vmatprep.subr.mxu0 0.0
    %1404 = vmatpush1.msra.mxu0 0.0
    %1405 = vmatprep.subr.mxu0 0.0
    %1406 = vmatpush1.msra.mxu0 0.0
    %1407 = vmatprep.subr.mxu0 0.0
    %1408 = vmatpush1.msra.mxu0 0.0
    %1409 = vmatprep.subr.mxu0 0.0
    %1410 = vmatpush1.msra.mxu0 0.0
    %1411 = vmatprep.subr.mxu0 0.0
    %1412 = vmatpush1.msra.mxu0 0.0
    %1413 = vmatprep.subr.mxu0 0.0
    %1414 = vmatpush1.msra.mxu0 0.0
    %1415 = vmatprep.subr.mxu0 0.0
    %1416 = vmatpush1.msra.mxu0 0.0
    %1417 = vmatprep.subr.mxu0 0.0
    %1418 = vmatpush1.msra.mxu0 0.0
    %1419 = vmatprep.subr.mxu0 0.0
    %1420 = vmatpush1.msra.mxu0 0.0
    %1421 = vmatprep.subr.mxu0 0.0
    %1422 = vmatpush1.msra.mxu0 0.0
    %1423 = vmatprep.subr.mxu0 0.0
    %1424 = vmatpush1.msra.mxu0 0.0
    %1425 = vmatprep.subr.mxu0 0.0
    %1426 = vmatpush1.msra.mxu0 0.0
    %1427 = vmatprep.subr.mxu0 0.0
    %1428 = vmatpush1.msra.mxu0 %v1389
    %1429 = vmatprep.subr.mxu0 0.0
    %1430 = vmatpush1.msra.mxu0 %v1388
    %1431 = vmatprep.subr.mxu0 0.0
    %1432 = vmatpush1.msra.mxu0 %v1387
    %1433 = vmatprep.subr.mxu0 0.0
    %1434 = vmatpush1.msra.mxu0 %v1386
    %1435 = vmatprep.subr.mxu0 0.0
    %1436 = vmatpush2.msra.mxu0 0.0
    %1437 = vmatprep.subr.mxu0 0.0
    %1438 = vmatpush2.msra.mxu0 0.0
    %1439 = vmatprep.subr.mxu0 0.0
    %1440 = vmatpush2.msra.mxu0 0.0
    %1441 = vmatprep.subr.mxu0 0.0
    %1442 = vmatpush2.msra.mxu0 0.0
    %1443 = vmatprep.subr.mxu0 0.0
    %1444 = vmatpush2.msra.mxu0 0.0
    %1445 = vmatprep.subr.mxu0 0.0
    %1446 = vmatpush2.msra.mxu0 0.0
    %1447 = vmatprep.subr.mxu0 0.0
    %1448 = vmatpush2.msra.mxu0 0.0
    %1449 = vmatprep.subr.mxu0 0.0
    %1450 = vmatpush2.msra.mxu0 0.0
    %1451 = vmatprep.subr.mxu0 0.0
    %1452 = vmatpush2.msra.mxu0 0.0
    %1453 = vmatprep.subr.mxu0 0.0
    %1454 = vmatpush2.msra.mxu0 0.0
    %1455 = vmatprep.subr.mxu0 0.0
    %1456 = vmatpush2.msra.mxu0 0.0
    %1457 = vmatprep.subr.mxu0 0.0
    %1458 = vmatpush2.msra.mxu0 0.0
    %1459 = vmatprep.subr.mxu0 0.0
    %1460 = vmatpush2.msra.mxu0 0.0
    %1461 = vmatprep.subr.mxu0 0.0
    %1462 = vmatpush2.msra.mxu0 0.0
    %1463 = vmatprep.subr.mxu0 0.0
    %1464 = vmatpush2.msra.mxu0 0.0
    %1465 = vmatprep.subr.mxu0 0.0
    %1466 = vmatpush2.msra.mxu0 0.0
    %1467 = vmatprep.mubr.f32.mxu0 0.0
    %1468 = vmatmul.mubr.f32.gmra.mxu0 %v1398
    %v1469 = vpop.f32.mrf.mxu0
    %v1470 = vadd.f32 %v1395, %v1469
    %v1471 = vpop.f32.mrf.mxu0
    %1472 = vmatprep.mubr.f32.mxu0 0.0
    %1473 = vmatmul.mubr.f32.gmra.mxu0 %v1401
    %v1474 = vpop.f32.mrf.mxu0
    %v1475 = vadd.f32 %v1395, %v1474
    %v1476 = vpop.f32.mrf.mxu0
    %1477 = vdwg.mxu0
    %v1478 = vmul.f32 %v1470, 0.5
    %v1479 = vmul.f32 %v1475, 0.5
    %v1480 = vmul.f32 %v1470, 0.044715
    %v1481 = vmul.f32 %v1475, 0.044715
    %v1482 = vmul.f32 %v1480, %v1470
    %v1483 = vmul.f32 %v1481, %v1475
    %v1484 = vmul.f32 %v1482, %v1470
    %v1485 = vmul.f32 %v1483, %v1475
    %v1486 = vadd.f32 %v1470, %v1484
    %v1487 = vadd.f32 %v1475, %v1485
    %v1488 = vmul.f32 %v1486, 0.7978846
    %v1489 = vmul.f32 %v1487, 0.7978846
    %v1490 = vtanh.pop %v1488
    %v1491 = vtanh.pop %v1489
    %v1492 = vadd.f32 %v1490, 1.0
    %v1493 = vadd.f32 %v1491, 1.0
    %v1494 = vmul.f32 %v1478, %v1492
    %v1495 = vmul.f32 %v1479, %v1493
    %v1496 = vlaneseq
    %v1497 = vshrl.u32 %v1496, 7
    %v1498 = vsub.s32 3, %v1497
    %v1499 = vrot.slane %v257, %v1498
    %vm1500 = vcmask 523264
    %v1502 = vsel %vm1500, %v1494, 0
    %v1505 = vsel %vm1500, %v1495, 0
    %1507 = vmatprep.subr.mxu0 0.0
    %1508 = vmatpush1.msra.mxu0 0.0
    %1509 = vmatprep.subr.mxu0 0.0
    %1510 = vmatpush1.msra.mxu0 0.0
    %1511 = vmatprep.subr.mxu0 0.0
    %1512 = vmatpush1.msra.mxu0 0.0
    %1513 = vmatprep.subr.mxu0 0.0
    %1514 = vmatpush1.msra.mxu0 0.0
    %1515 = vmatprep.subr.mxu0 0.0
    %1516 = vmatpush1.msra.mxu0 0.0
    %1517 = vmatprep.subr.mxu0 0.0
    %1518 = vmatpush1.msra.mxu0 0.0
    %1519 = vmatprep.subr.mxu0 0.0
    %1520 = vmatpush1.msra.mxu0 0.0
    %1521 = vmatprep.subr.mxu0 0.0
    %1522 = vmatpush1.msra.mxu0 0.0
    %1523 = vmatprep.subr.mxu0 0.0
    %1524 = vmatpush1.msra.mxu0 %v269
    %1525 = vmatprep.subr.mxu0 0.0
    %1526 = vmatpush1.msra.mxu0 %v268
    %1527 = vmatprep.subr.mxu0 0.0
    %1528 = vmatpush1.msra.mxu0 %v267
    %1529 = vmatprep.subr.mxu0 0.0
    %1530 = vmatpush1.msra.mxu0 %v266
    %1531 = vmatprep.subr.mxu0 0.0
    %1532 = vmatpush1.msra.mxu0 %v265
    %1533 = vmatprep.subr.mxu0 0.0
    %1534 = vmatpush1.msra.mxu0 %v264
    %1535 = vmatprep.subr.mxu0 0.0
    %1536 = vmatpush1.msra.mxu0 %v263
    %1537 = vmatprep.subr.mxu0 0.0
    %1538 = vmatpush1.msra.mxu0 %v262
    %1539 = vmatprep.subr.mxu0 0.0
    %1540 = vmatpush2.msra.mxu0 0.0
    %1541 = vmatprep.subr.mxu0 0.0
    %1542 = vmatpush2.msra.mxu0 0.0
    %1543 = vmatprep.subr.mxu0 0.0
    %1544 = vmatpush2.msra.mxu0 0.0
    %1545 = vmatprep.subr.mxu0 0.0
    %1546 = vmatpush2.msra.mxu0 0.0
    %1547 = vmatprep.subr.mxu0 0.0
    %1548 = vmatpush2.msra.mxu0 0.0
    %1549 = vmatprep.subr.mxu0 0.0
    %1550 = vmatpush2.msra.mxu0 0.0
    %1551 = vmatprep.subr.mxu0 0.0
    %1552 = vmatpush2.msra.mxu0 0.0
    %1553 = vmatprep.subr.mxu0 0.0
    %1554 = vmatpush2.msra.mxu0 0.0
    %1555 = vmatprep.subr.mxu0 0.0
    %1556 = vmatpush2.msra.mxu0 0.0
    %1557 = vmatprep.subr.mxu0 0.0
    %1558 = vmatpush2.msra.mxu0 0.0
    %1559 = vmatprep.subr.mxu0 0.0
    %1560 = vmatpush2.msra.mxu0 0.0
    %1561 = vmatprep.subr.mxu0 0.0
    %1562 = vmatpush2.msra.mxu0 0.0
    %1563 = vmatprep.subr.mxu0 0.0
    %1564 = vmatpush2.msra.mxu0 0.0
    %1565 = vmatprep.subr.mxu0 0.0
    %1566 = vmatpush2.msra.mxu0 0.0
    %1567 = vmatprep.subr.mxu0 0.0
    %1568 = vmatpush2.msra.mxu0 0.0
    %1569 = vmatprep.subr.mxu0 0.0
    %1570 = vmatpush2.msra.mxu0 0.0
    %1571 = vmatprep.mubr.f32.mxu0 0.0
    %1572 = vmatmul.mubr.f32.gmra.mxu0 %v1502
    %v1573 = vpop.f32.mrf.mxu0
    %v1574 = vadd.f32 %v1499, %v1573
    %v1575 = vpop.f32.mrf.mxu0
    %1576 = vmatprep.mubr.f32.mxu0 0.0
    %1577 = vmatmul.mubr.f32.gmra.mxu0 %v1505
    %v1578 = vpop.f32.mrf.mxu0
    %v1579 = vadd.f32 %v1499, %v1578
    %v1580 = vpop.f32.mrf.mxu0
    %1581 = vdwg.mxu0
    %v1582 = vadd.f32 %v1574, %v1384
    %v1583 = vadd.f32 %v1579, %v1385
    %v1584 = vsel %vm203, %v1582, 0.0
    %1585 = vadd.xlane.f32.xlu0 %v1584
    %v1586 = vpop.xlane.xlu0 %1585
    %v1587 = vsel %vm203, %v1583, 0.0
    %1588 = vadd.xlane.f32.xlu0 %v1587
    %v1589 = vpop.xlane.xlu0 %1588
    %v1590 = vmul.f32 %v1586, %v210
    %v1591 = vmul.f32 %v1589, %v210
    %v1592 = vmul.f32 %v1582, %v1582
    %v1593 = vmul.f32 %v1583, %v1583
    %v1594 = vsel %vm203, %v1592, 0.0
    %1595 = vadd.xlane.f32.xlu0 %v1594
    %v1596 = vpop.xlane.xlu0 %1595
    %v1597 = vsel %vm203, %v1593, 0.0
    %1598 = vadd.xlane.f32.xlu0 %v1597
    %v1599 = vpop.xlane.xlu0 %1598
    %v1600 = vmul.f32 %v1596, %v210
    %v1601 = vmul.f32 %v1599, %v210
    %v1602 = vmul.f32 %v1590, %v1590
    %v1603 = vmul.f32 %v1591, %v1591
    %v1604 = vsub.f32 %v1600, %v1602
    %v1605 = vsub.f32 %v1601, %v1603
    %v1606 = vmax.f32 %v1604, 0.0
    %v1607 = vmax.f32 %v1605, 0.0
    %v1608 = vsub.f32 %v1582, %v1590
    %v1609 = vsub.f32 %v1583, %v1591
    %v1610 = vadd.f32 %v1606, 1e-12
    %v1611 = vadd.f32 %v1607, 1e-12
    %v1612 = vrsqrt.pop %v1610
    %v1613 = vrsqrt.pop %v1611
    %v1614 = vmul.f32 %v1608, %v1612
    %v1615 = vmul.f32 %v1609, %v1613
    %v1616 = vlaneseq
    %v1617 = vshrl.u32 %v1616, 7
    %v1618 = vsub.s32 4, %v1617
    %v1619 = vrot.slane %v257, %v1618
    %v1620 = vmul.f32 %v1614, %v1619
    %v1621 = vmul.f32 %v1615, %v1619
    %v1622 = vlaneseq
    %v1623 = vshrl.u32 %v1622, 7
    %v1624 = vsub.s32 5, %v1623
    %v1625 = vrot.slane %v257, %v1624
    %v1626 = vadd.f32 %v1620, %v1625
    %v1627 = vadd.f32 %v1621, %v1625
    %s1628 = scalar_lea.vmem %s10, 8
    %v1629 = vld [vmem:[%s1628] sm:$0x3f]
    %s1630 = scalar_lea.vmem %s7, 96
    %v1631 = vld [vmem:[%s1630] sm:$0xff]
    %v1632 = vld [vmem:[%s1630 + $0x8] sm:$0xff]
    %v1633 = vld [vmem:[%s1630 + $0x10] sm:$0xff]
    %v1634 = vld [vmem:[%s1630 + $0x18] sm:$0xff]
    %v1635 = vld [vmem:[%s1630 + $0x20] sm:$0xff]
    %v1636 = vld [vmem:[%s1630 + $0x28] sm:$0xff]
    %v1637 = vld [vmem:[%s1630 + $0x30] sm:$0xff]
    %v1638 = vld [vmem:[%s1630 + $0x38] sm:$0xff]
    %v1639 = vld [vmem:[%s1630 + $0x40] sm:$0xff]
    %v1640 = vld [vmem:[%s1630 + $0x48] sm:$0xff]
    %v1641 = vld [vmem:[%s1630 + $0x50] sm:$0xff]
    %v1642 = vld [vmem:[%s1630 + $0x58] sm:$0xff]
    %s1643 = scalar_lea.vmem %s5, 32
    %v1644 = vld [vmem:[%s1643] sm:$0xff]
    %v1645 = vld [vmem:[%s1643 + $0x8] sm:$0xff]
    %v1646 = vld [vmem:[%s1643 + $0x10] sm:$0xff]
    %v1647 = vld [vmem:[%s1643 + $0x18] sm:$0xff]
    %s1648 = scalar_lea.vmem %s6, 1
    %v1649 = vld [vmem:[%s1648] sm:$0x1]
    %v1651 = vlaneseq
    %v1652 = vshrl.u32 %v1651, 7
    %v1653 = vsub.s32 0, %v1652
    %v1654 = vrot.slane %v1649, %v1653
    %v1657 = vsel %vm203, %v1626, 0
    %v1660 = vsel %vm203, %v1627, 0
    %1662 = vmatprep.subr.mxu0 0.0
    %1663 = vmatpush1.msra.mxu0 0.0
    %1664 = vmatprep.subr.mxu0 0.0
    %1665 = vmatpush1.msra.mxu0 0.0
    %1666 = vmatprep.subr.mxu0 0.0
    %1667 = vmatpush1.msra.mxu0 0.0
    %1668 = vmatprep.subr.mxu0 0.0
    %1669 = vmatpush1.msra.mxu0 0.0
    %1670 = vmatprep.subr.mxu0 0.0
    %1671 = vmatpush1.msra.mxu0 0.0
    %1672 = vmatprep.subr.mxu0 0.0
    %1673 = vmatpush1.msra.mxu0 0.0
    %1674 = vmatprep.subr.mxu0 0.0
    %1675 = vmatpush1.msra.mxu0 0.0
    %1676 = vmatprep.subr.mxu0 0.0
    %1677 = vmatpush1.msra.mxu0 0.0
    %1678 = vmatprep.subr.mxu0 0.0
    %1679 = vmatpush1.msra.mxu0 0.0
    %1680 = vmatprep.subr.mxu0 0.0
    %1681 = vmatpush1.msra.mxu0 0.0
    %1682 = vmatprep.subr.mxu0 0.0
    %1683 = vmatpush1.msra.mxu0 0.0
    %1684 = vmatprep.subr.mxu0 0.0
    %1685 = vmatpush1.msra.mxu0 0.0
    %1686 = vmatprep.subr.mxu0 0.0
    %1687 = vmatpush1.msra.mxu0 %v1647
    %1688 = vmatprep.subr.mxu0 0.0
    %1689 = vmatpush1.msra.mxu0 %v1646
    %1690 = vmatprep.subr.mxu0 0.0
    %1691 = vmatpush1.msra.mxu0 %v1645
    %1692 = vmatprep.subr.mxu0 0.0
    %1693 = vmatpush1.msra.mxu0 %v1644
    %1694 = vmatprep.subr.mxu0 0.0
    %1695 = vmatpush2.msra.mxu0 0.0
    %1696 = vmatprep.subr.mxu0 0.0
    %1697 = vmatpush2.msra.mxu0 0.0
    %1698 = vmatprep.subr.mxu0 0.0
    %1699 = vmatpush2.msra.mxu0 0.0
    %1700 = vmatprep.subr.mxu0 0.0
    %1701 = vmatpush2.msra.mxu0 0.0
    %1702 = vmatprep.subr.mxu0 0.0
    %1703 = vmatpush2.msra.mxu0 0.0
    %1704 = vmatprep.subr.mxu0 0.0
    %1705 = vmatpush2.msra.mxu0 0.0
    %1706 = vmatprep.subr.mxu0 0.0
    %1707 = vmatpush2.msra.mxu0 0.0
    %1708 = vmatprep.subr.mxu0 0.0
    %1709 = vmatpush2.msra.mxu0 0.0
    %1710 = vmatprep.subr.mxu0 0.0
    %1711 = vmatpush2.msra.mxu0 0.0
    %1712 = vmatprep.subr.mxu0 0.0
    %1713 = vmatpush2.msra.mxu0 0.0
    %1714 = vmatprep.subr.mxu0 0.0
    %1715 = vmatpush2.msra.mxu0 0.0
    %1716 = vmatprep.subr.mxu0 0.0
    %1717 = vmatpush2.msra.mxu0 0.0
    %1718 = vmatprep.subr.mxu0 0.0
    %1719 = vmatpush2.msra.mxu0 0.0
    %1720 = vmatprep.subr.mxu0 0.0
    %1721 = vmatpush2.msra.mxu0 0.0
    %1722 = vmatprep.subr.mxu0 0.0
    %1723 = vmatpush2.msra.mxu0 0.0
    %1724 = vmatprep.subr.mxu0 0.0
    %1725 = vmatpush2.msra.mxu0 0.0
    %1726 = vmatprep.mubr.f32.mxu0 0.0
    %1727 = vmatmul.mubr.f32.gmra.mxu0 %v1657
    %v1728 = vpop.f32.mrf.mxu0
    %v1729 = vadd.f32 %v1654, %v1728
    %v1730 = vpop.f32.mrf.mxu0
    %1731 = vmatprep.mubr.f32.mxu0 0.0
    %1732 = vmatmul.mubr.f32.gmra.mxu0 %v1660
    %v1733 = vpop.f32.mrf.mxu0
    %v1734 = vadd.f32 %v1654, %v1733
    %v1735 = vpop.f32.mrf.mxu0
    %1736 = vdwg.mxu0
    %1738 = vrot.lane.b32.xlu0 %v1729, 96
    %v1739 = vpop.permute.xlu0 %1738
    %v1740 = vsel %vm365, %v1729, 0
    %v1742 = vsel %vm365, %v1739, 0
    %1744 = vmatprep.subr.mxu0 0.0
    %1745 = vmatpush1.xpose.msra.mxu0 0.0
    %1746 = vmatprep.subr.mxu0 0.0
    %1747 = vmatpush1.xpose.msra.mxu0 0.0
    %1748 = vmatprep.subr.mxu0 0.0
    %1749 = vmatpush1.xpose.msra.mxu0 0.0
    %1750 = vmatprep.subr.mxu0 0.0
    %1751 = vmatpush1.xpose.msra.mxu0 0.0
    %1752 = vmatprep.subr.mxu0 0.0
    %1753 = vmatpush1.xpose.msra.mxu0 0.0
    %1754 = vmatprep.subr.mxu0 0.0
    %1755 = vmatpush1.xpose.msra.mxu0 0.0
    %1756 = vmatprep.subr.mxu0 0.0
    %1757 = vmatpush1.xpose.msra.mxu0 0.0
    %1758 = vmatprep.subr.mxu0 0.0
    %1759 = vmatpush1.xpose.msra.mxu0 0.0
    %1760 = vmatprep.subr.mxu0 0.0
    %1761 = vmatpush1.xpose.msra.mxu0 0.0
    %1762 = vmatprep.subr.mxu0 0.0
    %1763 = vmatpush1.xpose.msra.mxu0 0.0
    %1764 = vmatprep.subr.mxu0 0.0
    %1765 = vmatpush1.xpose.msra.mxu0 0.0
    %1766 = vmatprep.subr.mxu0 0.0
    %1767 = vmatpush1.xpose.msra.mxu0 0.0
    %1768 = vmatprep.subr.mxu0 0.0
    %1769 = vmatpush1.xpose.msra.mxu0 0.0
    %1770 = vmatprep.subr.mxu0 0.0
    %1771 = vmatpush1.xpose.msra.mxu0 0.0
    %1772 = vmatprep.subr.mxu0 0.0
    %1773 = vmatpush1.xpose.msra.mxu0 0.0
    %1774 = vmatprep.subr.mxu0 0.0
    %1775 = vmatpush1.xpose.msra.mxu0 %v1742
    %1776 = vmatprep.subr.mxu0 0.0
    %1777 = vmatpush2.xpose.msra.mxu0 0.0
    %1778 = vmatprep.subr.mxu0 0.0
    %1779 = vmatpush2.xpose.msra.mxu0 0.0
    %1780 = vmatprep.subr.mxu0 0.0
    %1781 = vmatpush2.xpose.msra.mxu0 0.0
    %1782 = vmatprep.subr.mxu0 0.0
    %1783 = vmatpush2.xpose.msra.mxu0 0.0
    %1784 = vmatprep.subr.mxu0 0.0
    %1785 = vmatpush2.xpose.msra.mxu0 0.0
    %1786 = vmatprep.subr.mxu0 0.0
    %1787 = vmatpush2.xpose.msra.mxu0 0.0
    %1788 = vmatprep.subr.mxu0 0.0
    %1789 = vmatpush2.xpose.msra.mxu0 0.0
    %1790 = vmatprep.subr.mxu0 0.0
    %1791 = vmatpush2.xpose.msra.mxu0 0.0
    %1792 = vmatprep.subr.mxu0 0.0
    %1793 = vmatpush2.xpose.msra.mxu0 0.0
    %1794 = vmatprep.subr.mxu0 0.0
    %1795 = vmatpush2.xpose.msra.mxu0 0.0
    %1796 = vmatprep.subr.mxu0 0.0
    %1797 = vmatpush2.xpose.msra.mxu0 0.0
    %1798 = vmatprep.subr.mxu0 0.0
    %1799 = vmatpush2.xpose.msra.mxu0 0.0
    %1800 = vmatprep.subr.mxu0 0.0
    %1801 = vmatpush2.xpose.msra.mxu0 0.0
    %1802 = vmatprep.subr.mxu0 0.0
    %1803 = vmatpush2.xpose.msra.mxu0 0.0
    %1804 = vmatprep.subr.mxu0 0.0
    %1805 = vmatpush2.xpose.msra.mxu0 0.0
    %1806 = vmatprep.subr.mxu0 0.0
    %1807 = vmatpush2.xpose.msra.mxu0 0.0
    %1808 = vmatprep.mubr.f32.mxu0 0.0
    %1809 = vmatmul.mubr.f32.gmra.mxu0 %v1740
    %v1810 = vpop.f32.mrf.mxu0
    %v1811 = vadd.f32 0.0, %v1810
    %v1812 = vpop.f32.mrf.mxu0
    %1813 = vdwg.mxu0
    %v1814 = vmul.f32 %v1811, 0.25
    %v1815 = vadd.f32 %v1814, %v255
    %vm1816 = vcmask 57344
    %v1817 = vsel %vm1816, %v1815, -inf
    %1818 = vmax.xlane.f32.xlu0 %v1817
    %v1819 = vpop.xlane.xlu0 %1818
    %v1820 = vsub.f32 %v1815, %v1819
    %v1821 = vmul.f32 %v1820, 1.442695
    %v1822 = vpow.pop %v1821
    %v1823 = vsel %vm1816, %v1822, 0.0
    %1824 = vadd.xlane.f32.xlu0 %v1823
    %v1825 = vpop.xlane.xlu0 %1824
    %v1826 = vrcp.pop %v1825
    %v1827 = vmul.f32 %v1822, %v1826
    %1828 = vrot.lane.b32.xlu0 %v1729, 64
    %v1829 = vpop.permute.xlu0 %1828
    %v1832 = vsel %vm448, %v1827, 0
    %1834 = vmatprep.subr.mxu0 0.0
    %1835 = vmatpush1.msra.mxu0 0.0
    %1836 = vmatprep.subr.mxu0 0.0
    %1837 = vmatpush1.msra.mxu0 0.0
    %1838 = vmatprep.subr.mxu0 0.0
    %1839 = vmatpush1.msra.mxu0 0.0
    %1840 = vmatprep.subr.mxu0 0.0
    %1841 = vmatpush1.msra.mxu0 0.0
    %1842 = vmatprep.subr.mxu0 0.0
    %1843 = vmatpush1.msra.mxu0 0.0
    %1844 = vmatprep.subr.mxu0 0.0
    %1845 = vmatpush1.msra.mxu0 0.0
    %1846 = vmatprep.subr.mxu0 0.0
    %1847 = vmatpush1.msra.mxu0 0.0
    %1848 = vmatprep.subr.mxu0 0.0
    %1849 = vmatpush1.msra.mxu0 0.0
    %1850 = vmatprep.subr.mxu0 0.0
    %1851 = vmatpush1.msra.mxu0 0.0
    %1852 = vmatprep.subr.mxu0 0.0
    %1853 = vmatpush1.msra.mxu0 0.0
    %1854 = vmatprep.subr.mxu0 0.0
    %1855 = vmatpush1.msra.mxu0 0.0
    %1856 = vmatprep.subr.mxu0 0.0
    %1857 = vmatpush1.msra.mxu0 0.0
    %1858 = vmatprep.subr.mxu0 0.0
    %1859 = vmatpush1.msra.mxu0 0.0
    %1860 = vmatprep.subr.mxu0 0.0
    %1861 = vmatpush1.msra.mxu0 0.0
    %1862 = vmatprep.subr.mxu0 0.0
    %1863 = vmatpush1.msra.mxu0 0.0
    %1864 = vmatprep.subr.mxu0 0.0
    %1865 = vmatpush1.msra.mxu0 %v1829
    %1866 = vmatprep.subr.mxu0 0.0
    %1867 = vmatpush2.msra.mxu0 0.0
    %1868 = vmatprep.subr.mxu0 0.0
    %1869 = vmatpush2.msra.mxu0 0.0
    %1870 = vmatprep.subr.mxu0 0.0
    %1871 = vmatpush2.msra.mxu0 0.0
    %1872 = vmatprep.subr.mxu0 0.0
    %1873 = vmatpush2.msra.mxu0 0.0
    %1874 = vmatprep.subr.mxu0 0.0
    %1875 = vmatpush2.msra.mxu0 0.0
    %1876 = vmatprep.subr.mxu0 0.0
    %1877 = vmatpush2.msra.mxu0 0.0
    %1878 = vmatprep.subr.mxu0 0.0
    %1879 = vmatpush2.msra.mxu0 0.0
    %1880 = vmatprep.subr.mxu0 0.0
    %1881 = vmatpush2.msra.mxu0 0.0
    %1882 = vmatprep.subr.mxu0 0.0
    %1883 = vmatpush2.msra.mxu0 0.0
    %1884 = vmatprep.subr.mxu0 0.0
    %1885 = vmatpush2.msra.mxu0 0.0
    %1886 = vmatprep.subr.mxu0 0.0
    %1887 = vmatpush2.msra.mxu0 0.0
    %1888 = vmatprep.subr.mxu0 0.0
    %1889 = vmatpush2.msra.mxu0 0.0
    %1890 = vmatprep.subr.mxu0 0.0
    %1891 = vmatpush2.msra.mxu0 0.0
    %1892 = vmatprep.subr.mxu0 0.0
    %1893 = vmatpush2.msra.mxu0 0.0
    %1894 = vmatprep.subr.mxu0 0.0
    %1895 = vmatpush2.msra.mxu0 0.0
    %1896 = vmatprep.subr.mxu0 0.0
    %1897 = vmatpush2.msra.mxu0 0.0
    %1898 = vmatprep.mubr.f32.mxu0 0.0
    %1899 = vmatmul.mubr.f32.gmra.mxu0 %v1832
    %v1900 = vpop.f32.mrf.mxu0
    %v1901 = vadd.f32 0.0, %v1900
    %v1902 = vpop.f32.mrf.mxu0
    %1903 = vdwg.mxu0
    %1904 = vrot.lane.b32.xlu0 %v1729, 112
    %v1905 = vpop.permute.xlu0 %1904
    %1906 = vrot.lane.b32.xlu0 %v1729, 80
    %v1907 = vpop.permute.xlu0 %1906
    %v1908 = vsel %vm365, %v1905, 0
    %v1910 = vsel %vm365, %v1907, 0
    %1912 = vmatprep.subr.mxu0 0.0
    %1913 = vmatpush1.xpose.msra.mxu0 0.0
    %1914 = vmatprep.subr.mxu0 0.0
    %1915 = vmatpush1.xpose.msra.mxu0 0.0
    %1916 = vmatprep.subr.mxu0 0.0
    %1917 = vmatpush1.xpose.msra.mxu0 0.0
    %1918 = vmatprep.subr.mxu0 0.0
    %1919 = vmatpush1.xpose.msra.mxu0 0.0
    %1920 = vmatprep.subr.mxu0 0.0
    %1921 = vmatpush1.xpose.msra.mxu0 0.0
    %1922 = vmatprep.subr.mxu0 0.0
    %1923 = vmatpush1.xpose.msra.mxu0 0.0
    %1924 = vmatprep.subr.mxu0 0.0
    %1925 = vmatpush1.xpose.msra.mxu0 0.0
    %1926 = vmatprep.subr.mxu0 0.0
    %1927 = vmatpush1.xpose.msra.mxu0 0.0
    %1928 = vmatprep.subr.mxu0 0.0
    %1929 = vmatpush1.xpose.msra.mxu0 0.0
    %1930 = vmatprep.subr.mxu0 0.0
    %1931 = vmatpush1.xpose.msra.mxu0 0.0
    %1932 = vmatprep.subr.mxu0 0.0
    %1933 = vmatpush1.xpose.msra.mxu0 0.0
    %1934 = vmatprep.subr.mxu0 0.0
    %1935 = vmatpush1.xpose.msra.mxu0 0.0
    %1936 = vmatprep.subr.mxu0 0.0
    %1937 = vmatpush1.xpose.msra.mxu0 0.0
    %1938 = vmatprep.subr.mxu0 0.0
    %1939 = vmatpush1.xpose.msra.mxu0 0.0
    %1940 = vmatprep.subr.mxu0 0.0
    %1941 = vmatpush1.xpose.msra.mxu0 0.0
    %1942 = vmatprep.subr.mxu0 0.0
    %1943 = vmatpush1.xpose.msra.mxu0 %v1910
    %1944 = vmatprep.subr.mxu0 0.0
    %1945 = vmatpush2.xpose.msra.mxu0 0.0
    %1946 = vmatprep.subr.mxu0 0.0
    %1947 = vmatpush2.xpose.msra.mxu0 0.0
    %1948 = vmatprep.subr.mxu0 0.0
    %1949 = vmatpush2.xpose.msra.mxu0 0.0
    %1950 = vmatprep.subr.mxu0 0.0
    %1951 = vmatpush2.xpose.msra.mxu0 0.0
    %1952 = vmatprep.subr.mxu0 0.0
    %1953 = vmatpush2.xpose.msra.mxu0 0.0
    %1954 = vmatprep.subr.mxu0 0.0
    %1955 = vmatpush2.xpose.msra.mxu0 0.0
    %1956 = vmatprep.subr.mxu0 0.0
    %1957 = vmatpush2.xpose.msra.mxu0 0.0
    %1958 = vmatprep.subr.mxu0 0.0
    %1959 = vmatpush2.xpose.msra.mxu0 0.0
    %1960 = vmatprep.subr.mxu0 0.0
    %1961 = vmatpush2.xpose.msra.mxu0 0.0
    %1962 = vmatprep.subr.mxu0 0.0
    %1963 = vmatpush2.xpose.msra.mxu0 0.0
    %1964 = vmatprep.subr.mxu0 0.0
    %1965 = vmatpush2.xpose.msra.mxu0 0.0
    %1966 = vmatprep.subr.mxu0 0.0
    %1967 = vmatpush2.xpose.msra.mxu0 0.0
    %1968 = vmatprep.subr.mxu0 0.0
    %1969 = vmatpush2.xpose.msra.mxu0 0.0
    %1970 = vmatprep.subr.mxu0 0.0
    %1971 = vmatpush2.xpose.msra.mxu0 0.0
    %1972 = vmatprep.subr.mxu0 0.0
    %1973 = vmatpush2.xpose.msra.mxu0 0.0
    %1974 = vmatprep.subr.mxu0 0.0
    %1975 = vmatpush2.xpose.msra.mxu0 0.0
    %1976 = vmatprep.mubr.f32.mxu0 0.0
    %1977 = vmatmul.mubr.f32.gmra.mxu0 %v1908
    %v1978 = vpop.f32.mrf.mxu0
    %v1979 = vadd.f32 0.0, %v1978
    %v1980 = vpop.f32.mrf.mxu0
    %1981 = vdwg.mxu0
    %v1982 = vmul.f32 %v1979, 0.25
    %v1983 = vadd.f32 %v1982, %v255
    %v1984 = vsel %vm1816, %v1983, -inf
    %1985 = vmax.xlane.f32.xlu0 %v1984
    %v1986 = vpop.xlane.xlu0 %1985
    %v1987 = vsub.f32 %v1983, %v1986
    %v1988 = vmul.f32 %v1987, 1.442695
    %v1989 = vpow.pop %v1988
    %v1990 = vsel %vm1816, %v1989, 0.0
    %1991 = vadd.xlane.f32.xlu0 %v1990
    %v1992 = vpop.xlane.xlu0 %1991
    %v1993 = vrcp.pop %v1992
    %v1994 = vmul.f32 %v1989, %v1993
    %1995 = vrot.lane.b32.xlu0 %v1729, 48
    %v1996 = vpop.permute.xlu0 %1995
    %v1999 = vsel %vm448, %v1994, 0
    %2001 = vmatprep.subr.mxu0 0.0
    %2002 = vmatpush1.msra.mxu0 0.0
    %2003 = vmatprep.subr.mxu0 0.0
    %2004 = vmatpush1.msra.mxu0 0.0
    %2005 = vmatprep.subr.mxu0 0.0
    %2006 = vmatpush1.msra.mxu0 0.0
    %2007 = vmatprep.subr.mxu0 0.0
    %2008 = vmatpush1.msra.mxu0 0.0
    %2009 = vmatprep.subr.mxu0 0.0
    %2010 = vmatpush1.msra.mxu0 0.0
    %2011 = vmatprep.subr.mxu0 0.0
    %2012 = vmatpush1.msra.mxu0 0.0
    %2013 = vmatprep.subr.mxu0 0.0
    %2014 = vmatpush1.msra.mxu0 0.0
    %2015 = vmatprep.subr.mxu0 0.0
    %2016 = vmatpush1.msra.mxu0 0.0
    %2017 = vmatprep.subr.mxu0 0.0
    %2018 = vmatpush1.msra.mxu0 0.0
    %2019 = vmatprep.subr.mxu0 0.0
    %2020 = vmatpush1.msra.mxu0 0.0
    %2021 = vmatprep.subr.mxu0 0.0
    %2022 = vmatpush1.msra.mxu0 0.0
    %2023 = vmatprep.subr.mxu0 0.0
    %2024 = vmatpush1.msra.mxu0 0.0
    %2025 = vmatprep.subr.mxu0 0.0
    %2026 = vmatpush1.msra.mxu0 0.0
    %2027 = vmatprep.subr.mxu0 0.0
    %2028 = vmatpush1.msra.mxu0 0.0
    %2029 = vmatprep.subr.mxu0 0.0
    %2030 = vmatpush1.msra.mxu0 0.0
    %2031 = vmatprep.subr.mxu0 0.0
    %2032 = vmatpush1.msra.mxu0 %v1996
    %2033 = vmatprep.subr.mxu0 0.0
    %2034 = vmatpush2.msra.mxu0 0.0
    %2035 = vmatprep.subr.mxu0 0.0
    %2036 = vmatpush2.msra.mxu0 0.0
    %2037 = vmatprep.subr.mxu0 0.0
    %2038 = vmatpush2.msra.mxu0 0.0
    %2039 = vmatprep.subr.mxu0 0.0
    %2040 = vmatpush2.msra.mxu0 0.0
    %2041 = vmatprep.subr.mxu0 0.0
    %2042 = vmatpush2.msra.mxu0 0.0
    %2043 = vmatprep.subr.mxu0 0.0
    %2044 = vmatpush2.msra.mxu0 0.0
    %2045 = vmatprep.subr.mxu0 0.0
    %2046 = vmatpush2.msra.mxu0 0.0
    %2047 = vmatprep.subr.mxu0 0.0
    %2048 = vmatpush2.msra.mxu0 0.0
    %2049 = vmatprep.subr.mxu0 0.0
    %2050 = vmatpush2.msra.mxu0 0.0
    %2051 = vmatprep.subr.mxu0 0.0
    %2052 = vmatpush2.msra.mxu0 0.0
    %2053 = vmatprep.subr.mxu0 0.0
    %2054 = vmatpush2.msra.mxu0 0.0
    %2055 = vmatprep.subr.mxu0 0.0
    %2056 = vmatpush2.msra.mxu0 0.0
    %2057 = vmatprep.subr.mxu0 0.0
    %2058 = vmatpush2.msra.mxu0 0.0
    %2059 = vmatprep.subr.mxu0 0.0
    %2060 = vmatpush2.msra.mxu0 0.0
    %2061 = vmatprep.subr.mxu0 0.0
    %2062 = vmatpush2.msra.mxu0 0.0
    %2063 = vmatprep.subr.mxu0 0.0
    %2064 = vmatpush2.msra.mxu0 0.0
    %2065 = vmatprep.mubr.f32.mxu0 0.0
    %2066 = vmatmul.mubr.f32.gmra.mxu0 %v1999
    %v2067 = vpop.f32.mrf.mxu0
    %v2068 = vadd.f32 0.0, %v2067
    %v2069 = vpop.f32.mrf.mxu0
    %2070 = vdwg.mxu0
    %v2072 = vsel %vm365, %v2068, 0
    %2074 = vmatprep.subr.mxu0 0.0
    %2075 = vmatpush1.msra.mxu0 0.0
    %2076 = vmatprep.subr.mxu0 0.0
    %2077 = vmatpush1.msra.mxu0 0.0
    %2078 = vmatprep.subr.mxu0 0.0
    %2079 = vmatpush1.msra.mxu0 0.0
    %2080 = vmatprep.subr.mxu0 0.0
    %2081 = vmatpush1.msra.mxu0 0.0
    %2082 = vmatprep.subr.mxu0 0.0
    %2083 = vmatpush1.msra.mxu0 0.0
    %2084 = vmatprep.subr.mxu0 0.0
    %2085 = vmatpush1.msra.mxu0 0.0
    %2086 = vmatprep.subr.mxu0 0.0
    %2087 = vmatpush1.msra.mxu0 0.0
    %2088 = vmatprep.subr.mxu0 0.0
    %2089 = vmatpush1.msra.mxu0 0.0
    %2090 = vmatprep.subr.mxu0 0.0
    %2091 = vmatpush1.msra.mxu0 0.0
    %2092 = vmatprep.subr.mxu0 0.0
    %2093 = vmatpush1.msra.mxu0 0.0
    %2094 = vmatprep.subr.mxu0 0.0
    %2095 = vmatpush1.msra.mxu0 0.0
    %2096 = vmatprep.subr.mxu0 0.0
    %2097 = vmatpush1.msra.mxu0 0.0
    %2098 = vmatprep.subr.mxu0 0.0
    %2099 = vmatpush1.msra.mxu0 0.0
    %2100 = vmatprep.subr.mxu0 0.0
    %2101 = vmatpush1.msra.mxu0 0.0
    %2102 = vmatprep.subr.mxu0 0.0
    %2103 = vmatpush1.msra.mxu0 %v1634
    %2104 = vmatprep.subr.mxu0 0.0
    %2105 = vmatpush1.msra.mxu0 %v1633
    %2106 = vmatprep.subr.mxu0 0.0
    %2107 = vmatpush2.msra.mxu0 0.0
    %2108 = vmatprep.subr.mxu0 0.0
    %2109 = vmatpush2.msra.mxu0 0.0
    %2110 = vmatprep.subr.mxu0 0.0
    %2111 = vmatpush2.msra.mxu0 0.0
    %2112 = vmatprep.subr.mxu0 0.0
    %2113 = vmatpush2.msra.mxu0 0.0
    %2114 = vmatprep.subr.mxu0 0.0
    %2115 = vmatpush2.msra.mxu0 0.0
    %2116 = vmatprep.subr.mxu0 0.0
    %2117 = vmatpush2.msra.mxu0 0.0
    %2118 = vmatprep.subr.mxu0 0.0
    %2119 = vmatpush2.msra.mxu0 0.0
    %2120 = vmatprep.subr.mxu0 0.0
    %2121 = vmatpush2.msra.mxu0 0.0
    %2122 = vmatprep.subr.mxu0 0.0
    %2123 = vmatpush2.msra.mxu0 0.0
    %2124 = vmatprep.subr.mxu0 0.0
    %2125 = vmatpush2.msra.mxu0 0.0
    %2126 = vmatprep.subr.mxu0 0.0
    %2127 = vmatpush2.msra.mxu0 0.0
    %2128 = vmatprep.subr.mxu0 0.0
    %2129 = vmatpush2.msra.mxu0 0.0
    %2130 = vmatprep.subr.mxu0 0.0
    %2131 = vmatpush2.msra.mxu0 0.0
    %2132 = vmatprep.subr.mxu0 0.0
    %2133 = vmatpush2.msra.mxu0 0.0
    %2134 = vmatprep.subr.mxu0 0.0
    %2135 = vmatpush2.msra.mxu0 0.0
    %2136 = vmatprep.subr.mxu0 0.0
    %2137 = vmatpush2.msra.mxu0 0.0
    %2138 = vmatprep.mubr.f32.mxu0 0.0
    %2139 = vmatmul.mubr.f32.gmra.mxu0 %v2072
    %v2140 = vpop.f32.mrf.mxu0
    %v2141 = vadd.f32 0.0, %v2140
    %v2142 = vpop.f32.mrf.mxu0
    %2143 = vdwg.mxu0
    %v2145 = vsel %vm365, %v1901, 0
    %2147 = vmatprep.subr.mxu0 0.0
    %2148 = vmatpush1.msra.mxu0 0.0
    %2149 = vmatprep.subr.mxu0 0.0
    %2150 = vmatpush1.msra.mxu0 0.0
    %2151 = vmatprep.subr.mxu0 0.0
    %2152 = vmatpush1.msra.mxu0 0.0
    %2153 = vmatprep.subr.mxu0 0.0
    %2154 = vmatpush1.msra.mxu0 0.0
    %2155 = vmatprep.subr.mxu0 0.0
    %2156 = vmatpush1.msra.mxu0 0.0
    %2157 = vmatprep.subr.mxu0 0.0
    %2158 = vmatpush1.msra.mxu0 0.0
    %2159 = vmatprep.subr.mxu0 0.0
    %2160 = vmatpush1.msra.mxu0 0.0
    %2161 = vmatprep.subr.mxu0 0.0
    %2162 = vmatpush1.msra.mxu0 0.0
    %2163 = vmatprep.subr.mxu0 0.0
    %2164 = vmatpush1.msra.mxu0 0.0
    %2165 = vmatprep.subr.mxu0 0.0
    %2166 = vmatpush1.msra.mxu0 0.0
    %2167 = vmatprep.subr.mxu0 0.0
    %2168 = vmatpush1.msra.mxu0 0.0
    %2169 = vmatprep.subr.mxu0 0.0
    %2170 = vmatpush1.msra.mxu0 0.0
    %2171 = vmatprep.subr.mxu0 0.0
    %2172 = vmatpush1.msra.mxu0 0.0
    %2173 = vmatprep.subr.mxu0 0.0
    %2174 = vmatpush1.msra.mxu0 0.0
    %2175 = vmatprep.subr.mxu0 0.0
    %2176 = vmatpush1.msra.mxu0 %v1632
    %2177 = vmatprep.subr.mxu0 0.0
    %2178 = vmatpush1.msra.mxu0 %v1631
    %2179 = vmatprep.subr.mxu0 0.0
    %2180 = vmatpush2.msra.mxu0 0.0
    %2181 = vmatprep.subr.mxu0 0.0
    %2182 = vmatpush2.msra.mxu0 0.0
    %2183 = vmatprep.subr.mxu0 0.0
    %2184 = vmatpush2.msra.mxu0 0.0
    %2185 = vmatprep.subr.mxu0 0.0
    %2186 = vmatpush2.msra.mxu0 0.0
    %2187 = vmatprep.subr.mxu0 0.0
    %2188 = vmatpush2.msra.mxu0 0.0
    %2189 = vmatprep.subr.mxu0 0.0
    %2190 = vmatpush2.msra.mxu0 0.0
    %2191 = vmatprep.subr.mxu0 0.0
    %2192 = vmatpush2.msra.mxu0 0.0
    %2193 = vmatprep.subr.mxu0 0.0
    %2194 = vmatpush2.msra.mxu0 0.0
    %2195 = vmatprep.subr.mxu0 0.0
    %2196 = vmatpush2.msra.mxu0 0.0
    %2197 = vmatprep.subr.mxu0 0.0
    %2198 = vmatpush2.msra.mxu0 0.0
    %2199 = vmatprep.subr.mxu0 0.0
    %2200 = vmatpush2.msra.mxu0 0.0
    %2201 = vmatprep.subr.mxu0 0.0
    %2202 = vmatpush2.msra.mxu0 0.0
    %2203 = vmatprep.subr.mxu0 0.0
    %2204 = vmatpush2.msra.mxu0 0.0
    %2205 = vmatprep.subr.mxu0 0.0
    %2206 = vmatpush2.msra.mxu0 0.0
    %2207 = vmatprep.subr.mxu0 0.0
    %2208 = vmatpush2.msra.mxu0 0.0
    %2209 = vmatprep.subr.mxu0 0.0
    %2210 = vmatpush2.msra.mxu0 0.0
    %2211 = vmatprep.mubr.f32.mxu0 0.0
    %2212 = vmatmul.mubr.f32.gmra.mxu0 %v2145
    %v2213 = vpop.f32.mrf.mxu0
    %v2214 = vadd.f32 %v2141, %v2213
    %v2215 = vpop.f32.mrf.mxu0
    %2216 = vdwg.mxu0
    %2218 = vrot.lane.b32.xlu0 %v1734, 96
    %v2219 = vpop.permute.xlu0 %2218
    %v2220 = vsel %vm365, %v1734, 0
    %v2222 = vsel %vm365, %v2219, 0
    %2224 = vmatprep.subr.mxu0 0.0
    %2225 = vmatpush1.xpose.msra.mxu0 0.0
    %2226 = vmatprep.subr.mxu0 0.0
    %2227 = vmatpush1.xpose.msra.mxu0 0.0
    %2228 = vmatprep.subr.mxu0 0.0
    %2229 = vmatpush1.xpose.msra.mxu0 0.0
    %2230 = vmatprep.subr.mxu0 0.0
    %2231 = vmatpush1.xpose.msra.mxu0 0.0
    %2232 = vmatprep.subr.mxu0 0.0
    %2233 = vmatpush1.xpose.msra.mxu0 0.0
    %2234 = vmatprep.subr.mxu0 0.0
    %2235 = vmatpush1.xpose.msra.mxu0 0.0
    %2236 = vmatprep.subr.mxu0 0.0
    %2237 = vmatpush1.xpose.msra.mxu0 0.0
    %2238 = vmatprep.subr.mxu0 0.0
    %2239 = vmatpush1.xpose.msra.mxu0 0.0
    %2240 = vmatprep.subr.mxu0 0.0
    %2241 = vmatpush1.xpose.msra.mxu0 0.0
    %2242 = vmatprep.subr.mxu0 0.0
    %2243 = vmatpush1.xpose.msra.mxu0 0.0
    %2244 = vmatprep.subr.mxu0 0.0
    %2245 = vmatpush1.xpose.msra.mxu0 0.0
    %2246 = vmatprep.subr.mxu0 0.0
    %2247 = vmatpush1.xpose.msra.mxu0 0.0
    %2248 = vmatprep.subr.mxu0 0.0
    %2249 = vmatpush1.xpose.msra.mxu0 0.0
    %2250 = vmatprep.subr.mxu0 0.0
    %2251 = vmatpush1.xpose.msra.mxu0 0.0
    %2252 = vmatprep.subr.mxu0 0.0
    %2253 = vmatpush1.xpose.msra.mxu0 0.0
    %2254 = vmatprep.subr.mxu0 0.0
    %2255 = vmatpush1.xpose.msra.mxu0 %v2222
    %2256 = vmatprep.subr.mxu0 0.0
    %2257 = vmatpush2.xpose.msra.mxu0 0.0
    %2258 = vmatprep.subr.mxu0 0.0
    %2259 = vmatpush2.xpose.msra.mxu0 0.0
    %2260 = vmatprep.subr.mxu0 0.0
    %2261 = vmatpush2.xpose.msra.mxu0 0.0
    %2262 = vmatprep.subr.mxu0 0.0
    %2263 = vmatpush2.xpose.msra.mxu0 0.0
    %2264 = vmatprep.subr.mxu0 0.0
    %2265 = vmatpush2.xpose.msra.mxu0 0.0
    %2266 = vmatprep.subr.mxu0 0.0
    %2267 = vmatpush2.xpose.msra.mxu0 0.0
    %2268 = vmatprep.subr.mxu0 0.0
    %2269 = vmatpush2.xpose.msra.mxu0 0.0
    %2270 = vmatprep.subr.mxu0 0.0
    %2271 = vmatpush2.xpose.msra.mxu0 0.0
    %2272 = vmatprep.subr.mxu0 0.0
    %2273 = vmatpush2.xpose.msra.mxu0 0.0
    %2274 = vmatprep.subr.mxu0 0.0
    %2275 = vmatpush2.xpose.msra.mxu0 0.0
    %2276 = vmatprep.subr.mxu0 0.0
    %2277 = vmatpush2.xpose.msra.mxu0 0.0
    %2278 = vmatprep.subr.mxu0 0.0
    %2279 = vmatpush2.xpose.msra.mxu0 0.0
    %2280 = vmatprep.subr.mxu0 0.0
    %2281 = vmatpush2.xpose.msra.mxu0 0.0
    %2282 = vmatprep.subr.mxu0 0.0
    %2283 = vmatpush2.xpose.msra.mxu0 0.0
    %2284 = vmatprep.subr.mxu0 0.0
    %2285 = vmatpush2.xpose.msra.mxu0 0.0
    %2286 = vmatprep.subr.mxu0 0.0
    %2287 = vmatpush2.xpose.msra.mxu0 0.0
    %2288 = vmatprep.mubr.f32.mxu0 0.0
    %2289 = vmatmul.mubr.f32.gmra.mxu0 %v2220
    %v2290 = vpop.f32.mrf.mxu0
    %v2291 = vadd.f32 0.0, %v2290
    %v2292 = vpop.f32.mrf.mxu0
    %2293 = vdwg.mxu0
    %v2294 = vmul.f32 %v2291, 0.25
    %v2295 = vadd.f32 %v2294, %v256
    %v2296 = vsel %vm1816, %v2295, -inf
    %2297 = vmax.xlane.f32.xlu0 %v2296
    %v2298 = vpop.xlane.xlu0 %2297
    %v2299 = vsub.f32 %v2295, %v2298
    %v2300 = vmul.f32 %v2299, 1.442695
    %v2301 = vpow.pop %v2300
    %v2302 = vsel %vm1816, %v2301, 0.0
    %2303 = vadd.xlane.f32.xlu0 %v2302
    %v2304 = vpop.xlane.xlu0 %2303
    %v2305 = vrcp.pop %v2304
    %v2306 = vmul.f32 %v2301, %v2305
    %2307 = vrot.lane.b32.xlu0 %v1734, 64
    %v2308 = vpop.permute.xlu0 %2307
    %v2311 = vsel %vm448, %v2306, 0
    %2313 = vmatprep.subr.mxu0 0.0
    %2314 = vmatpush1.msra.mxu0 0.0
    %2315 = vmatprep.subr.mxu0 0.0
    %2316 = vmatpush1.msra.mxu0 0.0
    %2317 = vmatprep.subr.mxu0 0.0
    %2318 = vmatpush1.msra.mxu0 0.0
    %2319 = vmatprep.subr.mxu0 0.0
    %2320 = vmatpush1.msra.mxu0 0.0
    %2321 = vmatprep.subr.mxu0 0.0
    %2322 = vmatpush1.msra.mxu0 0.0
    %2323 = vmatprep.subr.mxu0 0.0
    %2324 = vmatpush1.msra.mxu0 0.0
    %2325 = vmatprep.subr.mxu0 0.0
    %2326 = vmatpush1.msra.mxu0 0.0
    %2327 = vmatprep.subr.mxu0 0.0
    %2328 = vmatpush1.msra.mxu0 0.0
    %2329 = vmatprep.subr.mxu0 0.0
    %2330 = vmatpush1.msra.mxu0 0.0
    %2331 = vmatprep.subr.mxu0 0.0
    %2332 = vmatpush1.msra.mxu0 0.0
    %2333 = vmatprep.subr.mxu0 0.0
    %2334 = vmatpush1.msra.mxu0 0.0
    %2335 = vmatprep.subr.mxu0 0.0
    %2336 = vmatpush1.msra.mxu0 0.0
    %2337 = vmatprep.subr.mxu0 0.0
    %2338 = vmatpush1.msra.mxu0 0.0
    %2339 = vmatprep.subr.mxu0 0.0
    %2340 = vmatpush1.msra.mxu0 0.0
    %2341 = vmatprep.subr.mxu0 0.0
    %2342 = vmatpush1.msra.mxu0 0.0
    %2343 = vmatprep.subr.mxu0 0.0
    %2344 = vmatpush1.msra.mxu0 %v2308
    %2345 = vmatprep.subr.mxu0 0.0
    %2346 = vmatpush2.msra.mxu0 0.0
    %2347 = vmatprep.subr.mxu0 0.0
    %2348 = vmatpush2.msra.mxu0 0.0
    %2349 = vmatprep.subr.mxu0 0.0
    %2350 = vmatpush2.msra.mxu0 0.0
    %2351 = vmatprep.subr.mxu0 0.0
    %2352 = vmatpush2.msra.mxu0 0.0
    %2353 = vmatprep.subr.mxu0 0.0
    %2354 = vmatpush2.msra.mxu0 0.0
    %2355 = vmatprep.subr.mxu0 0.0
    %2356 = vmatpush2.msra.mxu0 0.0
    %2357 = vmatprep.subr.mxu0 0.0
    %2358 = vmatpush2.msra.mxu0 0.0
    %2359 = vmatprep.subr.mxu0 0.0
    %2360 = vmatpush2.msra.mxu0 0.0
    %2361 = vmatprep.subr.mxu0 0.0
    %2362 = vmatpush2.msra.mxu0 0.0
    %2363 = vmatprep.subr.mxu0 0.0
    %2364 = vmatpush2.msra.mxu0 0.0
    %2365 = vmatprep.subr.mxu0 0.0
    %2366 = vmatpush2.msra.mxu0 0.0
    %2367 = vmatprep.subr.mxu0 0.0
    %2368 = vmatpush2.msra.mxu0 0.0
    %2369 = vmatprep.subr.mxu0 0.0
    %2370 = vmatpush2.msra.mxu0 0.0
    %2371 = vmatprep.subr.mxu0 0.0
    %2372 = vmatpush2.msra.mxu0 0.0
    %2373 = vmatprep.subr.mxu0 0.0
    %2374 = vmatpush2.msra.mxu0 0.0
    %2375 = vmatprep.subr.mxu0 0.0
    %2376 = vmatpush2.msra.mxu0 0.0
    %2377 = vmatprep.mubr.f32.mxu0 0.0
    %2378 = vmatmul.mubr.f32.gmra.mxu0 %v2311
    %v2379 = vpop.f32.mrf.mxu0
    %v2380 = vadd.f32 0.0, %v2379
    %v2381 = vpop.f32.mrf.mxu0
    %2382 = vdwg.mxu0
    %2383 = vrot.lane.b32.xlu0 %v1734, 112
    %v2384 = vpop.permute.xlu0 %2383
    %2385 = vrot.lane.b32.xlu0 %v1734, 80
    %v2386 = vpop.permute.xlu0 %2385
    %v2387 = vsel %vm365, %v2384, 0
    %v2389 = vsel %vm365, %v2386, 0
    %2391 = vmatprep.subr.mxu0 0.0
    %2392 = vmatpush1.xpose.msra.mxu0 0.0
    %2393 = vmatprep.subr.mxu0 0.0
    %2394 = vmatpush1.xpose.msra.mxu0 0.0
    %2395 = vmatprep.subr.mxu0 0.0
    %2396 = vmatpush1.xpose.msra.mxu0 0.0
    %2397 = vmatprep.subr.mxu0 0.0
    %2398 = vmatpush1.xpose.msra.mxu0 0.0
    %2399 = vmatprep.subr.mxu0 0.0
    %2400 = vmatpush1.xpose.msra.mxu0 0.0
    %2401 = vmatprep.subr.mxu0 0.0
    %2402 = vmatpush1.xpose.msra.mxu0 0.0
    %2403 = vmatprep.subr.mxu0 0.0
    %2404 = vmatpush1.xpose.msra.mxu0 0.0
    %2405 = vmatprep.subr.mxu0 0.0
    %2406 = vmatpush1.xpose.msra.mxu0 0.0
    %2407 = vmatprep.subr.mxu0 0.0
    %2408 = vmatpush1.xpose.msra.mxu0 0.0
    %2409 = vmatprep.subr.mxu0 0.0
    %2410 = vmatpush1.xpose.msra.mxu0 0.0
    %2411 = vmatprep.subr.mxu0 0.0
    %2412 = vmatpush1.xpose.msra.mxu0 0.0
    %2413 = vmatprep.subr.mxu0 0.0
    %2414 = vmatpush1.xpose.msra.mxu0 0.0
    %2415 = vmatprep.subr.mxu0 0.0
    %2416 = vmatpush1.xpose.msra.mxu0 0.0
    %2417 = vmatprep.subr.mxu0 0.0
    %2418 = vmatpush1.xpose.msra.mxu0 0.0
    %2419 = vmatprep.subr.mxu0 0.0
    %2420 = vmatpush1.xpose.msra.mxu0 0.0
    %2421 = vmatprep.subr.mxu0 0.0
    %2422 = vmatpush1.xpose.msra.mxu0 %v2389
    %2423 = vmatprep.subr.mxu0 0.0
    %2424 = vmatpush2.xpose.msra.mxu0 0.0
    %2425 = vmatprep.subr.mxu0 0.0
    %2426 = vmatpush2.xpose.msra.mxu0 0.0
    %2427 = vmatprep.subr.mxu0 0.0
    %2428 = vmatpush2.xpose.msra.mxu0 0.0
    %2429 = vmatprep.subr.mxu0 0.0
    %2430 = vmatpush2.xpose.msra.mxu0 0.0
    %2431 = vmatprep.subr.mxu0 0.0
    %2432 = vmatpush2.xpose.msra.mxu0 0.0
    %2433 = vmatprep.subr.mxu0 0.0
    %2434 = vmatpush2.xpose.msra.mxu0 0.0
    %2435 = vmatprep.subr.mxu0 0.0
    %2436 = vmatpush2.xpose.msra.mxu0 0.0
    %2437 = vmatprep.subr.mxu0 0.0
    %2438 = vmatpush2.xpose.msra.mxu0 0.0
    %2439 = vmatprep.subr.mxu0 0.0
    %2440 = vmatpush2.xpose.msra.mxu0 0.0
    %2441 = vmatprep.subr.mxu0 0.0
    %2442 = vmatpush2.xpose.msra.mxu0 0.0
    %2443 = vmatprep.subr.mxu0 0.0
    %2444 = vmatpush2.xpose.msra.mxu0 0.0
    %2445 = vmatprep.subr.mxu0 0.0
    %2446 = vmatpush2.xpose.msra.mxu0 0.0
    %2447 = vmatprep.subr.mxu0 0.0
    %2448 = vmatpush2.xpose.msra.mxu0 0.0
    %2449 = vmatprep.subr.mxu0 0.0
    %2450 = vmatpush2.xpose.msra.mxu0 0.0
    %2451 = vmatprep.subr.mxu0 0.0
    %2452 = vmatpush2.xpose.msra.mxu0 0.0
    %2453 = vmatprep.subr.mxu0 0.0
    %2454 = vmatpush2.xpose.msra.mxu0 0.0
    %2455 = vmatprep.mubr.f32.mxu0 0.0
    %2456 = vmatmul.mubr.f32.gmra.mxu0 %v2387
    %v2457 = vpop.f32.mrf.mxu0
    %v2458 = vadd.f32 0.0, %v2457
    %v2459 = vpop.f32.mrf.mxu0
    %2460 = vdwg.mxu0
    %v2461 = vmul.f32 %v2458, 0.25
    %v2462 = vadd.f32 %v2461, %v256
    %v2463 = vsel %vm1816, %v2462, -inf
    %2464 = vmax.xlane.f32.xlu0 %v2463
    %v2465 = vpop.xlane.xlu0 %2464
    %v2466 = vsub.f32 %v2462, %v2465
    %v2467 = vmul.f32 %v2466, 1.442695
    %v2468 = vpow.pop %v2467
    %v2469 = vsel %vm1816, %v2468, 0.0
    %2470 = vadd.xlane.f32.xlu0 %v2469
    %v2471 = vpop.xlane.xlu0 %2470
    %v2472 = vrcp.pop %v2471
    %v2473 = vmul.f32 %v2468, %v2472
    %2474 = vrot.lane.b32.xlu0 %v1734, 48
    %v2475 = vpop.permute.xlu0 %2474
    %v2478 = vsel %vm448, %v2473, 0
    %2480 = vmatprep.subr.mxu0 0.0
    %2481 = vmatpush1.msra.mxu0 0.0
    %2482 = vmatprep.subr.mxu0 0.0
    %2483 = vmatpush1.msra.mxu0 0.0
    %2484 = vmatprep.subr.mxu0 0.0
    %2485 = vmatpush1.msra.mxu0 0.0
    %2486 = vmatprep.subr.mxu0 0.0
    %2487 = vmatpush1.msra.mxu0 0.0
    %2488 = vmatprep.subr.mxu0 0.0
    %2489 = vmatpush1.msra.mxu0 0.0
    %2490 = vmatprep.subr.mxu0 0.0
    %2491 = vmatpush1.msra.mxu0 0.0
    %2492 = vmatprep.subr.mxu0 0.0
    %2493 = vmatpush1.msra.mxu0 0.0
    %2494 = vmatprep.subr.mxu0 0.0
    %2495 = vmatpush1.msra.mxu0 0.0
    %2496 = vmatprep.subr.mxu0 0.0
    %2497 = vmatpush1.msra.mxu0 0.0
    %2498 = vmatprep.subr.mxu0 0.0
    %2499 = vmatpush1.msra.mxu0 0.0
    %2500 = vmatprep.subr.mxu0 0.0
    %2501 = vmatpush1.msra.mxu0 0.0
    %2502 = vmatprep.subr.mxu0 0.0
    %2503 = vmatpush1.msra.mxu0 0.0
    %2504 = vmatprep.subr.mxu0 0.0
    %2505 = vmatpush1.msra.mxu0 0.0
    %2506 = vmatprep.subr.mxu0 0.0
    %2507 = vmatpush1.msra.mxu0 0.0
    %2508 = vmatprep.subr.mxu0 0.0
    %2509 = vmatpush1.msra.mxu0 0.0
    %2510 = vmatprep.subr.mxu0 0.0
    %2511 = vmatpush1.msra.mxu0 %v2475
    %2512 = vmatprep.subr.mxu0 0.0
    %2513 = vmatpush2.msra.mxu0 0.0
    %2514 = vmatprep.subr.mxu0 0.0
    %2515 = vmatpush2.msra.mxu0 0.0
    %2516 = vmatprep.subr.mxu0 0.0
    %2517 = vmatpush2.msra.mxu0 0.0
    %2518 = vmatprep.subr.mxu0 0.0
    %2519 = vmatpush2.msra.mxu0 0.0
    %2520 = vmatprep.subr.mxu0 0.0
    %2521 = vmatpush2.msra.mxu0 0.0
    %2522 = vmatprep.subr.mxu0 0.0
    %2523 = vmatpush2.msra.mxu0 0.0
    %2524 = vmatprep.subr.mxu0 0.0
    %2525 = vmatpush2.msra.mxu0 0.0
    %2526 = vmatprep.subr.mxu0 0.0
    %2527 = vmatpush2.msra.mxu0 0.0
    %2528 = vmatprep.subr.mxu0 0.0
    %2529 = vmatpush2.msra.mxu0 0.0
    %2530 = vmatprep.subr.mxu0 0.0
    %2531 = vmatpush2.msra.mxu0 0.0
    %2532 = vmatprep.subr.mxu0 0.0
    %2533 = vmatpush2.msra.mxu0 0.0
    %2534 = vmatprep.subr.mxu0 0.0
    %2535 = vmatpush2.msra.mxu0 0.0
    %2536 = vmatprep.subr.mxu0 0.0
    %2537 = vmatpush2.msra.mxu0 0.0
    %2538 = vmatprep.subr.mxu0 0.0
    %2539 = vmatpush2.msra.mxu0 0.0
    %2540 = vmatprep.subr.mxu0 0.0
    %2541 = vmatpush2.msra.mxu0 0.0
    %2542 = vmatprep.subr.mxu0 0.0
    %2543 = vmatpush2.msra.mxu0 0.0
    %2544 = vmatprep.mubr.f32.mxu0 0.0
    %2545 = vmatmul.mubr.f32.gmra.mxu0 %v2478
    %v2546 = vpop.f32.mrf.mxu0
    %v2547 = vadd.f32 0.0, %v2546
    %v2548 = vpop.f32.mrf.mxu0
    %2549 = vdwg.mxu0
    %v2551 = vsel %vm365, %v2547, 0
    %2553 = vmatprep.subr.mxu0 0.0
    %2554 = vmatpush1.msra.mxu0 0.0
    %2555 = vmatprep.subr.mxu0 0.0
    %2556 = vmatpush1.msra.mxu0 0.0
    %2557 = vmatprep.subr.mxu0 0.0
    %2558 = vmatpush1.msra.mxu0 0.0
    %2559 = vmatprep.subr.mxu0 0.0
    %2560 = vmatpush1.msra.mxu0 0.0
    %2561 = vmatprep.subr.mxu0 0.0
    %2562 = vmatpush1.msra.mxu0 0.0
    %2563 = vmatprep.subr.mxu0 0.0
    %2564 = vmatpush1.msra.mxu0 0.0
    %2565 = vmatprep.subr.mxu0 0.0
    %2566 = vmatpush1.msra.mxu0 0.0
    %2567 = vmatprep.subr.mxu0 0.0
    %2568 = vmatpush1.msra.mxu0 0.0
    %2569 = vmatprep.subr.mxu0 0.0
    %2570 = vmatpush1.msra.mxu0 0.0
    %2571 = vmatprep.subr.mxu0 0.0
    %2572 = vmatpush1.msra.mxu0 0.0
    %2573 = vmatprep.subr.mxu0 0.0
    %2574 = vmatpush1.msra.mxu0 0.0
    %2575 = vmatprep.subr.mxu0 0.0
    %2576 = vmatpush1.msra.mxu0 0.0
    %2577 = vmatprep.subr.mxu0 0.0
    %2578 = vmatpush1.msra.mxu0 0.0
    %2579 = vmatprep.subr.mxu0 0.0
    %2580 = vmatpush1.msra.mxu0 0.0
    %2581 = vmatprep.subr.mxu0 0.0
    %2582 = vmatpush1.msra.mxu0 %v1634
    %2583 = vmatprep.subr.mxu0 0.0
    %2584 = vmatpush1.msra.mxu0 %v1633
    %2585 = vmatprep.subr.mxu0 0.0
    %2586 = vmatpush2.msra.mxu0 0.0
    %2587 = vmatprep.subr.mxu0 0.0
    %2588 = vmatpush2.msra.mxu0 0.0
    %2589 = vmatprep.subr.mxu0 0.0
    %2590 = vmatpush2.msra.mxu0 0.0
    %2591 = vmatprep.subr.mxu0 0.0
    %2592 = vmatpush2.msra.mxu0 0.0
    %2593 = vmatprep.subr.mxu0 0.0
    %2594 = vmatpush2.msra.mxu0 0.0
    %2595 = vmatprep.subr.mxu0 0.0
    %2596 = vmatpush2.msra.mxu0 0.0
    %2597 = vmatprep.subr.mxu0 0.0
    %2598 = vmatpush2.msra.mxu0 0.0
    %2599 = vmatprep.subr.mxu0 0.0
    %2600 = vmatpush2.msra.mxu0 0.0
    %2601 = vmatprep.subr.mxu0 0.0
    %2602 = vmatpush2.msra.mxu0 0.0
    %2603 = vmatprep.subr.mxu0 0.0
    %2604 = vmatpush2.msra.mxu0 0.0
    %2605 = vmatprep.subr.mxu0 0.0
    %2606 = vmatpush2.msra.mxu0 0.0
    %2607 = vmatprep.subr.mxu0 0.0
    %2608 = vmatpush2.msra.mxu0 0.0
    %2609 = vmatprep.subr.mxu0 0.0
    %2610 = vmatpush2.msra.mxu0 0.0
    %2611 = vmatprep.subr.mxu0 0.0
    %2612 = vmatpush2.msra.mxu0 0.0
    %2613 = vmatprep.subr.mxu0 0.0
    %2614 = vmatpush2.msra.mxu0 0.0
    %2615 = vmatprep.subr.mxu0 0.0
    %2616 = vmatpush2.msra.mxu0 0.0
    %2617 = vmatprep.mubr.f32.mxu0 0.0
    %2618 = vmatmul.mubr.f32.gmra.mxu0 %v2551
    %v2619 = vpop.f32.mrf.mxu0
    %v2620 = vadd.f32 0.0, %v2619
    %v2621 = vpop.f32.mrf.mxu0
    %2622 = vdwg.mxu0
    %v2624 = vsel %vm365, %v2380, 0
    %2626 = vmatprep.subr.mxu0 0.0
    %2627 = vmatpush1.msra.mxu0 0.0
    %2628 = vmatprep.subr.mxu0 0.0
    %2629 = vmatpush1.msra.mxu0 0.0
    %2630 = vmatprep.subr.mxu0 0.0
    %2631 = vmatpush1.msra.mxu0 0.0
    %2632 = vmatprep.subr.mxu0 0.0
    %2633 = vmatpush1.msra.mxu0 0.0
    %2634 = vmatprep.subr.mxu0 0.0
    %2635 = vmatpush1.msra.mxu0 0.0
    %2636 = vmatprep.subr.mxu0 0.0
    %2637 = vmatpush1.msra.mxu0 0.0
    %2638 = vmatprep.subr.mxu0 0.0
    %2639 = vmatpush1.msra.mxu0 0.0
    %2640 = vmatprep.subr.mxu0 0.0
    %2641 = vmatpush1.msra.mxu0 0.0
    %2642 = vmatprep.subr.mxu0 0.0
    %2643 = vmatpush1.msra.mxu0 0.0
    %2644 = vmatprep.subr.mxu0 0.0
    %2645 = vmatpush1.msra.mxu0 0.0
    %2646 = vmatprep.subr.mxu0 0.0
    %2647 = vmatpush1.msra.mxu0 0.0
    %2648 = vmatprep.subr.mxu0 0.0
    %2649 = vmatpush1.msra.mxu0 0.0
    %2650 = vmatprep.subr.mxu0 0.0
    %2651 = vmatpush1.msra.mxu0 0.0
    %2652 = vmatprep.subr.mxu0 0.0
    %2653 = vmatpush1.msra.mxu0 0.0
    %2654 = vmatprep.subr.mxu0 0.0
    %2655 = vmatpush1.msra.mxu0 %v1632
    %2656 = vmatprep.subr.mxu0 0.0
    %2657 = vmatpush1.msra.mxu0 %v1631
    %2658 = vmatprep.subr.mxu0 0.0
    %2659 = vmatpush2.msra.mxu0 0.0
    %2660 = vmatprep.subr.mxu0 0.0
    %2661 = vmatpush2.msra.mxu0 0.0
    %2662 = vmatprep.subr.mxu0 0.0
    %2663 = vmatpush2.msra.mxu0 0.0
    %2664 = vmatprep.subr.mxu0 0.0
    %2665 = vmatpush2.msra.mxu0 0.0
    %2666 = vmatprep.subr.mxu0 0.0
    %2667 = vmatpush2.msra.mxu0 0.0
    %2668 = vmatprep.subr.mxu0 0.0
    %2669 = vmatpush2.msra.mxu0 0.0
    %2670 = vmatprep.subr.mxu0 0.0
    %2671 = vmatpush2.msra.mxu0 0.0
    %2672 = vmatprep.subr.mxu0 0.0
    %2673 = vmatpush2.msra.mxu0 0.0
    %2674 = vmatprep.subr.mxu0 0.0
    %2675 = vmatpush2.msra.mxu0 0.0
    %2676 = vmatprep.subr.mxu0 0.0
    %2677 = vmatpush2.msra.mxu0 0.0
    %2678 = vmatprep.subr.mxu0 0.0
    %2679 = vmatpush2.msra.mxu0 0.0
    %2680 = vmatprep.subr.mxu0 0.0
    %2681 = vmatpush2.msra.mxu0 0.0
    %2682 = vmatprep.subr.mxu0 0.0
    %2683 = vmatpush2.msra.mxu0 0.0
    %2684 = vmatprep.subr.mxu0 0.0
    %2685 = vmatpush2.msra.mxu0 0.0
    %2686 = vmatprep.subr.mxu0 0.0
    %2687 = vmatpush2.msra.mxu0 0.0
    %2688 = vmatprep.subr.mxu0 0.0
    %2689 = vmatpush2.msra.mxu0 0.0
    %2690 = vmatprep.mubr.f32.mxu0 0.0
    %2691 = vmatmul.mubr.f32.gmra.mxu0 %v2624
    %v2692 = vpop.f32.mrf.mxu0
    %v2693 = vadd.f32 %v2620, %v2692
    %v2694 = vpop.f32.mrf.mxu0
    %2695 = vdwg.mxu0
    %v2697 = vrot.slane %v2693, 7
    %vm2699 = vcmask 1040384
    %v2700 = vsel %vm2699, %v2214, %v2697
    %v2701 = vlaneseq
    %v2702 = vshrl.u32 %v2701, 7
    %v2703 = vsub.s32 0, %v2702
    %v2704 = vrot.slane %v1629, %v2703
    %v2705 = vadd.f32 %v2700, %v2704
    %v2706 = vrot.slane %v1627, 7
    %v2708 = vsel %vm2699, %v1626, %v2706
    %v2709 = vadd.f32 %v2705, %v2708
    %vm2710 = vcmask 254976
    %v2711 = vsel %vm2710, %v2709, 0.0
    %2712 = vadd.xlane.f32.xlu0 %v2711
    %v2713 = vpop.xlane.xlu0 %2712
    %v2714 = vmul.f32 %v2713, %v210
    %v2715 = vmul.f32 %v2709, %v2709
    %v2716 = vsel %vm2710, %v2715, 0.0
    %2717 = vadd.xlane.f32.xlu0 %v2716
    %v2718 = vpop.xlane.xlu0 %2717
    %v2719 = vmul.f32 %v2718, %v210
    %v2720 = vmul.f32 %v2714, %v2714
    %v2721 = vsub.f32 %v2719, %v2720
    %v2722 = vmax.f32 %v2721, 0.0
    %v2723 = vsub.f32 %v2709, %v2714
    %v2724 = vadd.f32 %v2722, 1e-12
    %v2725 = vrsqrt.pop %v2724
    %v2726 = vmul.f32 %v2723, %v2725
    %v2727 = vlaneseq
    %v2728 = vshrl.u32 %v2727, 7
    %v2729 = vsub.s32 1, %v2728
    %v2730 = vrot.slane %v1629, %v2729
    %v2731 = vmul.f32 %v2726, %v2730
    %v2732 = vlaneseq
    %v2733 = vshrl.u32 %v2732, 7
    %v2734 = vsub.s32 2, %v2733
    %v2735 = vrot.slane %v1629, %v2734
    %v2736 = vadd.f32 %v2731, %v2735
    %s2737 = scalar_lea.vmem %s8, 32
    %v2738 = vld [vmem:[%s2737] sm:$0xff]
    %v2739 = vld [vmem:[%s2737 + $0x8] sm:$0xff]
    %v2740 = vld [vmem:[%s2737 + $0x10] sm:$0xff]
    %v2741 = vld [vmem:[%s2737 + $0x18] sm:$0xff]
    %s2742 = scalar_lea.vmem %s9, 1
    %v2743 = vld [vmem:[%s2742] sm:$0x1]
    %v2745 = vlaneseq
    %v2746 = vshrl.u32 %v2745, 7
    %v2747 = vsub.s32 0, %v2746
    %v2748 = vrot.slane %v2743, %v2747
    %v2751 = vsel %vm203, %v2736, 0
    %2753 = vmatprep.subr.mxu0 0.0
    %2754 = vmatpush1.msra.mxu0 0.0
    %2755 = vmatprep.subr.mxu0 0.0
    %2756 = vmatpush1.msra.mxu0 0.0
    %2757 = vmatprep.subr.mxu0 0.0
    %2758 = vmatpush1.msra.mxu0 0.0
    %2759 = vmatprep.subr.mxu0 0.0
    %2760 = vmatpush1.msra.mxu0 0.0
    %2761 = vmatprep.subr.mxu0 0.0
    %2762 = vmatpush1.msra.mxu0 0.0
    %2763 = vmatprep.subr.mxu0 0.0
    %2764 = vmatpush1.msra.mxu0 0.0
    %2765 = vmatprep.subr.mxu0 0.0
    %2766 = vmatpush1.msra.mxu0 0.0
    %2767 = vmatprep.subr.mxu0 0.0
    %2768 = vmatpush1.msra.mxu0 0.0
    %2769 = vmatprep.subr.mxu0 0.0
    %2770 = vmatpush1.msra.mxu0 0.0
    %2771 = vmatprep.subr.mxu0 0.0
    %2772 = vmatpush1.msra.mxu0 0.0
    %2773 = vmatprep.subr.mxu0 0.0
    %2774 = vmatpush1.msra.mxu0 0.0
    %2775 = vmatprep.subr.mxu0 0.0
    %2776 = vmatpush1.msra.mxu0 0.0
    %2777 = vmatprep.subr.mxu0 0.0
    %2778 = vmatpush1.msra.mxu0 %v2741
    %2779 = vmatprep.subr.mxu0 0.0
    %2780 = vmatpush1.msra.mxu0 %v2740
    %2781 = vmatprep.subr.mxu0 0.0
    %2782 = vmatpush1.msra.mxu0 %v2739
    %2783 = vmatprep.subr.mxu0 0.0
    %2784 = vmatpush1.msra.mxu0 %v2738
    %2785 = vmatprep.subr.mxu0 0.0
    %2786 = vmatpush2.msra.mxu0 0.0
    %2787 = vmatprep.subr.mxu0 0.0
    %2788 = vmatpush2.msra.mxu0 0.0
    %2789 = vmatprep.subr.mxu0 0.0
    %2790 = vmatpush2.msra.mxu0 0.0
    %2791 = vmatprep.subr.mxu0 0.0
    %2792 = vmatpush2.msra.mxu0 0.0
    %2793 = vmatprep.subr.mxu0 0.0
    %2794 = vmatpush2.msra.mxu0 0.0
    %2795 = vmatprep.subr.mxu0 0.0
    %2796 = vmatpush2.msra.mxu0 0.0
    %2797 = vmatprep.subr.mxu0 0.0
    %2798 = vmatpush2.msra.mxu0 0.0
    %2799 = vmatprep.subr.mxu0 0.0
    %2800 = vmatpush2.msra.mxu0 0.0
    %2801 = vmatprep.subr.mxu0 0.0
    %2802 = vmatpush2.msra.mxu0 0.0
    %2803 = vmatprep.subr.mxu0 0.0
    %2804 = vmatpush2.msra.mxu0 0.0
    %2805 = vmatprep.subr.mxu0 0.0
    %2806 = vmatpush2.msra.mxu0 0.0
    %2807 = vmatprep.subr.mxu0 0.0
    %2808 = vmatpush2.msra.mxu0 0.0
    %2809 = vmatprep.subr.mxu0 0.0
    %2810 = vmatpush2.msra.mxu0 0.0
    %2811 = vmatprep.subr.mxu0 0.0
    %2812 = vmatpush2.msra.mxu0 0.0
    %2813 = vmatprep.subr.mxu0 0.0
    %2814 = vmatpush2.msra.mxu0 0.0
    %2815 = vmatprep.subr.mxu0 0.0
    %2816 = vmatpush2.msra.mxu0 0.0
    %2817 = vmatprep.mubr.f32.mxu0 0.0
    %2818 = vmatmul.mubr.f32.gmra.mxu0 %v2751
    %v2819 = vpop.f32.mrf.mxu0
    %v2820 = vadd.f32 %v2748, %v2819
    %v2821 = vpop.f32.mrf.mxu0
    %2822 = vdwg.mxu0
    %v2823 = vmul.f32 %v2820, 0.5
    %v2824 = vmul.f32 %v2820, 0.044715
    %v2825 = vmul.f32 %v2824, %v2820
    %v2826 = vmul.f32 %v2825, %v2820
    %v2827 = vadd.f32 %v2820, %v2826
    %v2828 = vmul.f32 %v2827, 0.7978846
    %v2829 = vtanh.pop %v2828
    %v2830 = vadd.f32 %v2829, 1.0
    %v2831 = vmul.f32 %v2823, %v2830
    %v2832 = vlaneseq
    %v2833 = vshrl.u32 %v2832, 7
    %v2834 = vsub.s32 3, %v2833
    %v2835 = vrot.slane %v1629, %v2834
    %v2837 = vsel %vm1500, %v2831, 0
    %2839 = vmatprep.subr.mxu0 0.0
    %2840 = vmatpush1.msra.mxu0 0.0
    %2841 = vmatprep.subr.mxu0 0.0
    %2842 = vmatpush1.msra.mxu0 0.0
    %2843 = vmatprep.subr.mxu0 0.0
    %2844 = vmatpush1.msra.mxu0 0.0
    %2845 = vmatprep.subr.mxu0 0.0
    %2846 = vmatpush1.msra.mxu0 0.0
    %2847 = vmatprep.subr.mxu0 0.0
    %2848 = vmatpush1.msra.mxu0 0.0
    %2849 = vmatprep.subr.mxu0 0.0
    %2850 = vmatpush1.msra.mxu0 0.0
    %2851 = vmatprep.subr.mxu0 0.0
    %2852 = vmatpush1.msra.mxu0 0.0
    %2853 = vmatprep.subr.mxu0 0.0
    %2854 = vmatpush1.msra.mxu0 0.0
    %2855 = vmatprep.subr.mxu0 0.0
    %2856 = vmatpush1.msra.mxu0 %v1642
    %2857 = vmatprep.subr.mxu0 0.0
    %2858 = vmatpush1.msra.mxu0 %v1641
    %2859 = vmatprep.subr.mxu0 0.0
    %2860 = vmatpush1.msra.mxu0 %v1640
    %2861 = vmatprep.subr.mxu0 0.0
    %2862 = vmatpush1.msra.mxu0 %v1639
    %2863 = vmatprep.subr.mxu0 0.0
    %2864 = vmatpush1.msra.mxu0 %v1638
    %2865 = vmatprep.subr.mxu0 0.0
    %2866 = vmatpush1.msra.mxu0 %v1637
    %2867 = vmatprep.subr.mxu0 0.0
    %2868 = vmatpush1.msra.mxu0 %v1636
    %2869 = vmatprep.subr.mxu0 0.0
    %2870 = vmatpush1.msra.mxu0 %v1635
    %2871 = vmatprep.subr.mxu0 0.0
    %2872 = vmatpush2.msra.mxu0 0.0
    %2873 = vmatprep.subr.mxu0 0.0
    %2874 = vmatpush2.msra.mxu0 0.0
    %2875 = vmatprep.subr.mxu0 0.0
    %2876 = vmatpush2.msra.mxu0 0.0
    %2877 = vmatprep.subr.mxu0 0.0
    %2878 = vmatpush2.msra.mxu0 0.0
    %2879 = vmatprep.subr.mxu0 0.0
    %2880 = vmatpush2.msra.mxu0 0.0
    %2881 = vmatprep.subr.mxu0 0.0
    %2882 = vmatpush2.msra.mxu0 0.0
    %2883 = vmatprep.subr.mxu0 0.0
    %2884 = vmatpush2.msra.mxu0 0.0
    %2885 = vmatprep.subr.mxu0 0.0
    %2886 = vmatpush2.msra.mxu0 0.0
    %2887 = vmatprep.subr.mxu0 0.0
    %2888 = vmatpush2.msra.mxu0 0.0
    %2889 = vmatprep.subr.mxu0 0.0
    %2890 = vmatpush2.msra.mxu0 0.0
    %2891 = vmatprep.subr.mxu0 0.0
    %2892 = vmatpush2.msra.mxu0 0.0
    %2893 = vmatprep.subr.mxu0 0.0
    %2894 = vmatpush2.msra.mxu0 0.0
    %2895 = vmatprep.subr.mxu0 0.0
    %2896 = vmatpush2.msra.mxu0 0.0
    %2897 = vmatprep.subr.mxu0 0.0
    %2898 = vmatpush2.msra.mxu0 0.0
    %2899 = vmatprep.subr.mxu0 0.0
    %2900 = vmatpush2.msra.mxu0 0.0
    %2901 = vmatprep.subr.mxu0 0.0
    %2902 = vmatpush2.msra.mxu0 0.0
    %2903 = vmatprep.mubr.f32.mxu0 0.0
    %2904 = vmatmul.mubr.f32.gmra.mxu0 %v2837
    %v2905 = vpop.f32.mrf.mxu0
    %v2906 = vadd.f32 %v2835, %v2905
    %v2907 = vpop.f32.mrf.mxu0
    %2908 = vdwg.mxu0
    %v2909 = vadd.f32 %v2906, %v2736
    %v2910 = vsel %vm2710, %v2909, 0.0
    %2911 = vadd.xlane.f32.xlu0 %v2910
    %v2912 = vpop.xlane.xlu0 %2911
    %v2913 = vmul.f32 %v2912, %v210
    %v2914 = vmul.f32 %v2909, %v2909
    %v2915 = vsel %vm2710, %v2914, 0.0
    %2916 = vadd.xlane.f32.xlu0 %v2915
    %v2917 = vpop.xlane.xlu0 %2916
    %v2918 = vmul.f32 %v2917, %v210
    %v2919 = vmul.f32 %v2913, %v2913
    %v2920 = vsub.f32 %v2918, %v2919
    %v2921 = vmax.f32 %v2920, 0.0
    %v2922 = vsub.f32 %v2909, %v2913
    %v2923 = vadd.f32 %v2921, 1e-12
    %v2924 = vrsqrt.pop %v2923
    %v2925 = vmul.f32 %v2922, %v2924
    %v2926 = vlaneseq
    %v2927 = vshrl.u32 %v2926, 7
    %v2928 = vsub.s32 4, %v2927
    %v2929 = vrot.slane %v1629, %v2928
    %v2930 = vmul.f32 %v2925, %v2929
    %v2931 = vlaneseq
    %v2932 = vshrl.u32 %v2931, 7
    %v2933 = vsub.s32 5, %v2932
    %v2934 = vrot.slane %v1629, %v2933
    %v2935 = vadd.f32 %v2930, %v2934
    %v2936 = vld [vmem:[%s12] sm:$0xff]
    %v2937 = vld [vmem:[%s12 + $0x8] sm:$0xff]
    %v2938 = vld [vmem:[%s12 + $0x10] sm:$0xff]
    %v2939 = vld [vmem:[%s12 + $0x18] sm:$0xff]
    %v2940 = vlaneseq
    %v2941 = vshrl.u32 %v2940, 7
    %v2942 = vsub.s32 2, %v2941
    %v2943 = vrot.slane %v200, %v2942
    %v2945 = vsel %vm203, %v2935, 0
    %2947 = vmatprep.subr.mxu0 0.0
    %2948 = vmatpush1.msra.mxu0 0.0
    %2949 = vmatprep.subr.mxu0 0.0
    %2950 = vmatpush1.msra.mxu0 0.0
    %2951 = vmatprep.subr.mxu0 0.0
    %2952 = vmatpush1.msra.mxu0 0.0
    %2953 = vmatprep.subr.mxu0 0.0
    %2954 = vmatpush1.msra.mxu0 0.0
    %2955 = vmatprep.subr.mxu0 0.0
    %2956 = vmatpush1.msra.mxu0 0.0
    %2957 = vmatprep.subr.mxu0 0.0
    %2958 = vmatpush1.msra.mxu0 0.0
    %2959 = vmatprep.subr.mxu0 0.0
    %2960 = vmatpush1.msra.mxu0 0.0
    %2961 = vmatprep.subr.mxu0 0.0
    %2962 = vmatpush1.msra.mxu0 0.0
    %2963 = vmatprep.subr.mxu0 0.0
    %2964 = vmatpush1.msra.mxu0 0.0
    %2965 = vmatprep.subr.mxu0 0.0
    %2966 = vmatpush1.msra.mxu0 0.0
    %2967 = vmatprep.subr.mxu0 0.0
    %2968 = vmatpush1.msra.mxu0 0.0
    %2969 = vmatprep.subr.mxu0 0.0
    %2970 = vmatpush1.msra.mxu0 0.0
    %2971 = vmatprep.subr.mxu0 0.0
    %2972 = vmatpush1.msra.mxu0 %v2939
    %2973 = vmatprep.subr.mxu0 0.0
    %2974 = vmatpush1.msra.mxu0 %v2938
    %2975 = vmatprep.subr.mxu0 0.0
    %2976 = vmatpush1.msra.mxu0 %v2937
    %2977 = vmatprep.subr.mxu0 0.0
    %2978 = vmatpush1.msra.mxu0 %v2936
    %2979 = vmatprep.subr.mxu0 0.0
    %2980 = vmatpush2.msra.mxu0 0.0
    %2981 = vmatprep.subr.mxu0 0.0
    %2982 = vmatpush2.msra.mxu0 0.0
    %2983 = vmatprep.subr.mxu0 0.0
    %2984 = vmatpush2.msra.mxu0 0.0
    %2985 = vmatprep.subr.mxu0 0.0
    %2986 = vmatpush2.msra.mxu0 0.0
    %2987 = vmatprep.subr.mxu0 0.0
    %2988 = vmatpush2.msra.mxu0 0.0
    %2989 = vmatprep.subr.mxu0 0.0
    %2990 = vmatpush2.msra.mxu0 0.0
    %2991 = vmatprep.subr.mxu0 0.0
    %2992 = vmatpush2.msra.mxu0 0.0
    %2993 = vmatprep.subr.mxu0 0.0
    %2994 = vmatpush2.msra.mxu0 0.0
    %2995 = vmatprep.subr.mxu0 0.0
    %2996 = vmatpush2.msra.mxu0 0.0
    %2997 = vmatprep.subr.mxu0 0.0
    %2998 = vmatpush2.msra.mxu0 0.0
    %2999 = vmatprep.subr.mxu0 0.0
    %3000 = vmatpush2.msra.mxu0 0.0
    %3001 = vmatprep.subr.mxu0 0.0
    %3002 = vmatpush2.msra.mxu0 0.0
    %3003 = vmatprep.subr.mxu0 0.0
    %3004 = vmatpush2.msra.mxu0 0.0
    %3005 = vmatprep.subr.mxu0 0.0
    %3006 = vmatpush2.msra.mxu0 0.0
    %3007 = vmatprep.subr.mxu0 0.0
    %3008 = vmatpush2.msra.mxu0 0.0
    %3009 = vmatprep.subr.mxu0 0.0
    %3010 = vmatpush2.msra.mxu0 0.0
    %3011 = vmatprep.mubr.f32.mxu0 0.0
    %3012 = vmatmul.mubr.f32.gmra.mxu0 %v2945
    %v3013 = vpop.f32.mrf.mxu0
    %v3014 = vadd.f32 %v2943, %v3013
    %v3015 = vpop.f32.mrf.mxu0
    %3016 = vdwg.mxu0
    %v3017 = vtanh.pop %v3014
    %v3018 = vld [vmem:[%s13] sm:$0xff]
    %v3019 = vld [vmem:[%s13 + $0x8] sm:$0xff]
    %v3020 = vld [vmem:[%s13 + $0x10] sm:$0xff]
    %v3021 = vld [vmem:[%s13 + $0x18] sm:$0xff]
    %v3022 = vld [vmem:[%s14] sm:$0x1]
    %v3024 = vlaneseq
    %v3025 = vshrl.u32 %v3024, 7
    %v3026 = vsub.s32 0, %v3025
    %v3027 = vrot.slane %v3022, %v3026
    %v3030 = vsel %vm203, %v3017, 0
    %3032 = vmatprep.subr.mxu0 0.0
    %3033 = vmatpush1.msra.mxu0 0.0
    %3034 = vmatprep.subr.mxu0 0.0
    %3035 = vmatpush1.msra.mxu0 0.0
    %3036 = vmatprep.subr.mxu0 0.0
    %3037 = vmatpush1.msra.mxu0 0.0
    %3038 = vmatprep.subr.mxu0 0.0
    %3039 = vmatpush1.msra.mxu0 0.0
    %3040 = vmatprep.subr.mxu0 0.0
    %3041 = vmatpush1.msra.mxu0 0.0
    %3042 = vmatprep.subr.mxu0 0.0
    %3043 = vmatpush1.msra.mxu0 0.0
    %3044 = vmatprep.subr.mxu0 0.0
    %3045 = vmatpush1.msra.mxu0 0.0
    %3046 = vmatprep.subr.mxu0 0.0
    %3047 = vmatpush1.msra.mxu0 0.0
    %3048 = vmatprep.subr.mxu0 0.0
    %3049 = vmatpush1.msra.mxu0 0.0
    %3050 = vmatprep.subr.mxu0 0.0
    %3051 = vmatpush1.msra.mxu0 0.0
    %3052 = vmatprep.subr.mxu0 0.0
    %3053 = vmatpush1.msra.mxu0 0.0
    %3054 = vmatprep.subr.mxu0 0.0
    %3055 = vmatpush1.msra.mxu0 0.0
    %3056 = vmatprep.subr.mxu0 0.0
    %3057 = vmatpush1.msra.mxu0 %v3021
    %3058 = vmatprep.subr.mxu0 0.0
    %3059 = vmatpush1.msra.mxu0 %v3020
    %3060 = vmatprep.subr.mxu0 0.0
    %3061 = vmatpush1.msra.mxu0 %v3019
    %3062 = vmatprep.subr.mxu0 0.0
    %3063 = vmatpush1.msra.mxu0 %v3018
    %3064 = vmatprep.subr.mxu0 0.0
    %3065 = vmatpush2.msra.mxu0 0.0
    %3066 = vmatprep.subr.mxu0 0.0
    %3067 = vmatpush2.msra.mxu0 0.0
    %3068 = vmatprep.subr.mxu0 0.0
    %3069 = vmatpush2.msra.mxu0 0.0
    %3070 = vmatprep.subr.mxu0 0.0
    %3071 = vmatpush2.msra.mxu0 0.0
    %3072 = vmatprep.subr.mxu0 0.0
    %3073 = vmatpush2.msra.mxu0 0.0
    %3074 = vmatprep.subr.mxu0 0.0
    %3075 = vmatpush2.msra.mxu0 0.0
    %3076 = vmatprep.subr.mxu0 0.0
    %3077 = vmatpush2.msra.mxu0 0.0
    %3078 = vmatprep.subr.mxu0 0.0
    %3079 = vmatpush2.msra.mxu0 0.0
    %3080 = vmatprep.subr.mxu0 0.0
    %3081 = vmatpush2.msra.mxu0 0.0
    %3082 = vmatprep.subr.mxu0 0.0
    %3083 = vmatpush2.msra.mxu0 0.0
    %3084 = vmatprep.subr.mxu0 0.0
    %3085 = vmatpush2.msra.mxu0 0.0
    %3086 = vmatprep.subr.mxu0 0.0
    %3087 = vmatpush2.msra.mxu0 0.0
    %3088 = vmatprep.subr.mxu0 0.0
    %3089 = vmatpush2.msra.mxu0 0.0
    %3090 = vmatprep.subr.mxu0 0.0
    %3091 = vmatpush2.msra.mxu0 0.0
    %3092 = vmatprep.subr.mxu0 0.0
    %3093 = vmatpush2.msra.mxu0 0.0
    %3094 = vmatprep.subr.mxu0 0.0
    %3095 = vmatpush2.msra.mxu0 0.0
    %3096 = vmatprep.mubr.f32.mxu0 0.0
    %3097 = vmatmul.mubr.f32.gmra.mxu0 %v3030
    %v3098 = vpop.f32.mrf.mxu0
    %v3099 = vadd.f32 %v3027, %v3098
    %v3100 = vpop.f32.mrf.mxu0
    %3101 = vdwg.mxu0
    %vm3102 = vcmask 9216
    %3103 = vst.msk [vmem:[#allocation5] sm:$0x3] %vm3102, %v3099
    // Predicated region
    $region58: #{tpu_custom_call.1} parent=1 // pred_check
      _
    $region59: #{tpu_custom_call.1} parent=1 // pred_check_branch
      %3105 = sbr.rel (0) target = $region61
    $region60: #{tpu_custom_call.1} parent=1 // pred_region
      %s3107 = ssub.s32 32, 32
      %3108 = vsyncadd [#allocation6], %s3107
      %s3110 = sshll.u32 [#allocation5], 4
      %s3111 = int_to_ptr.vmem [resolvable:$true] %s3110
      %3113 = dma.vmem_to_hbm [thread:$0]  %s3111, 32, %s15, [#allocation6]
    $region61: #{tpu_custom_call.1} parent=1 // pred_fallthru
      _
    // Predicated region
    $region62: #{tpu_custom_call.1} parent=1 // pred_check
      _
    $region63: #{tpu_custom_call.1} parent=1 // pred_check_branch
      %3115 = sbr.rel (0) target = $region65
    $region64: #{tpu_custom_call.1} parent=1 // pred_region
      %3116 = dma.done [#allocation6], 32
    $region65: #{tpu_custom_call.1} parent=1 // pred_fallthru
      _
    %3117 = vsyncpa [#allocation6], 1

</llo_original>
